<compile_context>
chip_gen: v6e
topology: v6e:2x2x1
jax: 0.10.0
libtpu: 0.0.40
codegen_flags: <defaults>
</compile_context>

<pallas_src>
import functools

import jax
import jax.numpy as jnp
from jax import lax
from jax.experimental import pallas as pl
from jax.experimental.pallas import tpu as pltpu

_UNROLL_T_MAX = 32  # fully unroll the recurrence for T <= this, else fori_loop


def _sigmoid(x):
    # sigmoid(x) = 0.5*(1 + tanh(x/2)): one EUP transcendental instead of exp+recip.
    return 0.5 * (jnp.tanh(0.5 * x) + 1.0)


# ----------------------------------------------------------------------------
# Shared pieces of both kernels.
# ----------------------------------------------------------------------------
def _compute_xg(x_ref, wih_ref, b_ref, xg_ref, *, T):
    """One fused input projection for both directions: (T*B, E) x (E, 8H)."""
    B, E = x_ref.shape[1], x_ref.shape[2]
    G8 = xg_ref.shape[2]
    x2d = x_ref[...].reshape(T * B, E)                       # bf16 input
    xg_ref[...] = (jnp.dot(x2d, wih_ref[...], preferred_element_type=jnp.float32)
                   + b_ref[...]).reshape(T, B, G8)


def _run_recurrence(xg_ref, h_ref, c_ref, len_ref, whh_ref, emit, *, T, H):
    """Masked bidirectional LSTM recurrence over the precomputed gate buffer.

    State (h, c) lives in VMEM scratch refs, packed [fwd | bwd] along the lane
    axis so one block-diagonal (2H, 8H) matmul serves both directions per step.
    `emit(t, tb, v_f, v_b, h_fwd_new, h_bwd_new)` handles the per-step output.
    """
    B = h_ref.shape[0]
    G = 4 * H
    h_ref[...] = jnp.zeros_like(h_ref)
    c_ref[...] = jnp.zeros_like(c_ref)

    # Hoisted once: lengths broadcast to (B, H); per step only a scalar compare.
    L = jnp.broadcast_to(len_ref[...], (B, H)).astype(jnp.int32)
    whh = whh_ref[...]                                        # (2H, 8H) bf16 block-diag

    def step(t):
        tb = T - 1 - t
        h_prev = h_ref[...]                                   # (B, 2H) packed
        c_prev = c_ref[...]
        hg = jnp.dot(h_prev.astype(jnp.bfloat16), whh,
                     preferred_element_type=jnp.float32)      # (B, 8H)
        xg_t = xg_ref[t]                                      # (B, 8H), fwd half used
        xg_b = xg_ref[tb]                                     # (B, 8H), bwd half used
        gates_f = xg_t[:, 0:G] + hg[:, 0:G]
        gates_b = xg_b[:, G:2 * G] + hg[:, G:2 * G]

        # Gate order [i, f, o, g]: one sigmoid slab + one tanh slab per direction.
        sio_f = _sigmoid(gates_f[:, 0:3 * H])
        sio_b = _sigmoid(gates_b[:, 0:3 * H])
        g_f = jnp.tanh(gates_f[:, 3 * H:4 * H])
        g_b = jnp.tanh(gates_b[:, 3 * H:4 * H])

        cf = sio_f[:, H:2 * H] * c_prev[:, 0:H] + sio_f[:, 0:H] * g_f
        cb = sio_b[:, H:2 * H] * c_prev[:, H:2 * H] + sio_b[:, 0:H] * g_b
        hf = sio_f[:, 2 * H:3 * H] * jnp.tanh(cf)
        hb = sio_b[:, 2 * H:3 * H] * jnp.tanh(cb)

        v_f = L > t                                           # (B, H) valid @ time t
        v_b = L > tb                                          # (B, H) valid @ time tb

        emit(t, tb, v_f, v_b, hf, hb)

        # Masked state carry (packed padded-LSTM emulation).
        h_ref[:, 0:H] = jnp.where(v_f, hf, h_prev[:, 0:H])
        h_ref[:, H:2 * H] = jnp.where(v_b, hb, h_prev[:, H:2 * H])
        c_ref[:, 0:H] = jnp.where(v_f, cf, c_prev[:, 0:H])
        c_ref[:, H:2 * H] = jnp.where(v_b, cb, c_prev[:, H:2 * H])

    if T <= _UNROLL_T_MAX:
        for t in range(T):                                    # static indices
            step(t)
    else:
        def body(t, carry):                                   # compact loop for long T
            step(t)
            return carry
        lax.fori_loop(0, T, body, 0)


# ----------------------------------------------------------------------------
# Kernel 1: one fused bidirectional LSTM layer (batch tile per grid step).
# ----------------------------------------------------------------------------
def _bilstm_layer_kernel(x_ref, len_ref, wih_ref, whh_ref, b_ref, out_ref,
                         xg_ref, h_ref, c_ref, *, T, H):
    _compute_xg(x_ref, wih_ref, b_ref, xg_ref, T=T)

    def emit(t, tb, v_f, v_b, hf, hb):
        out_ref[t, :, 0:H] = jnp.where(v_f, hf, 0.0).astype(out_ref.dtype)
        out_ref[tb, :, H:2 * H] = jnp.where(v_b, hb, 0.0).astype(out_ref.dtype)

    _run_recurrence(xg_ref, h_ref, c_ref, len_ref, whh_ref, emit, T=T, H=H)


# ----------------------------------------------------------------------------
# Kernel 2: LAST layer fused with masked-mean pooling + final Linear
# (the (T, B, 2H) activation of the last layer never touches HBM).
# ----------------------------------------------------------------------------
def _bilstm_pool_fc_kernel(x_ref, len_ref, wih_ref, whh_ref, b_ref,
                           fcw_ref, fcb_ref, o_ref,
                           xg_ref, h_ref, c_ref, acc_ref, *, T, H):
    _compute_xg(x_ref, wih_ref, b_ref, xg_ref, T=T)
    acc_ref[...] = jnp.zeros_like(acc_ref)

    def emit(t, tb, v_f, v_b, hf, hb):
        acc_ref[:, 0:H] += jnp.where(v_f, hf, 0.0)
        acc_ref[:, H:2 * H] += jnp.where(v_b, hb, 0.0)

    _run_recurrence(xg_ref, h_ref, c_ref, len_ref, whh_ref, emit, T=T, H=H)

    den = len_ref[...].astype(jnp.float32)                    # (B, 1); 0 -> NaN (as torch)
    hidden = acc_ref[...] * pl.reciprocal(den, approx=True)   # (B, 2H)
    o_ref[...] = (jnp.dot(hidden, fcw_ref[...], preferred_element_type=jnp.float32)
                  + fcb_ref[...]).astype(o_ref.dtype)


# ----------------------------------------------------------------------------
# Wrappers: batch-tiled grid, BlockSpecs, VMEM sizing.
# ----------------------------------------------------------------------------
def _pick_b_tile(B, T, feat_in, H, budget_bytes=12 * 2 ** 20):
    """Largest multiple-of-8 divisor of B whose per-tile residency fits the budget."""
    cands = [c for c in range(8, B + 1, 8) if B % c == 0] or [B]
    best = cands[0]
    for c in cands:
        per_tile = (2 * T * c * feat_in * 2 + 2 * T * c * 2 * H * 2
                    + T * c * 8 * H * 4 + 4 * c * 2 * H * 4)
        if per_tile <= budget_bytes:
            best = c
    return best


def _vmem_limit(T, bt, feat_in, H):
    est = (2 * T * bt * feat_in * 2          # x block, double-buffered, bf16
           + 2 * T * bt * 2 * H * 2          # out block, double-buffered, bf16
           + T * bt * 8 * H * 4              # xg scratch, f32
           + 2 * (feat_in * 8 * H * 2 + 2 * H * 8 * H * 2 + 8 * H * 4 + bt * 4)
           + 4 * bt * 2 * H * 4)             # h / c / acc scratch
    # >= default scoped limit, <= v7x physical VMEM.
    return int(min(64 * 2 ** 20, max(32 * 2 ** 20, 2 * est)))


def bilstm_layer(x, lengths, lp, *, b_tile=None):
    """x: (T, B, Din) bf16, lengths: (B, 1) int32 -> (T, B, 2H) bf16."""
    T, B, E = x.shape
    H = lp["H"]
    bt = b_tile if b_tile is not None else _pick_b_tile(B, T, E, H)
    assert B % bt == 0, f"batch {B} must be divisible by batch tile {bt}"
    kern = functools.partial(_bilstm_layer_kernel, T=T, H=H)
    return pl.pallas_call(
        kern,
        out_shape=jax.ShapeDtypeStruct((T, B, 2 * H), jnp.bfloat16),
        grid=(B // bt,),
        in_specs=[
            pl.BlockSpec((T, bt, E), lambda b: (0, b, 0)),
            pl.BlockSpec((bt, 1), lambda b: (b, 0)),
            pl.BlockSpec((E, 8 * H), lambda b: (0, 0)),
            pl.BlockSpec((2 * H, 8 * H), lambda b: (0, 0)),
            pl.BlockSpec((1, 8 * H), lambda b: (0, 0)),
        ],
        out_specs=pl.BlockSpec((T, bt, 2 * H), lambda b: (0, b, 0)),
        scratch_shapes=[
            pltpu.VMEM((T, bt, 8 * H), jnp.float32),   # xg (precomputed gate pre-acts)
            pltpu.VMEM((bt, 2 * H), jnp.float32),      # h state, packed [fwd | bwd]
            pltpu.VMEM((bt, 2 * H), jnp.float32),      # c state, packed [fwd | bwd]
        ],
        compiler_params=pltpu.CompilerParams(
            dimension_semantics=("parallel",),
            vmem_limit_bytes=_vmem_limit(T, bt, E, H)),
    )(x, lengths, lp["wih"], lp["whh_bd"], lp["b"])


def bilstm_pool_fc(x, lengths, lp, fc_wt, fc_b, *, b_tile=None):
    """Last layer + masked-mean pooling + Linear.  Returns (B, out_dim) f32."""
    T, B, E = x.shape
    H = lp["H"]
    out_dim = fc_wt.shape[1]
    bt = b_tile if b_tile is not None else _pick_b_tile(B, T, E, H)
    assert B % bt == 0, f"batch {B} must be divisible by batch tile {bt}"
    kern = functools.partial(_bilstm_pool_fc_kernel, T=T, H=H)
    return pl.pallas_call(
        kern,
        out_shape=jax.ShapeDtypeStruct((B, out_dim), jnp.float32),
        grid=(B // bt,),
        in_specs=[
            pl.BlockSpec((T, bt, E), lambda b: (0, b, 0)),
            pl.BlockSpec((bt, 1), lambda b: (b, 0)),
            pl.BlockSpec((E, 8 * H), lambda b: (0, 0)),
            pl.BlockSpec((2 * H, 8 * H), lambda b: (0, 0)),
            pl.BlockSpec((1, 8 * H), lambda b: (0, 0)),
            pl.BlockSpec((2 * H, out_dim), lambda b: (0, 0)),
            pl.BlockSpec((1, out_dim), lambda b: (0, 0)),
        ],
        out_specs=pl.BlockSpec((bt, out_dim), lambda b: (b, 0)),
        scratch_shapes=[
            pltpu.VMEM((T, bt, 8 * H), jnp.float32),
            pltpu.VMEM((bt, 2 * H), jnp.float32),
            pltpu.VMEM((bt, 2 * H), jnp.float32),
            pltpu.VMEM((bt, 2 * H), jnp.float32),      # masked-sum accumulator
        ],
        compiler_params=pltpu.CompilerParams(
            dimension_semantics=("parallel",),
            vmem_limit_bytes=_vmem_limit(T, bt, E, H)),
    )(x, lengths, lp["wih"], lp["whh_bd"], lp["b"], fc_wt, fc_b)


# ----------------------------------------------------------------------------
# Parameter construction (kernel layout + per-direction copies for the reference)
# ----------------------------------------------------------------------------
def init_params(key, vocab_size, embedding_dim, hidden_dim, output_dim,
                n_layers, bidirectional, pad_idx):
    assert bidirectional, "fused kernels implement the bidirectional configuration"
    H = hidden_dim
    n_keys = 8 * n_layers + 3
    keys = jax.random.split(key, n_keys)
    kit = iter(range(n_keys))

    emb = jax.random.normal(keys[next(kit)], (vocab_size, embedding_dim), jnp.float32)
    emb = emb.at[pad_idx].set(0.0)                       # padding_idx row is zero

    k = 1.0 / (H ** 0.5)
    # PyTorch gate order [i, f, g, o] -> kernel order [i, f, o, g].
    ar = jnp.arange(H)
    perm = jnp.concatenate([ar, ar + H, ar + 3 * H, ar + 2 * H])

    layers, ref_layers = [], []
    for l in range(n_layers):
        in_dim = embedding_dim if l == 0 else 2 * H
        dirs_ref, wih_r, whh_r, b_r = [], [], [], []
        for _d in range(2):
            wih = jax.random.uniform(keys[next(kit)], (4 * H, in_dim), jnp.float32, -k, k)
            whh = jax.random.uniform(keys[next(kit)], (4 * H, H), jnp.float32, -k, k)
            bih = jax.random.uniform(keys[next(kit)], (4 * H,), jnp.float32, -k, k)
            bhh = jax.random.uniform(keys[next(kit)], (4 * H,), jnp.float32, -k, k)
            dirs_ref.append(dict(wih_t=wih.T.astype(jnp.bfloat16),
                                 whh_t=whh.T.astype(jnp.bfloat16),
                                 b=(bih + bhh)[None, :]))
            wih_r.append(jnp.take(wih.T, perm, axis=1))          # (in_dim, 4H)
            whh_r.append(jnp.take(whh.T, perm, axis=1))          # (H, 4H)
            b_r.append(jnp.take(bih + bhh, perm))                # (4H,)
        wih_cat = jnp.concatenate(wih_r, axis=1).astype(jnp.bfloat16)   # (in_dim, 8H)
        b_cat = jnp.concatenate(b_r)[None, :]                           # (1, 8H) f32
        whh_bd = jnp.zeros((2 * H, 8 * H), jnp.float32)
        whh_bd = whh_bd.at[:H, :4 * H].set(whh_r[0]).at[H:, 4 * H:].set(whh_r[1])
        layers.append(dict(wih=wih_cat, whh_bd=whh_bd.astype(jnp.bfloat16),
                           b=b_cat, H=H))
        ref_layers.append(tuple(dirs_ref))

    kf = 1.0 / ((2 * H) ** 0.5)
    fc_w = jax.random.uniform(keys[next(kit)], (output_dim, 2 * H), jnp.float32, -kf, kf)
    fc_b = jax.random.uniform(keys[next(kit)], (output_dim,), jnp.float32, -kf, kf)

    return dict(embedding=emb, layers=layers, ref_layers=ref_layers,
                fc_wt=fc_w.T, fc_b=fc_b[None, :], n_layers=n_layers)


def rnn_forward(params, text, mask, *, b_tile=None):
    """text: (B, T) int32; mask: (B, T) bool (True on valid tokens, prefix per row)."""
    emb = params["embedding"][text]                                   # (B, T, E)
    x = jnp.transpose(emb, (1, 0, 2)).astype(jnp.bfloat16)            # (T, B, E) bf16
    lengths = jnp.sum(mask.astype(jnp.int32), axis=1)[:, None]        # (B, 1) int32
    layer_in = x
    for l in range(params["n_layers"] - 1):
        layer_in = bilstm_layer(layer_in, lengths, params["layers"][l], b_tile=b_tile)
    return bilstm_pool_fc(layer_in, lengths, params["layers"][-1],
                          params["fc_wt"], params["fc_b"], b_tile=b_tile)


# ----------------------------------------------------------------------------
# Pure-JAX reference (lax.scan, same bf16 MXU recipe) to verify the kernels.
# ----------------------------------------------------------------------------
def _ref_lstm_dir(x, m, wih_t, whh_t, b):
    T, B, _ = x.shape
    H = whh_t.shape[0]

    def step(carry, inp):
        h, c = carry
        xt, mt = inp
        gates = (jnp.dot(xt.astype(jnp.bfloat16), wih_t,
                         preferred_element_type=jnp.float32)
                 + jnp.dot(h.astype(jnp.bfloat16), whh_t,
                           preferred_element_type=jnp.float32)
                 + b)
        i = jax.nn.sigmoid(gates[:, :H]); f = jax.nn.sigmoid(gates[:, H:2 * H])
        g = jnp.tanh(gates[:, 2 * H:3 * H]); o = jax.nn.sigmoid(gates[:, 3 * H:])
        cn = f * c + i * g
        hn = o * jnp.tanh(cn)
        v = mt > 0.0
        return (jnp.where(v, hn, h), jnp.where(v, cn, c)), jnp.where(v, hn, 0.0)

    init = (jnp.zeros((B, H), jnp.float32), jnp.zeros((B, H), jnp.float32))
    _, out = lax.scan(step, init, (x, m))
    return out


def rnn_forward_ref(params, text, mask):
    emb = params["embedding"][text]
    x = jnp.transpose(emb, (1, 0, 2)).astype(jnp.float32)
    m = jnp.transpose(mask.astype(jnp.float32), (1, 0))[:, :, None]
    layer_in = x
    for (pf, pb) in params["ref_layers"]:
        o_f = _ref_lstm_dir(layer_in, m, pf["wih_t"], pf["whh_t"], pf["b"])
        o_b = _ref_lstm_dir(layer_in[::-1], m[::-1],
                            pb["wih_t"], pb["whh_t"], pb["b"])[::-1]
        layer_in = jnp.concatenate([o_f, o_b], axis=-1)
    hidden = jnp.sum(layer_in * m, axis=0) / jnp.sum(m, axis=0)
    return hidden @ params["fc_wt"] + params["fc_b"]


# ----------------------------------------------------------------------------
if __name__ == "__main__":
    VOCAB, E, H, OUT = 100, 32, 32, 2
    N_LAYERS, PAD_IDX = 2, 0

    key = jax.random.PRNGKey(0)
    kp, kt1, kl1, kt2, kl2 = jax.random.split(key, 5)
    params = init_params(kp, VOCAB, E, H, OUT, N_LAYERS, True, PAD_IDX)

    def make_batch(ktext, klen, B, T):
        lengths = jax.random.randint(klen, (B,), 1, T + 1)           # >= 1 valid token
        mask = jnp.arange(T)[None, :] < lengths[:, None]             # prefix mask
        text = jax.random.randint(ktext, (B, T), 1, VOCAB)
        return jnp.where(mask, text, PAD_IDX).astype(jnp.int32), mask

    # Config 1: B=16 with b_tile=8 -> 2-tile batch grid, fully unrolled recurrence.
    text, mask = make_batch(kt1, kl1, 16, 12)
    out = jax.block_until_ready(rnn_forward(params, text, mask, b_tile=8))
    ref = jax.block_until_ready(rnn_forward_ref(params, text, mask))
    assert out.shape == (16, OUT)
    assert jnp.allclose(out, ref, rtol=5e-3, atol=5e-3), (out, ref)

    # Config 2: T=40 > unroll threshold -> exercises the fori_loop recurrence path.
    text2, mask2 = make_batch(kt2, kl2, 8, 40)
    out2 = jax.block_until_ready(rnn_forward(params, text2, mask2, b_tile=8))
    ref2 = jax.block_until_ready(rnn_forward_ref(params, text2, mask2))
    assert out2.shape == (8, OUT)
    assert jnp.allclose(out2, ref2, rtol=1e-2, atol=1e-2), (out2, ref2)

    print("KERNEL_OK")
</pallas_src>

<mosaic_0001>
module attributes {stable_mosaic.version = 11 : i64} {
  func.func @_bilstm_layer_kernel(%arg0: i32, %arg1: memref<12x8x32xbf16, #tpu.memory_space<vmem>>, %arg2: memref<8x1xi32, #tpu.memory_space<vmem>>, %arg3: memref<32x256xbf16, #tpu.memory_space<vmem>>, %arg4: memref<64x256xbf16, #tpu.memory_space<vmem>>, %arg5: memref<1x256xf32, #tpu.memory_space<vmem>>, %arg6: memref<12x8x64xbf16, #tpu.memory_space<vmem>>, %arg7: memref<12x8x256xf32, #tpu.memory_space<vmem>>, %arg8: memref<8x64xf32, #tpu.memory_space<vmem>>, %arg9: memref<8x64xf32, #tpu.memory_space<vmem>>) attributes {dimension_semantics = [#tpu.dimension_semantics<parallel>], iteration_bounds = array<i64: 2>, scalar_prefetch = 0 : i64, scratch_operands = 3 : i64, tpu.core_type = #tpu.core_type<tc>, window_params = [{transform_indices = @transform_0, window_bounds = array<i64: 12, 8, 32>}, {transform_indices = @transform_1, window_bounds = array<i64: 8, 1>}, {pipeline_mode = #tpu.pipeline_mode<synchronous>, transform_indices = @transform_2, window_bounds = array<i64: 32, 256>}, {pipeline_mode = #tpu.pipeline_mode<synchronous>, transform_indices = @transform_3, window_bounds = array<i64: 64, 256>}, {pipeline_mode = #tpu.pipeline_mode<synchronous>, transform_indices = @transform_4, window_bounds = array<i64: 1, 256>}, {transform_indices = @transform_5, window_bounds = array<i64: 12, 8, 64>}]} {
    %c0 = arith.constant 0 : index
    %c0_0 = arith.constant 0 : index
    %c0_1 = arith.constant 0 : index
    %0 = vector.load %arg1[%c0, %c0_0, %c0_1] : memref<12x8x32xbf16, #tpu.memory_space<vmem>>, vector<12x8x32xbf16>
    %1 = vector.shape_cast %0 : vector<12x8x32xbf16> to vector<96x32xbf16>
    %c0_2 = arith.constant 0 : index
    %c0_3 = arith.constant 0 : index
    %2 = vector.load %arg3[%c0_2, %c0_3] : memref<32x256xbf16, #tpu.memory_space<vmem>>, vector<32x256xbf16>
    %cst = arith.constant dense<0.000000e+00> : vector<96x256xf32>
    %3 = tpu.matmul %1, %2, %cst {dimension_numbers = #tpu.dot_dimension_numbers<[1], [0], [0], [1], [0, 0, 1, 1], [], []>} : vector<96x32xbf16>, vector<32x256xbf16>, vector<96x256xf32> -> vector<96x256xf32>
    %c0_4 = arith.constant 0 : index
    %c0_5 = arith.constant 0 : index
    %4 = vector.load %arg5[%c0_4, %c0_5] : memref<1x256xf32, #tpu.memory_space<vmem>>, vector<1x256xf32>
    %5 = vector.broadcast %4 : vector<1x256xf32> to vector<96x256xf32>
    %6 = arith.addf %3, %5 : vector<96x256xf32>
    %7 = vector.shape_cast %6 : vector<96x256xf32> to vector<12x8x256xf32>
    %c0_6 = arith.constant 0 : index
    %c0_7 = arith.constant 0 : index
    %c0_8 = arith.constant 0 : index
    %8 = vector.load %arg7[%c0_6, %c0_7, %c0_8] : memref<12x8x256xf32, #tpu.memory_space<vmem>>, vector<12x8x256xf32>
    tpu.vector_store %arg7[%c0_6, %c0_7, %c0_8], %7 {strides = array<i32>} : memref<12x8x256xf32, #tpu.memory_space<vmem>>, vector<12x8x256xf32>,
    %cst_9 = arith.constant 0.000000e+00 : f32
    %9 = vector.broadcast %cst_9 : f32 to vector<8x64xf32>
    %c0_10 = arith.constant 0 : index
    %c0_11 = arith.constant 0 : index
    %10 = vector.load %arg8[%c0_10, %c0_11] : memref<8x64xf32, #tpu.memory_space<vmem>>, vector<8x64xf32>
    tpu.vector_store %arg8[%c0_10, %c0_11], %9 {strides = array<i32>} : memref<8x64xf32, #tpu.memory_space<vmem>>, vector<8x64xf32>,
    %cst_12 = arith.constant 0.000000e+00 : f32
    %11 = vector.broadcast %cst_12 : f32 to vector<8x64xf32>
    %c0_13 = arith.constant 0 : index
    %c0_14 = arith.constant 0 : index
    %12 = vector.load %arg9[%c0_13, %c0_14] : memref<8x64xf32, #tpu.memory_space<vmem>>, vector<8x64xf32>
    tpu.vector_store %arg9[%c0_13, %c0_14], %11 {strides = array<i32>} : memref<8x64xf32, #tpu.memory_space<vmem>>, vector<8x64xf32>,
    %c0_15 = arith.constant 0 : index
    %c0_16 = arith.constant 0 : index
    %13 = vector.load %arg2[%c0_15, %c0_16] : memref<8x1xi32, #tpu.memory_space<vmem>>, vector<8x1xi32>
    %14 = vector.shape_cast %13 : vector<8x1xi32> to vector<8x1xi32>
    %15 = vector.broadcast %14 : vector<8x1xi32> to vector<8x32xi32>
    %c0_17 = arith.constant 0 : index
    %c0_18 = arith.constant 0 : index
    %16 = vector.load %arg4[%c0_17, %c0_18] : memref<64x256xbf16, #tpu.memory_space<vmem>>, vector<64x256xbf16>
    %c0_19 = arith.constant 0 : index
    %c0_20 = arith.constant 0 : index
    %17 = vector.load %arg8[%c0_19, %c0_20] : memref<8x64xf32, #tpu.memory_space<vmem>>, vector<8x64xf32>
    %c0_21 = arith.constant 0 : index
    %c0_22 = arith.constant 0 : index
    %18 = vector.load %arg9[%c0_21, %c0_22] : memref<8x64xf32, #tpu.memory_space<vmem>>, vector<8x64xf32>
    %19 = arith.truncf %17 : vector<8x64xf32> to vector<8x64xbf16>
    %cst_23 = arith.constant dense<0.000000e+00> : vector<8x256xf32>
    %20 = tpu.matmul %19, %16, %cst_23 {dimension_numbers = #tpu.dot_dimension_numbers<[1], [0], [0], [1], [0, 0, 1, 1], [], []>} : vector<8x64xbf16>, vector<64x256xbf16>, vector<8x256xf32> -> vector<8x256xf32>
    %c0_24 = arith.constant 0 : index
    %c0_25 = arith.constant 0 : index
    %c0_26 = arith.constant 0 : index
    %21 = vector.load %arg7[%c0_24, %c0_25, %c0_26] : memref<12x8x256xf32, #tpu.memory_space<vmem>>, vector<1x8x256xf32>
    %22 = vector.shape_cast %21 : vector<1x8x256xf32> to vector<8x256xf32>
    %c11 = arith.constant 11 : index
    %c0_27 = arith.constant 0 : index
    %c0_28 = arith.constant 0 : index
    %23 = vector.load %arg7[%c11, %c0_27, %c0_28] : memref<12x8x256xf32, #tpu.memory_space<vmem>>, vector<1x8x256xf32>
    %24 = vector.shape_cast %23 : vector<1x8x256xf32> to vector<8x256xf32>
    %25 = vector.extract_strided_slice %22 {offsets = [0, 0], sizes = [8, 128], strides = [1, 1]} : vector<8x256xf32> to vector<8x128xf32>
    %26 = vector.extract_strided_slice %20 {offsets = [0, 0], sizes = [8, 128], strides = [1, 1]} : vector<8x256xf32> to vector<8x128xf32>
    %27 = arith.addf %25, %26 : vector<8x128xf32>
    %28 = vector.extract_strided_slice %24 {offsets = [0, 128], sizes = [8, 128], strides = [1, 1]} : vector<8x256xf32> to vector<8x128xf32>
    %29 = vector.extract_strided_slice %20 {offsets = [0, 128], sizes = [8, 128], strides = [1, 1]} : vector<8x256xf32> to vector<8x128xf32>
    %30 = arith.addf %28, %29 : vector<8x128xf32>
    %31 = vector.extract_strided_slice %27 {offsets = [0, 0], sizes = [8, 96], strides = [1, 1]} : vector<8x128xf32> to vector<8x96xf32>
    %cst_29 = arith.constant 5.000000e-01 : f32
    %32 = vector.broadcast %cst_29 : f32 to vector<8x96xf32>
    %33 = arith.mulf %32, %31 : vector<8x96xf32>
    %34 = math.tanh %33 : vector<8x96xf32>
    %cst_30 = arith.constant 1.000000e+00 : f32
    %35 = vector.broadcast %cst_30 : f32 to vector<8x96xf32>
    %36 = arith.addf %34, %35 : vector<8x96xf32>
    %cst_31 = arith.constant 5.000000e-01 : f32
    %37 = vector.broadcast %cst_31 : f32 to vector<8x96xf32>
    %38 = arith.mulf %37, %36 : vector<8x96xf32>
    %39 = vector.extract_strided_slice %30 {offsets = [0, 0], sizes = [8, 96], strides = [1, 1]} : vector<8x128xf32> to vector<8x96xf32>
    %cst_32 = arith.constant 5.000000e-01 : f32
    %40 = vector.broadcast %cst_32 : f32 to vector<8x96xf32>
    %41 = arith.mulf %40, %39 : vector<8x96xf32>
    %42 = math.tanh %41 : vector<8x96xf32>
    %cst_33 = arith.constant 1.000000e+00 : f32
    %43 = vector.broadcast %cst_33 : f32 to vector<8x96xf32>
    %44 = arith.addf %42, %43 : vector<8x96xf32>
    %cst_34 = arith.constant 5.000000e-01 : f32
    %45 = vector.broadcast %cst_34 : f32 to vector<8x96xf32>
    %46 = arith.mulf %45, %44 : vector<8x96xf32>
    %47 = vector.extract_strided_slice %27 {offsets = [0, 96], sizes = [8, 32], strides = [1, 1]} : vector<8x128xf32> to vector<8x32xf32>
    %48 = math.tanh %47 : vector<8x32xf32>
    %49 = vector.extract_strided_slice %30 {offsets = [0, 96], sizes = [8, 32], strides = [1, 1]} : vector<8x128xf32> to vector<8x32xf32>
    %50 = math.tanh %49 : vector<8x32xf32>
    %51 = vector.extract_strided_slice %38 {offsets = [0, 32], sizes = [8, 32], strides = [1, 1]} : vector<8x96xf32> to vector<8x32xf32>
    %52 = vector.extract_strided_slice %18 {offsets = [0, 0], sizes = [8, 32], strides = [1, 1]} : vector<8x64xf32> to vector<8x32xf32>
    %53 = arith.mulf %51, %52 : vector<8x32xf32>
    %54 = vector.extract_strided_slice %38 {offsets = [0, 0], sizes = [8, 32], strides = [1, 1]} : vector<8x96xf32> to vector<8x32xf32>
    %55 = arith.mulf %54, %48 : vector<8x32xf32>
    %56 = arith.addf %53, %55 : vector<8x32xf32>
    %57 = vector.extract_strided_slice %46 {offsets = [0, 32], sizes = [8, 32], strides = [1, 1]} : vector<8x96xf32> to vector<8x32xf32>
    %58 = vector.extract_strided_slice %18 {offsets = [0, 32], sizes = [8, 32], strides = [1, 1]} : vector<8x64xf32> to vector<8x32xf32>
    %59 = arith.mulf %57, %58 : vector<8x32xf32>
    %60 = vector.extract_strided_slice %46 {offsets = [0, 0], sizes = [8, 32], strides = [1, 1]} : vector<8x96xf32> to vector<8x32xf32>
    %61 = arith.mulf %60, %50 : vector<8x32xf32>
    %62 = arith.addf %59, %61 : vector<8x32xf32>
    %63 = vector.extract_strided_slice %38 {offsets = [0, 64], sizes = [8, 32], strides = [1, 1]} : vector<8x96xf32> to vector<8x32xf32>
    %64 = math.tanh %56 : vector<8x32xf32>
    %65 = arith.mulf %63, %64 : vector<8x32xf32>
    %66 = vector.extract_strided_slice %46 {offsets = [0, 64], sizes = [8, 32], strides = [1, 1]} : vector<8x96xf32> to vector<8x32xf32>
    %67 = math.tanh %62 : vector<8x32xf32>
    %68 = arith.mulf %66, %67 : vector<8x32xf32>
    %c0_i32 = arith.constant 0 : i32
    %69 = vector.broadcast %c0_i32 : i32 to vector<8x32xi32>
    %70 = arith.cmpi sgt, %15, %69 : vector<8x32xi32>
    %c11_i32 = arith.constant 11 : i32
    %71 = vector.broadcast %c11_i32 : i32 to vector<8x32xi32>
    %72 = arith.cmpi sgt, %15, %71 : vector<8x32xi32>
    %cst_35 = arith.constant 0.000000e+00 : f32
    %73 = vector.broadcast %cst_35 : f32 to vector<8x32xf32>
    %74 = arith.select %70, %65, %73 : vector<8x32xi1>, vector<8x32xf32>
    %75 = arith.truncf %74 : vector<8x32xf32> to vector<8x32xbf16>
    %c0_36 = arith.constant 0 : index
    %c0_37 = arith.constant 0 : index
    %c0_38 = arith.constant 0 : index
    %76 = vector.load %arg6[%c0_36, %c0_37, %c0_38] : memref<12x8x64xbf16, #tpu.memory_space<vmem>>, vector<1x8x32xbf16>
    %77 = vector.shape_cast %76 : vector<1x8x32xbf16> to vector<8x32xbf16>
    %78 = vector.shape_cast %75 : vector<8x32xbf16> to vector<1x8x32xbf16>
    tpu.vector_store %arg6[%c0_36, %c0_37, %c0_38], %78 {strides = array<i32>} : memref<12x8x64xbf16, #tpu.memory_space<vmem>>, vector<1x8x32xbf16>,
    %cst_39 = arith.constant 0.000000e+00 : f32
    %79 = vector.broadcast %cst_39 : f32 to vector<8x32xf32>
    %80 = arith.select %72, %68, %79 : vector<8x32xi1>, vector<8x32xf32>
    %81 = arith.truncf %80 : vector<8x32xf32> to vector<8x32xbf16>
    %c11_40 = arith.constant 11 : index
    %c0_41 = arith.constant 0 : index
    %c32 = arith.constant 32 : index
    %82 = vector.load %arg6[%c11_40, %c0_41, %c32] : memref<12x8x64xbf16, #tpu.memory_space<vmem>>, vector<1x8x32xbf16>
    %83 = vector.shape_cast %82 : vector<1x8x32xbf16> to vector<8x32xbf16>
    %84 = vector.shape_cast %81 : vector<8x32xbf16> to vector<1x8x32xbf16>
    tpu.vector_store %arg6[%c11_40, %c0_41, %c32], %84 {strides = array<i32>} : memref<12x8x64xbf16, #tpu.memory_space<vmem>>, vector<1x8x32xbf16>,
    %85 = vector.extract_strided_slice %17 {offsets = [0, 0], sizes = [8, 32], strides = [1, 1]} : vector<8x64xf32> to vector<8x32xf32>
    %86 = arith.select %70, %65, %85 : vector<8x32xi1>, vector<8x32xf32>
    %c0_42 = arith.constant 0 : index
    %c0_43 = arith.constant 0 : index
    %87 = vector.load %arg8[%c0_42, %c0_43] : memref<8x64xf32, #tpu.memory_space<vmem>>, vector<8x32xf32>
    tpu.vector_store %arg8[%c0_42, %c0_43], %86 {strides = array<i32>} : memref<8x64xf32, #tpu.memory_space<vmem>>, vector<8x32xf32>,
    %88 = vector.extract_strided_slice %17 {offsets = [0, 32], sizes = [8, 32], strides = [1, 1]} : vector<8x64xf32> to vector<8x32xf32>
    %89 = arith.select %72, %68, %88 : vector<8x32xi1>, vector<8x32xf32>
    %c0_44 = arith.constant 0 : index
    %c32_45 = arith.constant 32 : index
    %90 = vector.load %arg8[%c0_44, %c32_45] : memref<8x64xf32, #tpu.memory_space<vmem>>, vector<8x32xf32>
    tpu.vector_store %arg8[%c0_44, %c32_45], %89 {strides = array<i32>} : memref<8x64xf32, #tpu.memory_space<vmem>>, vector<8x32xf32>,
    %91 = vector.extract_strided_slice %18 {offsets = [0, 0], sizes = [8, 32], strides = [1, 1]} : vector<8x64xf32> to vector<8x32xf32>
    %92 = arith.select %70, %56, %91 : vector<8x32xi1>, vector<8x32xf32>
    %c0_46 = arith.constant 0 : index
    %c0_47 = arith.constant 0 : index
    %93 = vector.load %arg9[%c0_46, %c0_47] : memref<8x64xf32, #tpu.memory_space<vmem>>, vector<8x32xf32>
    tpu.vector_store %arg9[%c0_46, %c0_47], %92 {strides = array<i32>} : memref<8x64xf32, #tpu.memory_space<vmem>>, vector<8x32xf32>,
    %94 = vector.extract_strided_slice %18 {offsets = [0, 32], sizes = [8, 32], strides = [1, 1]} : vector<8x64xf32> to vector<8x32xf32>
    %95 = arith.select %72, %62, %94 : vector<8x32xi1>, vector<8x32xf32>
    %c0_48 = arith.constant 0 : index
    %c32_49 = arith.constant 32 : index
    %96 = vector.load %arg9[%c0_48, %c32_49] : memref<8x64xf32, #tpu.memory_space<vmem>>, vector<8x32xf32>
    tpu.vector_store %arg9[%c0_48, %c32_49], %95 {strides = array<i32>} : memref<8x64xf32, #tpu.memory_space<vmem>>, vector<8x32xf32>,
    %c0_50 = arith.constant 0 : index
    %c0_51 = arith.constant 0 : index
    %97 = vector.load %arg8[%c0_50, %c0_51] : memref<8x64xf32, #tpu.memory_space<vmem>>, vector<8x64xf32>
    %c0_52 = arith.constant 0 : index
    %c0_53 = arith.constant 0 : index
    %98 = vector.load %arg9[%c0_52, %c0_53] : memref<8x64xf32, #tpu.memory_space<vmem>>, vector<8x64xf32>
    %99 = arith.truncf %97 : vector<8x64xf32> to vector<8x64xbf16>
    %cst_54 = arith.constant dense<0.000000e+00> : vector<8x256xf32>
    %100 = tpu.matmul %99, %16, %cst_54 {dimension_numbers = #tpu.dot_dimension_numbers<[1], [0], [0], [1], [0, 0, 1, 1], [], []>} : vector<8x64xbf16>, vector<64x256xbf16>, vector<8x256xf32> -> vector<8x256xf32>
    %c1 = arith.constant 1 : index
    %c0_55 = arith.constant 0 : index
    %c0_56 = arith.constant 0 : index
    %101 = vector.load %arg7[%c1, %c0_55, %c0_56] : memref<12x8x256xf32, #tpu.memory_space<vmem>>, vector<1x8x256xf32>
    %102 = vector.shape_cast %101 : vector<1x8x256xf32> to vector<8x256xf32>
    %c10 = arith.constant 10 : index
    %c0_57 = arith.constant 0 : index
    %c0_58 = arith.constant 0 : index
    %103 = vector.load %arg7[%c10, %c0_57, %c0_58] : memref<12x8x256xf32, #tpu.memory_space<vmem>>, vector<1x8x256xf32>
    %104 = vector.shape_cast %103 : vector<1x8x256xf32> to vector<8x256xf32>
    %105 = vector.extract_strided_slice %102 {offsets = [0, 0], sizes = [8, 128], strides = [1, 1]} : vector<8x256xf32> to vector<8x128xf32>
    %106 = vector.extract_strided_slice %100 {offsets = [0, 0], sizes = [8, 128], strides = [1, 1]} : vector<8x256xf32> to vector<8x128xf32>
    %107 = arith.addf %105, %106 : vector<8x128xf32>
    %108 = vector.extract_strided_slice %104 {offsets = [0, 128], sizes = [8, 128], strides = [1, 1]} : vector<8x256xf32> to vector<8x128xf32>
    %109 = vector.extract_strided_slice %100 {offsets = [0, 128], sizes = [8, 128], strides = [1, 1]} : vector<8x256xf32> to vector<8x128xf32>
    %110 = arith.addf %108, %109 : vector<8x128xf32>
    %111 = vector.extract_strided_slice %107 {offsets = [0, 0], sizes = [8, 96], strides = [1, 1]} : vector<8x128xf32> to vector<8x96xf32>
    %cst_59 = arith.constant 5.000000e-01 : f32
    %112 = vector.broadcast %cst_59 : f32 to vector<8x96xf32>
    %113 = arith.mulf %112, %111 : vector<8x96xf32>
    %114 = math.tanh %113 : vector<8x96xf32>
    %cst_60 = arith.constant 1.000000e+00 : f32
    %115 = vector.broadcast %cst_60 : f32 to vector<8x96xf32>
    %116 = arith.addf %114, %115 : vector<8x96xf32>
    %cst_61 = arith.constant 5.000000e-01 : f32
    %117 = vector.broadcast %cst_61 : f32 to vector<8x96xf32>
    %118 = arith.mulf %117, %116 : vector<8x96xf32>
    %119 = vector.extract_strided_slice %110 {offsets = [0, 0], sizes = [8, 96], strides = [1, 1]} : vector<8x128xf32> to vector<8x96xf32>
    %cst_62 = arith.constant 5.000000e-01 : f32
    %120 = vector.broadcast %cst_62 : f32 to vector<8x96xf32>
    %121 = arith.mulf %120, %119 : vector<8x96xf32>
    %122 = math.tanh %121 : vector<8x96xf32>
    %cst_63 = arith.constant 1.000000e+00 : f32
    %123 = vector.broadcast %cst_63 : f32 to vector<8x96xf32>
    %124 = arith.addf %122, %123 : vector<8x96xf32>
    %cst_64 = arith.constant 5.000000e-01 : f32
    %125 = vector.broadcast %cst_64 : f32 to vector<8x96xf32>
    %126 = arith.mulf %125, %124 : vector<8x96xf32>
    %127 = vector.extract_strided_slice %107 {offsets = [0, 96], sizes = [8, 32], strides = [1, 1]} : vector<8x128xf32> to vector<8x32xf32>
    %128 = math.tanh %127 : vector<8x32xf32>
    %129 = vector.extract_strided_slice %110 {offsets = [0, 96], sizes = [8, 32], strides = [1, 1]} : vector<8x128xf32> to vector<8x32xf32>
    %130 = math.tanh %129 : vector<8x32xf32>
    %131 = vector.extract_strided_slice %118 {offsets = [0, 32], sizes = [8, 32], strides = [1, 1]} : vector<8x96xf32> to vector<8x32xf32>
    %132 = vector.extract_strided_slice %98 {offsets = [0, 0], sizes = [8, 32], strides = [1, 1]} : vector<8x64xf32> to vector<8x32xf32>
    %133 = arith.mulf %131, %132 : vector<8x32xf32>
    %134 = vector.extract_strided_slice %118 {offsets = [0, 0], sizes = [8, 32], strides = [1, 1]} : vector<8x96xf32> to vector<8x32xf32>
    %135 = arith.mulf %134, %128 : vector<8x32xf32>
    %136 = arith.addf %133, %135 : vector<8x32xf32>
    %137 = vector.extract_strided_slice %126 {offsets = [0, 32], sizes = [8, 32], strides = [1, 1]} : vector<8x96xf32> to vector<8x32xf32>
    %138 = vector.extract_strided_slice %98 {offsets = [0, 32], sizes = [8, 32], strides = [1, 1]} : vector<8x64xf32> to vector<8x32xf32>
    %139 = arith.mulf %137, %138 : vector<8x32xf32>
    %140 = vector.extract_strided_slice %126 {offsets = [0, 0], sizes = [8, 32], strides = [1, 1]} : vector<8x96xf32> to vector<8x32xf32>
    %141 = arith.mulf %140, %130 : vector<8x32xf32>
    %142 = arith.addf %139, %141 : vector<8x32xf32>
    %143 = vector.extract_strided_slice %118 {offsets = [0, 64], sizes = [8, 32], strides = [1, 1]} : vector<8x96xf32> to vector<8x32xf32>
    %144 = math.tanh %136 : vector<8x32xf32>
    %145 = arith.mulf %143, %144 : vector<8x32xf32>
    %146 = vector.extract_strided_slice %126 {offsets = [0, 64], sizes = [8, 32], strides = [1, 1]} : vector<8x96xf32> to vector<8x32xf32>
    %147 = math.tanh %142 : vector<8x32xf32>
    %148 = arith.mulf %146, %147 : vector<8x32xf32>
    %c1_i32 = arith.constant 1 : i32
    %149 = vector.broadcast %c1_i32 : i32 to vector<8x32xi32>
    %150 = arith.cmpi sgt, %15, %149 : vector<8x32xi32>
    %c10_i32 = arith.constant 10 : i32
    %151 = vector.broadcast %c10_i32 : i32 to vector<8x32xi32>
    %152 = arith.cmpi sgt, %15, %151 : vector<8x32xi32>
    %cst_65 = arith.constant 0.000000e+00 : f32
    %153 = vector.broadcast %cst_65 : f32 to vector<8x32xf32>
    %154 = arith.select %150, %145, %153 : vector<8x32xi1>, vector<8x32xf32>
    %155 = arith.truncf %154 : vector<8x32xf32> to vector<8x32xbf16>
    %c1_66 = arith.constant 1 : index
    %c0_67 = arith.constant 0 : index
    %c0_68 = arith.constant 0 : index
    %156 = vector.load %arg6[%c1_66, %c0_67, %c0_68] : memref<12x8x64xbf16, #tpu.memory_space<vmem>>, vector<1x8x32xbf16>
    %157 = vector.shape_cast %156 : vector<1x8x32xbf16> to vector<8x32xbf16>
    %158 = vector.shape_cast %155 : vector<8x32xbf16> to vector<1x8x32xbf16>
    tpu.vector_store %arg6[%c1_66, %c0_67, %c0_68], %158 {strides = array<i32>} : memref<12x8x64xbf16, #tpu.memory_space<vmem>>, vector<1x8x32xbf16>,
    %cst_69 = arith.constant 0.000000e+00 : f32
    %159 = vector.broadcast %cst_69 : f32 to vector<8x32xf32>
    %160 = arith.select %152, %148, %159 : vector<8x32xi1>, vector<8x32xf32>
    %161 = arith.truncf %160 : vector<8x32xf32> to vector<8x32xbf16>
    %c10_70 = arith.constant 10 : index
    %c0_71 = arith.constant 0 : index
    %c32_72 = arith.constant 32 : index
    %162 = vector.load %arg6[%c10_70, %c0_71, %c32_72] : memref<12x8x64xbf16, #tpu.memory_space<vmem>>, vector<1x8x32xbf16>
    %163 = vector.shape_cast %162 : vector<1x8x32xbf16> to vector<8x32xbf16>
    %164 = vector.shape_cast %161 : vector<8x32xbf16> to vector<1x8x32xbf16>
    tpu.vector_store %arg6[%c10_70, %c0_71, %c32_72], %164 {strides = array<i32>} : memref<12x8x64xbf16, #tpu.memory_space<vmem>>, vector<1x8x32xbf16>,
    %165 = vector.extract_strided_slice %97 {offsets = [0, 0], sizes = [8, 32], strides = [1, 1]} : vector<8x64xf32> to vector<8x32xf32>
    %166 = arith.select %150, %145, %165 : vector<8x32xi1>, vector<8x32xf32>
    %c0_73 = arith.constant 0 : index
    %c0_74 = arith.constant 0 : index
    %167 = vector.load %arg8[%c0_73, %c0_74] : memref<8x64xf32, #tpu.memory_space<vmem>>, vector<8x32xf32>
    tpu.vector_store %arg8[%c0_73, %c0_74], %166 {strides = array<i32>} : memref<8x64xf32, #tpu.memory_space<vmem>>, vector<8x32xf32>,
    %168 = vector.extract_strided_slice %97 {offsets = [0, 32], sizes = [8, 32], strides = [1, 1]} : vector<8x64xf32> to vector<8x32xf32>
    %169 = arith.select %152, %148, %168 : vector<8x32xi1>, vector<8x32xf32>
    %c0_75 = arith.constant 0 : index
    %c32_76 = arith.constant 32 : index
    %170 = vector.load %arg8[%c0_75, %c32_76] : memref<8x64xf32, #tpu.memory_space<vmem>>, vector<8x32xf32>
    tpu.vector_store %arg8[%c0_75, %c32_76], %169 {strides = array<i32>} : memref<8x64xf32, #tpu.memory_space<vmem>>, vector<8x32xf32>,
    %171 = vector.extract_strided_slice %98 {offsets = [0, 0], sizes = [8, 32], strides = [1, 1]} : vector<8x64xf32> to vector<8x32xf32>
    %172 = arith.select %150, %136, %171 : vector<8x32xi1>, vector<8x32xf32>
    %c0_77 = arith.constant 0 : index
    %c0_78 = arith.constant 0 : index
    %173 = vector.load %arg9[%c0_77, %c0_78] : memref<8x64xf32, #tpu.memory_space<vmem>>, vector<8x32xf32>
    tpu.vector_store %arg9[%c0_77, %c0_78], %172 {strides = array<i32>} : memref<8x64xf32, #tpu.memory_space<vmem>>, vector<8x32xf32>,
    %174 = vector.extract_strided_slice %98 {offsets = [0, 32], sizes = [8, 32], strides = [1, 1]} : vector<8x64xf32> to vector<8x32xf32>
    %175 = arith.select %152, %142, %174 : vector<8x32xi1>, vector<8x32xf32>
    %c0_79 = arith.constant 0 : index
    %c32_80 = arith.constant 32 : index
    %176 = vector.load %arg9[%c0_79, %c32_80] : memref<8x64xf32, #tpu.memory_space<vmem>>, vector<8x32xf32>
    tpu.vector_store %arg9[%c0_79, %c32_80], %175 {strides = array<i32>} : memref<8x64xf32, #tpu.memory_space<vmem>>, vector<8x32xf32>,
    %c0_81 = arith.constant 0 : index
    %c0_82 = arith.constant 0 : index
    %177 = vector.load %arg8[%c0_81, %c0_82] : memref<8x64xf32, #tpu.memory_space<vmem>>, vector<8x64xf32>
    %c0_83 = arith.constant 0 : index
    %c0_84 = arith.constant 0 : index
    %178 = vector.load %arg9[%c0_83, %c0_84] : memref<8x64xf32, #tpu.memory_space<vmem>>, vector<8x64xf32>
    %179 = arith.truncf %177 : vector<8x64xf32> to vector<8x64xbf16>
    %cst_85 = arith.constant dense<0.000000e+00> : vector<8x256xf32>
    %180 = tpu.matmul %179, %16, %cst_85 {dimension_numbers = #tpu.dot_dimension_numbers<[1], [0], [0], [1], [0, 0, 1, 1], [], []>} : vector<8x64xbf16>, vector<64x256xbf16>, vector<8x256xf32> -> vector<8x256xf32>
    %c2 = arith.constant 2 : index
    %c0_86 = arith.constant 0 : index
    %c0_87 = arith.constant 0 : index
    %181 = vector.load %arg7[%c2, %c0_86, %c0_87] : memref<12x8x256xf32, #tpu.memory_space<vmem>>, vector<1x8x256xf32>
    %182 = vector.shape_cast %181 : vector<1x8x256xf32> to vector<8x256xf32>
    %c9 = arith.constant 9 : index
    %c0_88 = arith.constant 0 : index
    %c0_89 = arith.constant 0 : index
    %183 = vector.load %arg7[%c9, %c0_88, %c0_89] : memref<12x8x256xf32, #tpu.memory_space<vmem>>, vector<1x8x256xf32>
    %184 = vector.shape_cast %183 : vector<1x8x256xf32> to vector<8x256xf32>
    %185 = vector.extract_strided_slice %182 {offsets = [0, 0], sizes = [8, 128], strides = [1, 1]} : vector<8x256xf32> to vector<8x128xf32>
    %186 = vector.extract_strided_slice %180 {offsets = [0, 0], sizes = [8, 128], strides = [1, 1]} : vector<8x256xf32> to vector<8x128xf32>
    %187 = arith.addf %185, %186 : vector<8x128xf32>
    %188 = vector.extract_strided_slice %184 {offsets = [0, 128], sizes = [8, 128], strides = [1, 1]} : vector<8x256xf32> to vector<8x128xf32>
    %189 = vector.extract_strided_slice %180 {offsets = [0, 128], sizes = [8, 128], strides = [1, 1]} : vector<8x256xf32> to vector<8x128xf32>
    %190 = arith.addf %188, %189 : vector<8x128xf32>
    %191 = vector.extract_strided_slice %187 {offsets = [0, 0], sizes = [8, 96], strides = [1, 1]} : vector<8x128xf32> to vector<8x96xf32>
    %cst_90 = arith.constant 5.000000e-01 : f32
    %192 = vector.broadcast %cst_90 : f32 to vector<8x96xf32>
    %193 = arith.mulf %192, %191 : vector<8x96xf32>
    %194 = math.tanh %193 : vector<8x96xf32>
    %cst_91 = arith.constant 1.000000e+00 : f32
    %195 = vector.broadcast %cst_91 : f32 to vector<8x96xf32>
    %196 = arith.addf %194, %195 : vector<8x96xf32>
    %cst_92 = arith.constant 5.000000e-01 : f32
    %197 = vector.broadcast %cst_92 : f32 to vector<8x96xf32>
    %198 = arith.mulf %197, %196 : vector<8x96xf32>
    %199 = vector.extract_strided_slice %190 {offsets = [0, 0], sizes = [8, 96], strides = [1, 1]} : vector<8x128xf32> to vector<8x96xf32>
    %cst_93 = arith.constant 5.000000e-01 : f32
    %200 = vector.broadcast %cst_93 : f32 to vector<8x96xf32>
    %201 = arith.mulf %200, %199 : vector<8x96xf32>
    %202 = math.tanh %201 : vector<8x96xf32>
    %cst_94 = arith.constant 1.000000e+00 : f32
    %203 = vector.broadcast %cst_94 : f32 to vector<8x96xf32>
    %204 = arith.addf %202, %203 : vector<8x96xf32>
    %cst_95 = arith.constant 5.000000e-01 : f32
    %205 = vector.broadcast %cst_95 : f32 to vector<8x96xf32>
    %206 = arith.mulf %205, %204 : vector<8x96xf32>
    %207 = vector.extract_strided_slice %187 {offsets = [0, 96], sizes = [8, 32], strides = [1, 1]} : vector<8x128xf32> to vector<8x32xf32>
    %208 = math.tanh %207 : vector<8x32xf32>
    %209 = vector.extract_strided_slice %190 {offsets = [0, 96], sizes = [8, 32], strides = [1, 1]} : vector<8x128xf32> to vector<8x32xf32>
    %210 = math.tanh %209 : vector<8x32xf32>
    %211 = vector.extract_strided_slice %198 {offsets = [0, 32], sizes = [8, 32], strides = [1, 1]} : vector<8x96xf32> to vector<8x32xf32>
    %212 = vector.extract_strided_slice %178 {offsets = [0, 0], sizes = [8, 32], strides = [1, 1]} : vector<8x64xf32> to vector<8x32xf32>
    %213 = arith.mulf %211, %212 : vector<8x32xf32>
    %214 = vector.extract_strided_slice %198 {offsets = [0, 0], sizes = [8, 32], strides = [1, 1]} : vector<8x96xf32> to vector<8x32xf32>
    %215 = arith.mulf %214, %208 : vector<8x32xf32>
    %216 = arith.addf %213, %215 : vector<8x32xf32>
    %217 = vector.extract_strided_slice %206 {offsets = [0, 32], sizes = [8, 32], strides = [1, 1]} : vector<8x96xf32> to vector<8x32xf32>
    %218 = vector.extract_strided_slice %178 {offsets = [0, 32], sizes = [8, 32], strides = [1, 1]} : vector<8x64xf32> to vector<8x32xf32>
    %219 = arith.mulf %217, %218 : vector<8x32xf32>
    %220 = vector.extract_strided_slice %206 {offsets = [0, 0], sizes = [8, 32], strides = [1, 1]} : vector<8x96xf32> to vector<8x32xf32>
    %221 = arith.mulf %220, %210 : vector<8x32xf32>
    %222 = arith.addf %219, %221 : vector<8x32xf32>
    %223 = vector.extract_strided_slice %198 {offsets = [0, 64], sizes = [8, 32], strides = [1, 1]} : vector<8x96xf32> to vector<8x32xf32>
    %224 = math.tanh %216 : vector<8x32xf32>
    %225 = arith.mulf %223, %224 : vector<8x32xf32>
    %226 = vector.extract_strided_slice %206 {offsets = [0, 64], sizes = [8, 32], strides = [1, 1]} : vector<8x96xf32> to vector<8x32xf32>
    %227 = math.tanh %222 : vector<8x32xf32>
    %228 = arith.mulf %226, %227 : vector<8x32xf32>
    %c2_i32 = arith.constant 2 : i32
    %229 = vector.broadcast %c2_i32 : i32 to vector<8x32xi32>
    %230 = arith.cmpi sgt, %15, %229 : vector<8x32xi32>
    %c9_i32 = arith.constant 9 : i32
    %231 = vector.broadcast %c9_i32 : i32 to vector<8x32xi32>
    %232 = arith.cmpi sgt, %15, %231 : vector<8x32xi32>
    %cst_96 = arith.constant 0.000000e+00 : f32
    %233 = vector.broadcast %cst_96 : f32 to vector<8x32xf32>
    %234 = arith.select %230, %225, %233 : vector<8x32xi1>, vector<8x32xf32>
    %235 = arith.truncf %234 : vector<8x32xf32> to vector<8x32xbf16>
    %c2_97 = arith.constant 2 : index
    %c0_98 = arith.constant 0 : index
    %c0_99 = arith.constant 0 : index
    %236 = vector.load %arg6[%c2_97, %c0_98, %c0_99] : memref<12x8x64xbf16, #tpu.memory_space<vmem>>, vector<1x8x32xbf16>
    %237 = vector.shape_cast %236 : vector<1x8x32xbf16> to vector<8x32xbf16>
    %238 = vector.shape_cast %235 : vector<8x32xbf16> to vector<1x8x32xbf16>
    tpu.vector_store %arg6[%c2_97, %c0_98, %c0_99], %238 {strides = array<i32>} : memref<12x8x64xbf16, #tpu.memory_space<vmem>>, vector<1x8x32xbf16>,
    %cst_100 = arith.constant 0.000000e+00 : f32
    %239 = vector.broadcast %cst_100 : f32 to vector<8x32xf32>
    %240 = arith.select %232, %228, %239 : vector<8x32xi1>, vector<8x32xf32>
    %241 = arith.truncf %240 : vector<8x32xf32> to vector<8x32xbf16>
    %c9_101 = arith.constant 9 : index
    %c0_102 = arith.constant 0 : index
    %c32_103 = arith.constant 32 : index
    %242 = vector.load %arg6[%c9_101, %c0_102, %c32_103] : memref<12x8x64xbf16, #tpu.memory_space<vmem>>, vector<1x8x32xbf16>
    %243 = vector.shape_cast %242 : vector<1x8x32xbf16> to vector<8x32xbf16>
    %244 = vector.shape_cast %241 : vector<8x32xbf16> to vector<1x8x32xbf16>
    tpu.vector_store %arg6[%c9_101, %c0_102, %c32_103], %244 {strides = array<i32>} : memref<12x8x64xbf16, #tpu.memory_space<vmem>>, vector<1x8x32xbf16>,
    %245 = vector.extract_strided_slice %177 {offsets = [0, 0], sizes = [8, 32], strides = [1, 1]} : vector<8x64xf32> to vector<8x32xf32>
    %246 = arith.select %230, %225, %245 : vector<8x32xi1>, vector<8x32xf32>
    %c0_104 = arith.constant 0 : index
    %c0_105 = arith.constant 0 : index
    %247 = vector.load %arg8[%c0_104, %c0_105] : memref<8x64xf32, #tpu.memory_space<vmem>>, vector<8x32xf32>
    tpu.vector_store %arg8[%c0_104, %c0_105], %246 {strides = array<i32>} : memref<8x64xf32, #tpu.memory_space<vmem>>, vector<8x32xf32>,
    %248 = vector.extract_strided_slice %177 {offsets = [0, 32], sizes = [8, 32], strides = [1, 1]} : vector<8x64xf32> to vector<8x32xf32>
    %249 = arith.select %232, %228, %248 : vector<8x32xi1>, vector<8x32xf32>
    %c0_106 = arith.constant 0 : index
    %c32_107 = arith.constant 32 : index
    %250 = vector.load %arg8[%c0_106, %c32_107] : memref<8x64xf32, #tpu.memory_space<vmem>>, vector<8x32xf32>
    tpu.vector_store %arg8[%c0_106, %c32_107], %249 {strides = array<i32>} : memref<8x64xf32, #tpu.memory_space<vmem>>, vector<8x32xf32>,
    %251 = vector.extract_strided_slice %178 {offsets = [0, 0], sizes = [8, 32], strides = [1, 1]} : vector<8x64xf32> to vector<8x32xf32>
    %252 = arith.select %230, %216, %251 : vector<8x32xi1>, vector<8x32xf32>
    %c0_108 = arith.constant 0 : index
    %c0_109 = arith.constant 0 : index
    %253 = vector.load %arg9[%c0_108, %c0_109] : memref<8x64xf32, #tpu.memory_space<vmem>>, vector<8x32xf32>
    tpu.vector_store %arg9[%c0_108, %c0_109], %252 {strides = array<i32>} : memref<8x64xf32, #tpu.memory_space<vmem>>, vector<8x32xf32>,
    %254 = vector.extract_strided_slice %178 {offsets = [0, 32], sizes = [8, 32], strides = [1, 1]} : vector<8x64xf32> to vector<8x32xf32>
    %255 = arith.select %232, %222, %254 : vector<8x32xi1>, vector<8x32xf32>
    %c0_110 = arith.constant 0 : index
    %c32_111 = arith.constant 32 : index
    %256 = vector.load %arg9[%c0_110, %c32_111] : memref<8x64xf32, #tpu.memory_space<vmem>>, vector<8x32xf32>
    tpu.vector_store %arg9[%c0_110, %c32_111], %255 {strides = array<i32>} : memref<8x64xf32, #tpu.memory_space<vmem>>, vector<8x32xf32>,
    %c0_112 = arith.constant 0 : index
    %c0_113 = arith.constant 0 : index
    %257 = vector.load %arg8[%c0_112, %c0_113] : memref<8x64xf32, #tpu.memory_space<vmem>>, vector<8x64xf32>
    %c0_114 = arith.constant 0 : index
    %c0_115 = arith.constant 0 : index
    %258 = vector.load %arg9[%c0_114, %c0_115] : memref<8x64xf32, #tpu.memory_space<vmem>>, vector<8x64xf32>
    %259 = arith.truncf %257 : vector<8x64xf32> to vector<8x64xbf16>
    %cst_116 = arith.constant dense<0.000000e+00> : vector<8x256xf32>
    %260 = tpu.matmul %259, %16, %cst_116 {dimension_numbers = #tpu.dot_dimension_numbers<[1], [0], [0], [1], [0, 0, 1, 1], [], []>} : vector<8x64xbf16>, vector<64x256xbf16>, vector<8x256xf32> -> vector<8x256xf32>
    %c3 = arith.constant 3 : index
    %c0_117 = arith.constant 0 : index
    %c0_118 = arith.constant 0 : index
    %261 = vector.load %arg7[%c3, %c0_117, %c0_118] : memref<12x8x256xf32, #tpu.memory_space<vmem>>, vector<1x8x256xf32>
    %262 = vector.shape_cast %261 : vector<1x8x256xf32> to vector<8x256xf32>
    %c8 = arith.constant 8 : index
    %c0_119 = arith.constant 0 : index
    %c0_120 = arith.constant 0 : index
    %263 = vector.load %arg7[%c8, %c0_119, %c0_120] : memref<12x8x256xf32, #tpu.memory_space<vmem>>, vector<1x8x256xf32>
    %264 = vector.shape_cast %263 : vector<1x8x256xf32> to vector<8x256xf32>
    %265 = vector.extract_strided_slice %262 {offsets = [0, 0], sizes = [8, 128], strides = [1, 1]} : vector<8x256xf32> to vector<8x128xf32>
    %266 = vector.extract_strided_slice %260 {offsets = [0, 0], sizes = [8, 128], strides = [1, 1]} : vector<8x256xf32> to vector<8x128xf32>
    %267 = arith.addf %265, %266 : vector<8x128xf32>
    %268 = vector.extract_strided_slice %264 {offsets = [0, 128], sizes = [8, 128], strides = [1, 1]} : vector<8x256xf32> to vector<8x128xf32>
    %269 = vector.extract_strided_slice %260 {offsets = [0, 128], sizes = [8, 128], strides = [1, 1]} : vector<8x256xf32> to vector<8x128xf32>
    %270 = arith.addf %268, %269 : vector<8x128xf32>
    %271 = vector.extract_strided_slice %267 {offsets = [0, 0], sizes = [8, 96], strides = [1, 1]} : vector<8x128xf32> to vector<8x96xf32>
    %cst_121 = arith.constant 5.000000e-01 : f32
    %272 = vector.broadcast %cst_121 : f32 to vector<8x96xf32>
    %273 = arith.mulf %272, %271 : vector<8x96xf32>
    %274 = math.tanh %273 : vector<8x96xf32>
    %cst_122 = arith.constant 1.000000e+00 : f32
    %275 = vector.broadcast %cst_122 : f32 to vector<8x96xf32>
    %276 = arith.addf %274, %275 : vector<8x96xf32>
    %cst_123 = arith.constant 5.000000e-01 : f32
    %277 = vector.broadcast %cst_123 : f32 to vector<8x96xf32>
    %278 = arith.mulf %277, %276 : vector<8x96xf32>
    %279 = vector.extract_strided_slice %270 {offsets = [0, 0], sizes = [8, 96], strides = [1, 1]} : vector<8x128xf32> to vector<8x96xf32>
    %cst_124 = arith.constant 5.000000e-01 : f32
    %280 = vector.broadcast %cst_124 : f32 to vector<8x96xf32>
    %281 = arith.mulf %280, %279 : vector<8x96xf32>
    %282 = math.tanh %281 : vector<8x96xf32>
    %cst_125 = arith.constant 1.000000e+00 : f32
    %283 = vector.broadcast %cst_125 : f32 to vector<8x96xf32>
    %284 = arith.addf %282, %283 : vector<8x96xf32>
    %cst_126 = arith.constant 5.000000e-01 : f32
    %285 = vector.broadcast %cst_126 : f32 to vector<8x96xf32>
    %286 = arith.mulf %285, %284 : vector<8x96xf32>
    %287 = vector.extract_strided_slice %267 {offsets = [0, 96], sizes = [8, 32], strides = [1, 1]} : vector<8x128xf32> to vector<8x32xf32>
    %288 = math.tanh %287 : vector<8x32xf32>
    %289 = vector.extract_strided_slice %270 {offsets = [0, 96], sizes = [8, 32], strides = [1, 1]} : vector<8x128xf32> to vector<8x32xf32>
    %290 = math.tanh %289 : vector<8x32xf32>
    %291 = vector.extract_strided_slice %278 {offsets = [0, 32], sizes = [8, 32], strides = [1, 1]} : vector<8x96xf32> to vector<8x32xf32>
    %292 = vector.extract_strided_slice %258 {offsets = [0, 0], sizes = [8, 32], strides = [1, 1]} : vector<8x64xf32> to vector<8x32xf32>
    %293 = arith.mulf %291, %292 : vector<8x32xf32>
    %294 = vector.extract_strided_slice %278 {offsets = [0, 0], sizes = [8, 32], strides = [1, 1]} : vector<8x96xf32> to vector<8x32xf32>
    %295 = arith.mulf %294, %288 : vector<8x32xf32>
    %296 = arith.addf %293, %295 : vector<8x32xf32>
    %297 = vector.extract_strided_slice %286 {offsets = [0, 32], sizes = [8, 32], strides = [1, 1]} : vector<8x96xf32> to vector<8x32xf32>
    %298 = vector.extract_strided_slice %258 {offsets = [0, 32], sizes = [8, 32], strides = [1, 1]} : vector<8x64xf32> to vector<8x32xf32>
    %299 = arith.mulf %297, %298 : vector<8x32xf32>
    %300 = vector.extract_strided_slice %286 {offsets = [0, 0], sizes = [8, 32], strides = [1, 1]} : vector<8x96xf32> to vector<8x32xf32>
    %301 = arith.mulf %300, %290 : vector<8x32xf32>
    %302 = arith.addf %299, %301 : vector<8x32xf32>
    %303 = vector.extract_strided_slice %278 {offsets = [0, 64], sizes = [8, 32], strides = [1, 1]} : vector<8x96xf32> to vector<8x32xf32>
    %304 = math.tanh %296 : vector<8x32xf32>
    %305 = arith.mulf %303, %304 : vector<8x32xf32>
    %306 = vector.extract_strided_slice %286 {offsets = [0, 64], sizes = [8, 32], strides = [1, 1]} : vector<8x96xf32> to vector<8x32xf32>
    %307 = math.tanh %302 : vector<8x32xf32>
    %308 = arith.mulf %306, %307 : vector<8x32xf32>
    %c3_i32 = arith.constant 3 : i32
    %309 = vector.broadcast %c3_i32 : i32 to vector<8x32xi32>
    %310 = arith.cmpi sgt, %15, %309 : vector<8x32xi32>
    %c8_i32 = arith.constant 8 : i32
    %311 = vector.broadcast %c8_i32 : i32 to vector<8x32xi32>
    %312 = arith.cmpi sgt, %15, %311 : vector<8x32xi32>
    %cst_127 = arith.constant 0.000000e+00 : f32
    %313 = vector.broadcast %cst_127 : f32 to vector<8x32xf32>
    %314 = arith.select %310, %305, %313 : vector<8x32xi1>, vector<8x32xf32>
    %315 = arith.truncf %314 : vector<8x32xf32> to vector<8x32xbf16>
    %c3_128 = arith.constant 3 : index
    %c0_129 = arith.constant 0 : index
    %c0_130 = arith.constant 0 : index
    %316 = vector.load %arg6[%c3_128, %c0_129, %c0_130] : memref<12x8x64xbf16, #tpu.memory_space<vmem>>, vector<1x8x32xbf16>
    %317 = vector.shape_cast %316 : vector<1x8x32xbf16> to vector<8x32xbf16>
    %318 = vector.shape_cast %315 : vector<8x32xbf16> to vector<1x8x32xbf16>
    tpu.vector_store %arg6[%c3_128, %c0_129, %c0_130], %318 {strides = array<i32>} : memref<12x8x64xbf16, #tpu.memory_space<vmem>>, vector<1x8x32xbf16>,
    %cst_131 = arith.constant 0.000000e+00 : f32
    %319 = vector.broadcast %cst_131 : f32 to vector<8x32xf32>
    %320 = arith.select %312, %308, %319 : vector<8x32xi1>, vector<8x32xf32>
    %321 = arith.truncf %320 : vector<8x32xf32> to vector<8x32xbf16>
    %c8_132 = arith.constant 8 : index
    %c0_133 = arith.constant 0 : index
    %c32_134 = arith.constant 32 : index
    %322 = vector.load %arg6[%c8_132, %c0_133, %c32_134] : memref<12x8x64xbf16, #tpu.memory_space<vmem>>, vector<1x8x32xbf16>
    %323 = vector.shape_cast %322 : vector<1x8x32xbf16> to vector<8x32xbf16>
    %324 = vector.shape_cast %321 : vector<8x32xbf16> to vector<1x8x32xbf16>
    tpu.vector_store %arg6[%c8_132, %c0_133, %c32_134], %324 {strides = array<i32>} : memref<12x8x64xbf16, #tpu.memory_space<vmem>>, vector<1x8x32xbf16>,
    %325 = vector.extract_strided_slice %257 {offsets = [0, 0], sizes = [8, 32], strides = [1, 1]} : vector<8x64xf32> to vector<8x32xf32>
    %326 = arith.select %310, %305, %325 : vector<8x32xi1>, vector<8x32xf32>
    %c0_135 = arith.constant 0 : index
    %c0_136 = arith.constant 0 : index
    %327 = vector.load %arg8[%c0_135, %c0_136] : memref<8x64xf32, #tpu.memory_space<vmem>>, vector<8x32xf32>
    tpu.vector_store %arg8[%c0_135, %c0_136], %326 {strides = array<i32>} : memref<8x64xf32, #tpu.memory_space<vmem>>, vector<8x32xf32>,
    %328 = vector.extract_strided_slice %257 {offsets = [0, 32], sizes = [8, 32], strides = [1, 1]} : vector<8x64xf32> to vector<8x32xf32>
    %329 = arith.select %312, %308, %328 : vector<8x32xi1>, vector<8x32xf32>
    %c0_137 = arith.constant 0 : index
    %c32_138 = arith.constant 32 : index
    %330 = vector.load %arg8[%c0_137, %c32_138] : memref<8x64xf32, #tpu.memory_space<vmem>>, vector<8x32xf32>
    tpu.vector_store %arg8[%c0_137, %c32_138], %329 {strides = array<i32>} : memref<8x64xf32, #tpu.memory_space<vmem>>, vector<8x32xf32>,
    %331 = vector.extract_strided_slice %258 {offsets = [0, 0], sizes = [8, 32], strides = [1, 1]} : vector<8x64xf32> to vector<8x32xf32>
    %332 = arith.select %310, %296, %331 : vector<8x32xi1>, vector<8x32xf32>
    %c0_139 = arith.constant 0 : index
    %c0_140 = arith.constant 0 : index
    %333 = vector.load %arg9[%c0_139, %c0_140] : memref<8x64xf32, #tpu.memory_space<vmem>>, vector<8x32xf32>
    tpu.vector_store %arg9[%c0_139, %c0_140], %332 {strides = array<i32>} : memref<8x64xf32, #tpu.memory_space<vmem>>, vector<8x32xf32>,
    %334 = vector.extract_strided_slice %258 {offsets = [0, 32], sizes = [8, 32], strides = [1, 1]} : vector<8x64xf32> to vector<8x32xf32>
    %335 = arith.select %312, %302, %334 : vector<8x32xi1>, vector<8x32xf32>
    %c0_141 = arith.constant 0 : index
    %c32_142 = arith.constant 32 : index
    %336 = vector.load %arg9[%c0_141, %c32_142] : memref<8x64xf32, #tpu.memory_space<vmem>>, vector<8x32xf32>
    tpu.vector_store %arg9[%c0_141, %c32_142], %335 {strides = array<i32>} : memref<8x64xf32, #tpu.memory_space<vmem>>, vector<8x32xf32>,
    %c0_143 = arith.constant 0 : index
    %c0_144 = arith.constant 0 : index
    %337 = vector.load %arg8[%c0_143, %c0_144] : memref<8x64xf32, #tpu.memory_space<vmem>>, vector<8x64xf32>
    %c0_145 = arith.constant 0 : index
    %c0_146 = arith.constant 0 : index
    %338 = vector.load %arg9[%c0_145, %c0_146] : memref<8x64xf32, #tpu.memory_space<vmem>>, vector<8x64xf32>
    %339 = arith.truncf %337 : vector<8x64xf32> to vector<8x64xbf16>
    %cst_147 = arith.constant dense<0.000000e+00> : vector<8x256xf32>
    %340 = tpu.matmul %339, %16, %cst_147 {dimension_numbers = #tpu.dot_dimension_numbers<[1], [0], [0], [1], [0, 0, 1, 1], [], []>} : vector<8x64xbf16>, vector<64x256xbf16>, vector<8x256xf32> -> vector<8x256xf32>
    %c4 = arith.constant 4 : index
    %c0_148 = arith.constant 0 : index
    %c0_149 = arith.constant 0 : index
    %341 = vector.load %arg7[%c4, %c0_148, %c0_149] : memref<12x8x256xf32, #tpu.memory_space<vmem>>, vector<1x8x256xf32>
    %342 = vector.shape_cast %341 : vector<1x8x256xf32> to vector<8x256xf32>
    %c7 = arith.constant 7 : index
    %c0_150 = arith.constant 0 : index
    %c0_151 = arith.constant 0 : index
    %343 = vector.load %arg7[%c7, %c0_150, %c0_151] : memref<12x8x256xf32, #tpu.memory_space<vmem>>, vector<1x8x256xf32>
    %344 = vector.shape_cast %343 : vector<1x8x256xf32> to vector<8x256xf32>
    %345 = vector.extract_strided_slice %342 {offsets = [0, 0], sizes = [8, 128], strides = [1, 1]} : vector<8x256xf32> to vector<8x128xf32>
    %346 = vector.extract_strided_slice %340 {offsets = [0, 0], sizes = [8, 128], strides = [1, 1]} : vector<8x256xf32> to vector<8x128xf32>
    %347 = arith.addf %345, %346 : vector<8x128xf32>
    %348 = vector.extract_strided_slice %344 {offsets = [0, 128], sizes = [8, 128], strides = [1, 1]} : vector<8x256xf32> to vector<8x128xf32>
    %349 = vector.extract_strided_slice %340 {offsets = [0, 128], sizes = [8, 128], strides = [1, 1]} : vector<8x256xf32> to vector<8x128xf32>
    %350 = arith.addf %348, %349 : vector<8x128xf32>
    %351 = vector.extract_strided_slice %347 {offsets = [0, 0], sizes = [8, 96], strides = [1, 1]} : vector<8x128xf32> to vector<8x96xf32>
    %cst_152 = arith.constant 5.000000e-01 : f32
    %352 = vector.broadcast %cst_152 : f32 to vector<8x96xf32>
    %353 = arith.mulf %352, %351 : vector<8x96xf32>
    %354 = math.tanh %353 : vector<8x96xf32>
    %cst_153 = arith.constant 1.000000e+00 : f32
    %355 = vector.broadcast %cst_153 : f32 to vector<8x96xf32>
    %356 = arith.addf %354, %355 : vector<8x96xf32>
    %cst_154 = arith.constant 5.000000e-01 : f32
    %357 = vector.broadcast %cst_154 : f32 to vector<8x96xf32>
    %358 = arith.mulf %357, %356 : vector<8x96xf32>
    %359 = vector.extract_strided_slice %350 {offsets = [0, 0], sizes = [8, 96], strides = [1, 1]} : vector<8x128xf32> to vector<8x96xf32>
    %cst_155 = arith.constant 5.000000e-01 : f32
    %360 = vector.broadcast %cst_155 : f32 to vector<8x96xf32>
    %361 = arith.mulf %360, %359 : vector<8x96xf32>
    %362 = math.tanh %361 : vector<8x96xf32>
    %cst_156 = arith.constant 1.000000e+00 : f32
    %363 = vector.broadcast %cst_156 : f32 to vector<8x96xf32>
    %364 = arith.addf %362, %363 : vector<8x96xf32>
    %cst_157 = arith.constant 5.000000e-01 : f32
    %365 = vector.broadcast %cst_157 : f32 to vector<8x96xf32>
    %366 = arith.mulf %365, %364 : vector<8x96xf32>
    %367 = vector.extract_strided_slice %347 {offsets = [0, 96], sizes = [8, 32], strides = [1, 1]} : vector<8x128xf32> to vector<8x32xf32>
    %368 = math.tanh %367 : vector<8x32xf32>
    %369 = vector.extract_strided_slice %350 {offsets = [0, 96], sizes = [8, 32], strides = [1, 1]} : vector<8x128xf32> to vector<8x32xf32>
    %370 = math.tanh %369 : vector<8x32xf32>
    %371 = vector.extract_strided_slice %358 {offsets = [0, 32], sizes = [8, 32], strides = [1, 1]} : vector<8x96xf32> to vector<8x32xf32>
    %372 = vector.extract_strided_slice %338 {offsets = [0, 0], sizes = [8, 32], strides = [1, 1]} : vector<8x64xf32> to vector<8x32xf32>
    %373 = arith.mulf %371, %372 : vector<8x32xf32>
    %374 = vector.extract_strided_slice %358 {offsets = [0, 0], sizes = [8, 32], strides = [1, 1]} : vector<8x96xf32> to vector<8x32xf32>
    %375 = arith.mulf %374, %368 : vector<8x32xf32>
    %376 = arith.addf %373, %375 : vector<8x32xf32>
    %377 = vector.extract_strided_slice %366 {offsets = [0, 32], sizes = [8, 32], strides = [1, 1]} : vector<8x96xf32> to vector<8x32xf32>
    %378 = vector.extract_strided_slice %338 {offsets = [0, 32], sizes = [8, 32], strides = [1, 1]} : vector<8x64xf32> to vector<8x32xf32>
    %379 = arith.mulf %377, %378 : vector<8x32xf32>
    %380 = vector.extract_strided_slice %366 {offsets = [0, 0], sizes = [8, 32], strides = [1, 1]} : vector<8x96xf32> to vector<8x32xf32>
    %381 = arith.mulf %380, %370 : vector<8x32xf32>
    %382 = arith.addf %379, %381 : vector<8x32xf32>
    %383 = vector.extract_strided_slice %358 {offsets = [0, 64], sizes = [8, 32], strides = [1, 1]} : vector<8x96xf32> to vector<8x32xf32>
    %384 = math.tanh %376 : vector<8x32xf32>
    %385 = arith.mulf %383, %384 : vector<8x32xf32>
    %386 = vector.extract_strided_slice %366 {offsets = [0, 64], sizes = [8, 32], strides = [1, 1]} : vector<8x96xf32> to vector<8x32xf32>
    %387 = math.tanh %382 : vector<8x32xf32>
    %388 = arith.mulf %386, %387 : vector<8x32xf32>
    %c4_i32 = arith.constant 4 : i32
    %389 = vector.broadcast %c4_i32 : i32 to vector<8x32xi32>
    %390 = arith.cmpi sgt, %15, %389 : vector<8x32xi32>
    %c7_i32 = arith.constant 7 : i32
    %391 = vector.broadcast %c7_i32 : i32 to vector<8x32xi32>
    %392 = arith.cmpi sgt, %15, %391 : vector<8x32xi32>
    %cst_158 = arith.constant 0.000000e+00 : f32
    %393 = vector.broadcast %cst_158 : f32 to vector<8x32xf32>
    %394 = arith.select %390, %385, %393 : vector<8x32xi1>, vector<8x32xf32>
    %395 = arith.truncf %394 : vector<8x32xf32> to vector<8x32xbf16>
    %c4_159 = arith.constant 4 : index
    %c0_160 = arith.constant 0 : index
    %c0_161 = arith.constant 0 : index
    %396 = vector.load %arg6[%c4_159, %c0_160, %c0_161] : memref<12x8x64xbf16, #tpu.memory_space<vmem>>, vector<1x8x32xbf16>
    %397 = vector.shape_cast %396 : vector<1x8x32xbf16> to vector<8x32xbf16>
    %398 = vector.shape_cast %395 : vector<8x32xbf16> to vector<1x8x32xbf16>
    tpu.vector_store %arg6[%c4_159, %c0_160, %c0_161], %398 {strides = array<i32>} : memref<12x8x64xbf16, #tpu.memory_space<vmem>>, vector<1x8x32xbf16>,
    %cst_162 = arith.constant 0.000000e+00 : f32
    %399 = vector.broadcast %cst_162 : f32 to vector<8x32xf32>
    %400 = arith.select %392, %388, %399 : vector<8x32xi1>, vector<8x32xf32>
    %401 = arith.truncf %400 : vector<8x32xf32> to vector<8x32xbf16>
    %c7_163 = arith.constant 7 : index
    %c0_164 = arith.constant 0 : index
    %c32_165 = arith.constant 32 : index
    %402 = vector.load %arg6[%c7_163, %c0_164, %c32_165] : memref<12x8x64xbf16, #tpu.memory_space<vmem>>, vector<1x8x32xbf16>
    %403 = vector.shape_cast %402 : vector<1x8x32xbf16> to vector<8x32xbf16>
    %404 = vector.shape_cast %401 : vector<8x32xbf16> to vector<1x8x32xbf16>
    tpu.vector_store %arg6[%c7_163, %c0_164, %c32_165], %404 {strides = array<i32>} : memref<12x8x64xbf16, #tpu.memory_space<vmem>>, vector<1x8x32xbf16>,
    %405 = vector.extract_strided_slice %337 {offsets = [0, 0], sizes = [8, 32], strides = [1, 1]} : vector<8x64xf32> to vector<8x32xf32>
    %406 = arith.select %390, %385, %405 : vector<8x32xi1>, vector<8x32xf32>
    %c0_166 = arith.constant 0 : index
    %c0_167 = arith.constant 0 : index
    %407 = vector.load %arg8[%c0_166, %c0_167] : memref<8x64xf32, #tpu.memory_space<vmem>>, vector<8x32xf32>
    tpu.vector_store %arg8[%c0_166, %c0_167], %406 {strides = array<i32>} : memref<8x64xf32, #tpu.memory_space<vmem>>, vector<8x32xf32>,
    %408 = vector.extract_strided_slice %337 {offsets = [0, 32], sizes = [8, 32], strides = [1, 1]} : vector<8x64xf32> to vector<8x32xf32>
    %409 = arith.select %392, %388, %408 : vector<8x32xi1>, vector<8x32xf32>
    %c0_168 = arith.constant 0 : index
    %c32_169 = arith.constant 32 : index
    %410 = vector.load %arg8[%c0_168, %c32_169] : memref<8x64xf32, #tpu.memory_space<vmem>>, vector<8x32xf32>
    tpu.vector_store %arg8[%c0_168, %c32_169], %409 {strides = array<i32>} : memref<8x64xf32, #tpu.memory_space<vmem>>, vector<8x32xf32>,
    %411 = vector.extract_strided_slice %338 {offsets = [0, 0], sizes = [8, 32], strides = [1, 1]} : vector<8x64xf32> to vector<8x32xf32>
    %412 = arith.select %390, %376, %411 : vector<8x32xi1>, vector<8x32xf32>
    %c0_170 = arith.constant 0 : index
    %c0_171 = arith.constant 0 : index
    %413 = vector.load %arg9[%c0_170, %c0_171] : memref<8x64xf32, #tpu.memory_space<vmem>>, vector<8x32xf32>
    tpu.vector_store %arg9[%c0_170, %c0_171], %412 {strides = array<i32>} : memref<8x64xf32, #tpu.memory_space<vmem>>, vector<8x32xf32>,
    %414 = vector.extract_strided_slice %338 {offsets = [0, 32], sizes = [8, 32], strides = [1, 1]} : vector<8x64xf32> to vector<8x32xf32>
    %415 = arith.select %392, %382, %414 : vector<8x32xi1>, vector<8x32xf32>
    %c0_172 = arith.constant 0 : index
    %c32_173 = arith.constant 32 : index
    %416 = vector.load %arg9[%c0_172, %c32_173] : memref<8x64xf32, #tpu.memory_space<vmem>>, vector<8x32xf32>
    tpu.vector_store %arg9[%c0_172, %c32_173], %415 {strides = array<i32>} : memref<8x64xf32, #tpu.memory_space<vmem>>, vector<8x32xf32>,
    %c0_174 = arith.constant 0 : index
    %c0_175 = arith.constant 0 : index
    %417 = vector.load %arg8[%c0_174, %c0_175] : memref<8x64xf32, #tpu.memory_space<vmem>>, vector<8x64xf32>
    %c0_176 = arith.constant 0 : index
    %c0_177 = arith.constant 0 : index
    %418 = vector.load %arg9[%c0_176, %c0_177] : memref<8x64xf32, #tpu.memory_space<vmem>>, vector<8x64xf32>
    %419 = arith.truncf %417 : vector<8x64xf32> to vector<8x64xbf16>
    %cst_178 = arith.constant dense<0.000000e+00> : vector<8x256xf32>
    %420 = tpu.matmul %419, %16, %cst_178 {dimension_numbers = #tpu.dot_dimension_numbers<[1], [0], [0], [1], [0, 0, 1, 1], [], []>} : vector<8x64xbf16>, vector<64x256xbf16>, vector<8x256xf32> -> vector<8x256xf32>
    %c5 = arith.constant 5 : index
    %c0_179 = arith.constant 0 : index
    %c0_180 = arith.constant 0 : index
    %421 = vector.load %arg7[%c5, %c0_179, %c0_180] : memref<12x8x256xf32, #tpu.memory_space<vmem>>, vector<1x8x256xf32>
    %422 = vector.shape_cast %421 : vector<1x8x256xf32> to vector<8x256xf32>
    %c6 = arith.constant 6 : index
    %c0_181 = arith.constant 0 : index
    %c0_182 = arith.constant 0 : index
    %423 = vector.load %arg7[%c6, %c0_181, %c0_182] : memref<12x8x256xf32, #tpu.memory_space<vmem>>, vector<1x8x256xf32>
    %424 = vector.shape_cast %423 : vector<1x8x256xf32> to vector<8x256xf32>
    %425 = vector.extract_strided_slice %422 {offsets = [0, 0], sizes = [8, 128], strides = [1, 1]} : vector<8x256xf32> to vector<8x128xf32>
    %426 = vector.extract_strided_slice %420 {offsets = [0, 0], sizes = [8, 128], strides = [1, 1]} : vector<8x256xf32> to vector<8x128xf32>
    %427 = arith.addf %425, %426 : vector<8x128xf32>
    %428 = vector.extract_strided_slice %424 {offsets = [0, 128], sizes = [8, 128], strides = [1, 1]} : vector<8x256xf32> to vector<8x128xf32>
    %429 = vector.extract_strided_slice %420 {offsets = [0, 128], sizes = [8, 128], strides = [1, 1]} : vector<8x256xf32> to vector<8x128xf32>
    %430 = arith.addf %428, %429 : vector<8x128xf32>
    %431 = vector.extract_strided_slice %427 {offsets = [0, 0], sizes = [8, 96], strides = [1, 1]} : vector<8x128xf32> to vector<8x96xf32>
    %cst_183 = arith.constant 5.000000e-01 : f32
    %432 = vector.broadcast %cst_183 : f32 to vector<8x96xf32>
    %433 = arith.mulf %432, %431 : vector<8x96xf32>
    %434 = math.tanh %433 : vector<8x96xf32>
    %cst_184 = arith.constant 1.000000e+00 : f32
    %435 = vector.broadcast %cst_184 : f32 to vector<8x96xf32>
    %436 = arith.addf %434, %435 : vector<8x96xf32>
    %cst_185 = arith.constant 5.000000e-01 : f32
    %437 = vector.broadcast %cst_185 : f32 to vector<8x96xf32>
    %438 = arith.mulf %437, %436 : vector<8x96xf32>
    %439 = vector.extract_strided_slice %430 {offsets = [0, 0], sizes = [8, 96], strides = [1, 1]} : vector<8x128xf32> to vector<8x96xf32>
    %cst_186 = arith.constant 5.000000e-01 : f32
    %440 = vector.broadcast %cst_186 : f32 to vector<8x96xf32>
    %441 = arith.mulf %440, %439 : vector<8x96xf32>
    %442 = math.tanh %441 : vector<8x96xf32>
    %cst_187 = arith.constant 1.000000e+00 : f32
    %443 = vector.broadcast %cst_187 : f32 to vector<8x96xf32>
    %444 = arith.addf %442, %443 : vector<8x96xf32>
    %cst_188 = arith.constant 5.000000e-01 : f32
    %445 = vector.broadcast %cst_188 : f32 to vector<8x96xf32>
    %446 = arith.mulf %445, %444 : vector<8x96xf32>
    %447 = vector.extract_strided_slice %427 {offsets = [0, 96], sizes = [8, 32], strides = [1, 1]} : vector<8x128xf32> to vector<8x32xf32>
    %448 = math.tanh %447 : vector<8x32xf32>
    %449 = vector.extract_strided_slice %430 {offsets = [0, 96], sizes = [8, 32], strides = [1, 1]} : vector<8x128xf32> to vector<8x32xf32>
    %450 = math.tanh %449 : vector<8x32xf32>
    %451 = vector.extract_strided_slice %438 {offsets = [0, 32], sizes = [8, 32], strides = [1, 1]} : vector<8x96xf32> to vector<8x32xf32>
    %452 = vector.extract_strided_slice %418 {offsets = [0, 0], sizes = [8, 32], strides = [1, 1]} : vector<8x64xf32> to vector<8x32xf32>
    %453 = arith.mulf %451, %452 : vector<8x32xf32>
    %454 = vector.extract_strided_slice %438 {offsets = [0, 0], sizes = [8, 32], strides = [1, 1]} : vector<8x96xf32> to vector<8x32xf32>
    %455 = arith.mulf %454, %448 : vector<8x32xf32>
    %456 = arith.addf %453, %455 : vector<8x32xf32>
    %457 = vector.extract_strided_slice %446 {offsets = [0, 32], sizes = [8, 32], strides = [1, 1]} : vector<8x96xf32> to vector<8x32xf32>
    %458 = vector.extract_strided_slice %418 {offsets = [0, 32], sizes = [8, 32], strides = [1, 1]} : vector<8x64xf32> to vector<8x32xf32>
    %459 = arith.mulf %457, %458 : vector<8x32xf32>
    %460 = vector.extract_strided_slice %446 {offsets = [0, 0], sizes = [8, 32], strides = [1, 1]} : vector<8x96xf32> to vector<8x32xf32>
    %461 = arith.mulf %460, %450 : vector<8x32xf32>
    %462 = arith.addf %459, %461 : vector<8x32xf32>
    %463 = vector.extract_strided_slice %438 {offsets = [0, 64], sizes = [8, 32], strides = [1, 1]} : vector<8x96xf32> to vector<8x32xf32>
    %464 = math.tanh %456 : vector<8x32xf32>
    %465 = arith.mulf %463, %464 : vector<8x32xf32>
    %466 = vector.extract_strided_slice %446 {offsets = [0, 64], sizes = [8, 32], strides = [1, 1]} : vector<8x96xf32> to vector<8x32xf32>
    %467 = math.tanh %462 : vector<8x32xf32>
    %468 = arith.mulf %466, %467 : vector<8x32xf32>
    %c5_i32 = arith.constant 5 : i32
    %469 = vector.broadcast %c5_i32 : i32 to vector<8x32xi32>
    %470 = arith.cmpi sgt, %15, %469 : vector<8x32xi32>
    %c6_i32 = arith.constant 6 : i32
    %471 = vector.broadcast %c6_i32 : i32 to vector<8x32xi32>
    %472 = arith.cmpi sgt, %15, %471 : vector<8x32xi32>
    %cst_189 = arith.constant 0.000000e+00 : f32
    %473 = vector.broadcast %cst_189 : f32 to vector<8x32xf32>
    %474 = arith.select %470, %465, %473 : vector<8x32xi1>, vector<8x32xf32>
    %475 = arith.truncf %474 : vector<8x32xf32> to vector<8x32xbf16>
    %c5_190 = arith.constant 5 : index
    %c0_191 = arith.constant 0 : index
    %c0_192 = arith.constant 0 : index
    %476 = vector.load %arg6[%c5_190, %c0_191, %c0_192] : memref<12x8x64xbf16, #tpu.memory_space<vmem>>, vector<1x8x32xbf16>
    %477 = vector.shape_cast %476 : vector<1x8x32xbf16> to vector<8x32xbf16>
    %478 = vector.shape_cast %475 : vector<8x32xbf16> to vector<1x8x32xbf16>
    tpu.vector_store %arg6[%c5_190, %c0_191, %c0_192], %478 {strides = array<i32>} : memref<12x8x64xbf16, #tpu.memory_space<vmem>>, vector<1x8x32xbf16>,
    %cst_193 = arith.constant 0.000000e+00 : f32
    %479 = vector.broadcast %cst_193 : f32 to vector<8x32xf32>
    %480 = arith.select %472, %468, %479 : vector<8x32xi1>, vector<8x32xf32>
    %481 = arith.truncf %480 : vector<8x32xf32> to vector<8x32xbf16>
    %c6_194 = arith.constant 6 : index
    %c0_195 = arith.constant 0 : index
    %c32_196 = arith.constant 32 : index
    %482 = vector.load %arg6[%c6_194, %c0_195, %c32_196] : memref<12x8x64xbf16, #tpu.memory_space<vmem>>, vector<1x8x32xbf16>
    %483 = vector.shape_cast %482 : vector<1x8x32xbf16> to vector<8x32xbf16>
    %484 = vector.shape_cast %481 : vector<8x32xbf16> to vector<1x8x32xbf16>
    tpu.vector_store %arg6[%c6_194, %c0_195, %c32_196], %484 {strides = array<i32>} : memref<12x8x64xbf16, #tpu.memory_space<vmem>>, vector<1x8x32xbf16>,
    %485 = vector.extract_strided_slice %417 {offsets = [0, 0], sizes = [8, 32], strides = [1, 1]} : vector<8x64xf32> to vector<8x32xf32>
    %486 = arith.select %470, %465, %485 : vector<8x32xi1>, vector<8x32xf32>
    %c0_197 = arith.constant 0 : index
    %c0_198 = arith.constant 0 : index
    %487 = vector.load %arg8[%c0_197, %c0_198] : memref<8x64xf32, #tpu.memory_space<vmem>>, vector<8x32xf32>
    tpu.vector_store %arg8[%c0_197, %c0_198], %486 {strides = array<i32>} : memref<8x64xf32, #tpu.memory_space<vmem>>, vector<8x32xf32>,
    %488 = vector.extract_strided_slice %417 {offsets = [0, 32], sizes = [8, 32], strides = [1, 1]} : vector<8x64xf32> to vector<8x32xf32>
    %489 = arith.select %472, %468, %488 : vector<8x32xi1>, vector<8x32xf32>
    %c0_199 = arith.constant 0 : index
    %c32_200 = arith.constant 32 : index
    %490 = vector.load %arg8[%c0_199, %c32_200] : memref<8x64xf32, #tpu.memory_space<vmem>>, vector<8x32xf32>
    tpu.vector_store %arg8[%c0_199, %c32_200], %489 {strides = array<i32>} : memref<8x64xf32, #tpu.memory_space<vmem>>, vector<8x32xf32>,
    %491 = vector.extract_strided_slice %418 {offsets = [0, 0], sizes = [8, 32], strides = [1, 1]} : vector<8x64xf32> to vector<8x32xf32>
    %492 = arith.select %470, %456, %491 : vector<8x32xi1>, vector<8x32xf32>
    %c0_201 = arith.constant 0 : index
    %c0_202 = arith.constant 0 : index
    %493 = vector.load %arg9[%c0_201, %c0_202] : memref<8x64xf32, #tpu.memory_space<vmem>>, vector<8x32xf32>
    tpu.vector_store %arg9[%c0_201, %c0_202], %492 {strides = array<i32>} : memref<8x64xf32, #tpu.memory_space<vmem>>, vector<8x32xf32>,
    %494 = vector.extract_strided_slice %418 {offsets = [0, 32], sizes = [8, 32], strides = [1, 1]} : vector<8x64xf32> to vector<8x32xf32>
    %495 = arith.select %472, %462, %494 : vector<8x32xi1>, vector<8x32xf32>
    %c0_203 = arith.constant 0 : index
    %c32_204 = arith.constant 32 : index
    %496 = vector.load %arg9[%c0_203, %c32_204] : memref<8x64xf32, #tpu.memory_space<vmem>>, vector<8x32xf32>
    tpu.vector_store %arg9[%c0_203, %c32_204], %495 {strides = array<i32>} : memref<8x64xf32, #tpu.memory_space<vmem>>, vector<8x32xf32>,
    %c0_205 = arith.constant 0 : index
    %c0_206 = arith.constant 0 : index
    %497 = vector.load %arg8[%c0_205, %c0_206] : memref<8x64xf32, #tpu.memory_space<vmem>>, vector<8x64xf32>
    %c0_207 = arith.constant 0 : index
    %c0_208 = arith.constant 0 : index
    %498 = vector.load %arg9[%c0_207, %c0_208] : memref<8x64xf32, #tpu.memory_space<vmem>>, vector<8x64xf32>
    %499 = arith.truncf %497 : vector<8x64xf32> to vector<8x64xbf16>
    %cst_209 = arith.constant dense<0.000000e+00> : vector<8x256xf32>
    %500 = tpu.matmul %499, %16, %cst_209 {dimension_numbers = #tpu.dot_dimension_numbers<[1], [0], [0], [1], [0, 0, 1, 1], [], []>} : vector<8x64xbf16>, vector<64x256xbf16>, vector<8x256xf32> -> vector<8x256xf32>
    %c6_210 = arith.constant 6 : index
    %c0_211 = arith.constant 0 : index
    %c0_212 = arith.constant 0 : index
    %501 = vector.load %arg7[%c6_210, %c0_211, %c0_212] : memref<12x8x256xf32, #tpu.memory_space<vmem>>, vector<1x8x256xf32>
    %502 = vector.shape_cast %501 : vector<1x8x256xf32> to vector<8x256xf32>
    %c5_213 = arith.constant 5 : index
    %c0_214 = arith.constant 0 : index
    %c0_215 = arith.constant 0 : index
    %503 = vector.load %arg7[%c5_213, %c0_214, %c0_215] : memref<12x8x256xf32, #tpu.memory_space<vmem>>, vector<1x8x256xf32>
    %504 = vector.shape_cast %503 : vector<1x8x256xf32> to vector<8x256xf32>
    %505 = vector.extract_strided_slice %502 {offsets = [0, 0], sizes = [8, 128], strides = [1, 1]} : vector<8x256xf32> to vector<8x128xf32>
    %506 = vector.extract_strided_slice %500 {offsets = [0, 0], sizes = [8, 128], strides = [1, 1]} : vector<8x256xf32> to vector<8x128xf32>
    %507 = arith.addf %505, %506 : vector<8x128xf32>
    %508 = vector.extract_strided_slice %504 {offsets = [0, 128], sizes = [8, 128], strides = [1, 1]} : vector<8x256xf32> to vector<8x128xf32>
    %509 = vector.extract_strided_slice %500 {offsets = [0, 128], sizes = [8, 128], strides = [1, 1]} : vector<8x256xf32> to vector<8x128xf32>
    %510 = arith.addf %508, %509 : vector<8x128xf32>
    %511 = vector.extract_strided_slice %507 {offsets = [0, 0], sizes = [8, 96], strides = [1, 1]} : vector<8x128xf32> to vector<8x96xf32>
    %cst_216 = arith.constant 5.000000e-01 : f32
    %512 = vector.broadcast %cst_216 : f32 to vector<8x96xf32>
    %513 = arith.mulf %512, %511 : vector<8x96xf32>
    %514 = math.tanh %513 : vector<8x96xf32>
    %cst_217 = arith.constant 1.000000e+00 : f32
    %515 = vector.broadcast %cst_217 : f32 to vector<8x96xf32>
    %516 = arith.addf %514, %515 : vector<8x96xf32>
    %cst_218 = arith.constant 5.000000e-01 : f32
    %517 = vector.broadcast %cst_218 : f32 to vector<8x96xf32>
    %518 = arith.mulf %517, %516 : vector<8x96xf32>
    %519 = vector.extract_strided_slice %510 {offsets = [0, 0], sizes = [8, 96], strides = [1, 1]} : vector<8x128xf32> to vector<8x96xf32>
    %cst_219 = arith.constant 5.000000e-01 : f32
    %520 = vector.broadcast %cst_219 : f32 to vector<8x96xf32>
    %521 = arith.mulf %520, %519 : vector<8x96xf32>
    %522 = math.tanh %521 : vector<8x96xf32>
    %cst_220 = arith.constant 1.000000e+00 : f32
    %523 = vector.broadcast %cst_220 : f32 to vector<8x96xf32>
    %524 = arith.addf %522, %523 : vector<8x96xf32>
    %cst_221 = arith.constant 5.000000e-01 : f32
    %525 = vector.broadcast %cst_221 : f32 to vector<8x96xf32>
    %526 = arith.mulf %525, %524 : vector<8x96xf32>
    %527 = vector.extract_strided_slice %507 {offsets = [0, 96], sizes = [8, 32], strides = [1, 1]} : vector<8x128xf32> to vector<8x32xf32>
    %528 = math.tanh %527 : vector<8x32xf32>
    %529 = vector.extract_strided_slice %510 {offsets = [0, 96], sizes = [8, 32], strides = [1, 1]} : vector<8x128xf32> to vector<8x32xf32>
    %530 = math.tanh %529 : vector<8x32xf32>
    %531 = vector.extract_strided_slice %518 {offsets = [0, 32], sizes = [8, 32], strides = [1, 1]} : vector<8x96xf32> to vector<8x32xf32>
    %532 = vector.extract_strided_slice %498 {offsets = [0, 0], sizes = [8, 32], strides = [1, 1]} : vector<8x64xf32> to vector<8x32xf32>
    %533 = arith.mulf %531, %532 : vector<8x32xf32>
    %534 = vector.extract_strided_slice %518 {offsets = [0, 0], sizes = [8, 32], strides = [1, 1]} : vector<8x96xf32> to vector<8x32xf32>
    %535 = arith.mulf %534, %528 : vector<8x32xf32>
    %536 = arith.addf %533, %535 : vector<8x32xf32>
    %537 = vector.extract_strided_slice %526 {offsets = [0, 32], sizes = [8, 32], strides = [1, 1]} : vector<8x96xf32> to vector<8x32xf32>
    %538 = vector.extract_strided_slice %498 {offsets = [0, 32], sizes = [8, 32], strides = [1, 1]} : vector<8x64xf32> to vector<8x32xf32>
    %539 = arith.mulf %537, %538 : vector<8x32xf32>
    %540 = vector.extract_strided_slice %526 {offsets = [0, 0], sizes = [8, 32], strides = [1, 1]} : vector<8x96xf32> to vector<8x32xf32>
    %541 = arith.mulf %540, %530 : vector<8x32xf32>
    %542 = arith.addf %539, %541 : vector<8x32xf32>
    %543 = vector.extract_strided_slice %518 {offsets = [0, 64], sizes = [8, 32], strides = [1, 1]} : vector<8x96xf32> to vector<8x32xf32>
    %544 = math.tanh %536 : vector<8x32xf32>
    %545 = arith.mulf %543, %544 : vector<8x32xf32>
    %546 = vector.extract_strided_slice %526 {offsets = [0, 64], sizes = [8, 32], strides = [1, 1]} : vector<8x96xf32> to vector<8x32xf32>
    %547 = math.tanh %542 : vector<8x32xf32>
    %548 = arith.mulf %546, %547 : vector<8x32xf32>
    %c6_i32_222 = arith.constant 6 : i32
    %549 = vector.broadcast %c6_i32_222 : i32 to vector<8x32xi32>
    %550 = arith.cmpi sgt, %15, %549 : vector<8x32xi32>
    %c5_i32_223 = arith.constant 5 : i32
    %551 = vector.broadcast %c5_i32_223 : i32 to vector<8x32xi32>
    %552 = arith.cmpi sgt, %15, %551 : vector<8x32xi32>
    %cst_224 = arith.constant 0.000000e+00 : f32
    %553 = vector.broadcast %cst_224 : f32 to vector<8x32xf32>
    %554 = arith.select %550, %545, %553 : vector<8x32xi1>, vector<8x32xf32>
    %555 = arith.truncf %554 : vector<8x32xf32> to vector<8x32xbf16>
    %c6_225 = arith.constant 6 : index
    %c0_226 = arith.constant 0 : index
    %c0_227 = arith.constant 0 : index
    %556 = vector.load %arg6[%c6_225, %c0_226, %c0_227] : memref<12x8x64xbf16, #tpu.memory_space<vmem>>, vector<1x8x32xbf16>
    %557 = vector.shape_cast %556 : vector<1x8x32xbf16> to vector<8x32xbf16>
    %558 = vector.shape_cast %555 : vector<8x32xbf16> to vector<1x8x32xbf16>
    tpu.vector_store %arg6[%c6_225, %c0_226, %c0_227], %558 {strides = array<i32>} : memref<12x8x64xbf16, #tpu.memory_space<vmem>>, vector<1x8x32xbf16>,
    %cst_228 = arith.constant 0.000000e+00 : f32
    %559 = vector.broadcast %cst_228 : f32 to vector<8x32xf32>
    %560 = arith.select %552, %548, %559 : vector<8x32xi1>, vector<8x32xf32>
    %561 = arith.truncf %560 : vector<8x32xf32> to vector<8x32xbf16>
    %c5_229 = arith.constant 5 : index
    %c0_230 = arith.constant 0 : index
    %c32_231 = arith.constant 32 : index
    %562 = vector.load %arg6[%c5_229, %c0_230, %c32_231] : memref<12x8x64xbf16, #tpu.memory_space<vmem>>, vector<1x8x32xbf16>
    %563 = vector.shape_cast %562 : vector<1x8x32xbf16> to vector<8x32xbf16>
    %564 = vector.shape_cast %561 : vector<8x32xbf16> to vector<1x8x32xbf16>
    tpu.vector_store %arg6[%c5_229, %c0_230, %c32_231], %564 {strides = array<i32>} : memref<12x8x64xbf16, #tpu.memory_space<vmem>>, vector<1x8x32xbf16>,
    %565 = vector.extract_strided_slice %497 {offsets = [0, 0], sizes = [8, 32], strides = [1, 1]} : vector<8x64xf32> to vector<8x32xf32>
    %566 = arith.select %550, %545, %565 : vector<8x32xi1>, vector<8x32xf32>
    %c0_232 = arith.constant 0 : index
    %c0_233 = arith.constant 0 : index
    %567 = vector.load %arg8[%c0_232, %c0_233] : memref<8x64xf32, #tpu.memory_space<vmem>>, vector<8x32xf32>
    tpu.vector_store %arg8[%c0_232, %c0_233], %566 {strides = array<i32>} : memref<8x64xf32, #tpu.memory_space<vmem>>, vector<8x32xf32>,
    %568 = vector.extract_strided_slice %497 {offsets = [0, 32], sizes = [8, 32], strides = [1, 1]} : vector<8x64xf32> to vector<8x32xf32>
    %569 = arith.select %552, %548, %568 : vector<8x32xi1>, vector<8x32xf32>
    %c0_234 = arith.constant 0 : index
    %c32_235 = arith.constant 32 : index
    %570 = vector.load %arg8[%c0_234, %c32_235] : memref<8x64xf32, #tpu.memory_space<vmem>>, vector<8x32xf32>
    tpu.vector_store %arg8[%c0_234, %c32_235], %569 {strides = array<i32>} : memref<8x64xf32, #tpu.memory_space<vmem>>, vector<8x32xf32>,
    %571 = vector.extract_strided_slice %498 {offsets = [0, 0], sizes = [8, 32], strides = [1, 1]} : vector<8x64xf32> to vector<8x32xf32>
    %572 = arith.select %550, %536, %571 : vector<8x32xi1>, vector<8x32xf32>
    %c0_236 = arith.constant 0 : index
    %c0_237 = arith.constant 0 : index
    %573 = vector.load %arg9[%c0_236, %c0_237] : memref<8x64xf32, #tpu.memory_space<vmem>>, vector<8x32xf32>
    tpu.vector_store %arg9[%c0_236, %c0_237], %572 {strides = array<i32>} : memref<8x64xf32, #tpu.memory_space<vmem>>, vector<8x32xf32>,
    %574 = vector.extract_strided_slice %498 {offsets = [0, 32], sizes = [8, 32], strides = [1, 1]} : vector<8x64xf32> to vector<8x32xf32>
    %575 = arith.select %552, %542, %574 : vector<8x32xi1>, vector<8x32xf32>
    %c0_238 = arith.constant 0 : index
    %c32_239 = arith.constant 32 : index
    %576 = vector.load %arg9[%c0_238, %c32_239] : memref<8x64xf32, #tpu.memory_space<vmem>>, vector<8x32xf32>
    tpu.vector_store %arg9[%c0_238, %c32_239], %575 {strides = array<i32>} : memref<8x64xf32, #tpu.memory_space<vmem>>, vector<8x32xf32>,
    %c0_240 = arith.constant 0 : index
    %c0_241 = arith.constant 0 : index
    %577 = vector.load %arg8[%c0_240, %c0_241] : memref<8x64xf32, #tpu.memory_space<vmem>>, vector<8x64xf32>
    %c0_242 = arith.constant 0 : index
    %c0_243 = arith.constant 0 : index
    %578 = vector.load %arg9[%c0_242, %c0_243] : memref<8x64xf32, #tpu.memory_space<vmem>>, vector<8x64xf32>
    %579 = arith.truncf %577 : vector<8x64xf32> to vector<8x64xbf16>
    %cst_244 = arith.constant dense<0.000000e+00> : vector<8x256xf32>
    %580 = tpu.matmul %579, %16, %cst_244 {dimension_numbers = #tpu.dot_dimension_numbers<[1], [0], [0], [1], [0, 0, 1, 1], [], []>} : vector<8x64xbf16>, vector<64x256xbf16>, vector<8x256xf32> -> vector<8x256xf32>
    %c7_245 = arith.constant 7 : index
    %c0_246 = arith.constant 0 : index
    %c0_247 = arith.constant 0 : index
    %581 = vector.load %arg7[%c7_245, %c0_246, %c0_247] : memref<12x8x256xf32, #tpu.memory_space<vmem>>, vector<1x8x256xf32>
    %582 = vector.shape_cast %581 : vector<1x8x256xf32> to vector<8x256xf32>
    %c4_248 = arith.constant 4 : index
    %c0_249 = arith.constant 0 : index
    %c0_250 = arith.constant 0 : index
    %583 = vector.load %arg7[%c4_248, %c0_249, %c0_250] : memref<12x8x256xf32, #tpu.memory_space<vmem>>, vector<1x8x256xf32>
    %584 = vector.shape_cast %583 : vector<1x8x256xf32> to vector<8x256xf32>
    %585 = vector.extract_strided_slice %582 {offsets = [0, 0], sizes = [8, 128], strides = [1, 1]} : vector<8x256xf32> to vector<8x128xf32>
    %586 = vector.extract_strided_slice %580 {offsets = [0, 0], sizes = [8, 128], strides = [1, 1]} : vector<8x256xf32> to vector<8x128xf32>
    %587 = arith.addf %585, %586 : vector<8x128xf32>
    %588 = vector.extract_strided_slice %584 {offsets = [0, 128], sizes = [8, 128], strides = [1, 1]} : vector<8x256xf32> to vector<8x128xf32>
    %589 = vector.extract_strided_slice %580 {offsets = [0, 128], sizes = [8, 128], strides = [1, 1]} : vector<8x256xf32> to vector<8x128xf32>
    %590 = arith.addf %588, %589 : vector<8x128xf32>
    %591 = vector.extract_strided_slice %587 {offsets = [0, 0], sizes = [8, 96], strides = [1, 1]} : vector<8x128xf32> to vector<8x96xf32>
    %cst_251 = arith.constant 5.000000e-01 : f32
    %592 = vector.broadcast %cst_251 : f32 to vector<8x96xf32>
    %593 = arith.mulf %592, %591 : vector<8x96xf32>
    %594 = math.tanh %593 : vector<8x96xf32>
    %cst_252 = arith.constant 1.000000e+00 : f32
    %595 = vector.broadcast %cst_252 : f32 to vector<8x96xf32>
    %596 = arith.addf %594, %595 : vector<8x96xf32>
    %cst_253 = arith.constant 5.000000e-01 : f32
    %597 = vector.broadcast %cst_253 : f32 to vector<8x96xf32>
    %598 = arith.mulf %597, %596 : vector<8x96xf32>
    %599 = vector.extract_strided_slice %590 {offsets = [0, 0], sizes = [8, 96], strides = [1, 1]} : vector<8x128xf32> to vector<8x96xf32>
    %cst_254 = arith.constant 5.000000e-01 : f32
    %600 = vector.broadcast %cst_254 : f32 to vector<8x96xf32>
    %601 = arith.mulf %600, %599 : vector<8x96xf32>
    %602 = math.tanh %601 : vector<8x96xf32>
    %cst_255 = arith.constant 1.000000e+00 : f32
    %603 = vector.broadcast %cst_255 : f32 to vector<8x96xf32>
    %604 = arith.addf %602, %603 : vector<8x96xf32>
    %cst_256 = arith.constant 5.000000e-01 : f32
    %605 = vector.broadcast %cst_256 : f32 to vector<8x96xf32>
    %606 = arith.mulf %605, %604 : vector<8x96xf32>
    %607 = vector.extract_strided_slice %587 {offsets = [0, 96], sizes = [8, 32], strides = [1, 1]} : vector<8x128xf32> to vector<8x32xf32>
    %608 = math.tanh %607 : vector<8x32xf32>
    %609 = vector.extract_strided_slice %590 {offsets = [0, 96], sizes = [8, 32], strides = [1, 1]} : vector<8x128xf32> to vector<8x32xf32>
    %610 = math.tanh %609 : vector<8x32xf32>
    %611 = vector.extract_strided_slice %598 {offsets = [0, 32], sizes = [8, 32], strides = [1, 1]} : vector<8x96xf32> to vector<8x32xf32>
    %612 = vector.extract_strided_slice %578 {offsets = [0, 0], sizes = [8, 32], strides = [1, 1]} : vector<8x64xf32> to vector<8x32xf32>
    %613 = arith.mulf %611, %612 : vector<8x32xf32>
    %614 = vector.extract_strided_slice %598 {offsets = [0, 0], sizes = [8, 32], strides = [1, 1]} : vector<8x96xf32> to vector<8x32xf32>
    %615 = arith.mulf %614, %608 : vector<8x32xf32>
    %616 = arith.addf %613, %615 : vector<8x32xf32>
    %617 = vector.extract_strided_slice %606 {offsets = [0, 32], sizes = [8, 32], strides = [1, 1]} : vector<8x96xf32> to vector<8x32xf32>
    %618 = vector.extract_strided_slice %578 {offsets = [0, 32], sizes = [8, 32], strides = [1, 1]} : vector<8x64xf32> to vector<8x32xf32>
    %619 = arith.mulf %617, %618 : vector<8x32xf32>
    %620 = vector.extract_strided_slice %606 {offsets = [0, 0], sizes = [8, 32], strides = [1, 1]} : vector<8x96xf32> to vector<8x32xf32>
    %621 = arith.mulf %620, %610 : vector<8x32xf32>
    %622 = arith.addf %619, %621 : vector<8x32xf32>
    %623 = vector.extract_strided_slice %598 {offsets = [0, 64], sizes = [8, 32], strides = [1, 1]} : vector<8x96xf32> to vector<8x32xf32>
    %624 = math.tanh %616 : vector<8x32xf32>
    %625 = arith.mulf %623, %624 : vector<8x32xf32>
    %626 = vector.extract_strided_slice %606 {offsets = [0, 64], sizes = [8, 32], strides = [1, 1]} : vector<8x96xf32> to vector<8x32xf32>
    %627 = math.tanh %622 : vector<8x32xf32>
    %628 = arith.mulf %626, %627 : vector<8x32xf32>
    %c7_i32_257 = arith.constant 7 : i32
    %629 = vector.broadcast %c7_i32_257 : i32 to vector<8x32xi32>
    %630 = arith.cmpi sgt, %15, %629 : vector<8x32xi32>
    %c4_i32_258 = arith.constant 4 : i32
    %631 = vector.broadcast %c4_i32_258 : i32 to vector<8x32xi32>
    %632 = arith.cmpi sgt, %15, %631 : vector<8x32xi32>
    %cst_259 = arith.constant 0.000000e+00 : f32
    %633 = vector.broadcast %cst_259 : f32 to vector<8x32xf32>
    %634 = arith.select %630, %625, %633 : vector<8x32xi1>, vector<8x32xf32>
    %635 = arith.truncf %634 : vector<8x32xf32> to vector<8x32xbf16>
    %c7_260 = arith.constant 7 : index
    %c0_261 = arith.constant 0 : index
    %c0_262 = arith.constant 0 : index
    %636 = vector.load %arg6[%c7_260, %c0_261, %c0_262] : memref<12x8x64xbf16, #tpu.memory_space<vmem>>, vector<1x8x32xbf16>
    %637 = vector.shape_cast %636 : vector<1x8x32xbf16> to vector<8x32xbf16>
    %638 = vector.shape_cast %635 : vector<8x32xbf16> to vector<1x8x32xbf16>
    tpu.vector_store %arg6[%c7_260, %c0_261, %c0_262], %638 {strides = array<i32>} : memref<12x8x64xbf16, #tpu.memory_space<vmem>>, vector<1x8x32xbf16>,
    %cst_263 = arith.constant 0.000000e+00 : f32
    %639 = vector.broadcast %cst_263 : f32 to vector<8x32xf32>
    %640 = arith.select %632, %628, %639 : vector<8x32xi1>, vector<8x32xf32>
    %641 = arith.truncf %640 : vector<8x32xf32> to vector<8x32xbf16>
    %c4_264 = arith.constant 4 : index
    %c0_265 = arith.constant 0 : index
    %c32_266 = arith.constant 32 : index
    %642 = vector.load %arg6[%c4_264, %c0_265, %c32_266] : memref<12x8x64xbf16, #tpu.memory_space<vmem>>, vector<1x8x32xbf16>
    %643 = vector.shape_cast %642 : vector<1x8x32xbf16> to vector<8x32xbf16>
    %644 = vector.shape_cast %641 : vector<8x32xbf16> to vector<1x8x32xbf16>
    tpu.vector_store %arg6[%c4_264, %c0_265, %c32_266], %644 {strides = array<i32>} : memref<12x8x64xbf16, #tpu.memory_space<vmem>>, vector<1x8x32xbf16>,
    %645 = vector.extract_strided_slice %577 {offsets = [0, 0], sizes = [8, 32], strides = [1, 1]} : vector<8x64xf32> to vector<8x32xf32>
    %646 = arith.select %630, %625, %645 : vector<8x32xi1>, vector<8x32xf32>
    %c0_267 = arith.constant 0 : index
    %c0_268 = arith.constant 0 : index
    %647 = vector.load %arg8[%c0_267, %c0_268] : memref<8x64xf32, #tpu.memory_space<vmem>>, vector<8x32xf32>
    tpu.vector_store %arg8[%c0_267, %c0_268], %646 {strides = array<i32>} : memref<8x64xf32, #tpu.memory_space<vmem>>, vector<8x32xf32>,
    %648 = vector.extract_strided_slice %577 {offsets = [0, 32], sizes = [8, 32], strides = [1, 1]} : vector<8x64xf32> to vector<8x32xf32>
    %649 = arith.select %632, %628, %648 : vector<8x32xi1>, vector<8x32xf32>
    %c0_269 = arith.constant 0 : index
    %c32_270 = arith.constant 32 : index
    %650 = vector.load %arg8[%c0_269, %c32_270] : memref<8x64xf32, #tpu.memory_space<vmem>>, vector<8x32xf32>
    tpu.vector_store %arg8[%c0_269, %c32_270], %649 {strides = array<i32>} : memref<8x64xf32, #tpu.memory_space<vmem>>, vector<8x32xf32>,
    %651 = vector.extract_strided_slice %578 {offsets = [0, 0], sizes = [8, 32], strides = [1, 1]} : vector<8x64xf32> to vector<8x32xf32>
    %652 = arith.select %630, %616, %651 : vector<8x32xi1>, vector<8x32xf32>
    %c0_271 = arith.constant 0 : index
    %c0_272 = arith.constant 0 : index
    %653 = vector.load %arg9[%c0_271, %c0_272] : memref<8x64xf32, #tpu.memory_space<vmem>>, vector<8x32xf32>
    tpu.vector_store %arg9[%c0_271, %c0_272], %652 {strides = array<i32>} : memref<8x64xf32, #tpu.memory_space<vmem>>, vector<8x32xf32>,
    %654 = vector.extract_strided_slice %578 {offsets = [0, 32], sizes = [8, 32], strides = [1, 1]} : vector<8x64xf32> to vector<8x32xf32>
    %655 = arith.select %632, %622, %654 : vector<8x32xi1>, vector<8x32xf32>
    %c0_273 = arith.constant 0 : index
    %c32_274 = arith.constant 32 : index
    %656 = vector.load %arg9[%c0_273, %c32_274] : memref<8x64xf32, #tpu.memory_space<vmem>>, vector<8x32xf32>
    tpu.vector_store %arg9[%c0_273, %c32_274], %655 {strides = array<i32>} : memref<8x64xf32, #tpu.memory_space<vmem>>, vector<8x32xf32>,
    %c0_275 = arith.constant 0 : index
    %c0_276 = arith.constant 0 : index
    %657 = vector.load %arg8[%c0_275, %c0_276] : memref<8x64xf32, #tpu.memory_space<vmem>>, vector<8x64xf32>
    %c0_277 = arith.constant 0 : index
    %c0_278 = arith.constant 0 : index
    %658 = vector.load %arg9[%c0_277, %c0_278] : memref<8x64xf32, #tpu.memory_space<vmem>>, vector<8x64xf32>
    %659 = arith.truncf %657 : vector<8x64xf32> to vector<8x64xbf16>
    %cst_279 = arith.constant dense<0.000000e+00> : vector<8x256xf32>
    %660 = tpu.matmul %659, %16, %cst_279 {dimension_numbers = #tpu.dot_dimension_numbers<[1], [0], [0], [1], [0, 0, 1, 1], [], []>} : vector<8x64xbf16>, vector<64x256xbf16>, vector<8x256xf32> -> vector<8x256xf32>
    %c8_280 = arith.constant 8 : index
    %c0_281 = arith.constant 0 : index
    %c0_282 = arith.constant 0 : index
    %661 = vector.load %arg7[%c8_280, %c0_281, %c0_282] : memref<12x8x256xf32, #tpu.memory_space<vmem>>, vector<1x8x256xf32>
    %662 = vector.shape_cast %661 : vector<1x8x256xf32> to vector<8x256xf32>
    %c3_283 = arith.constant 3 : index
    %c0_284 = arith.constant 0 : index
    %c0_285 = arith.constant 0 : index
    %663 = vector.load %arg7[%c3_283, %c0_284, %c0_285] : memref<12x8x256xf32, #tpu.memory_space<vmem>>, vector<1x8x256xf32>
    %664 = vector.shape_cast %663 : vector<1x8x256xf32> to vector<8x256xf32>
    %665 = vector.extract_strided_slice %662 {offsets = [0, 0], sizes = [8, 128], strides = [1, 1]} : vector<8x256xf32> to vector<8x128xf32>
    %666 = vector.extract_strided_slice %660 {offsets = [0, 0], sizes = [8, 128], strides = [1, 1]} : vector<8x256xf32> to vector<8x128xf32>
    %667 = arith.addf %665, %666 : vector<8x128xf32>
    %668 = vector.extract_strided_slice %664 {offsets = [0, 128], sizes = [8, 128], strides = [1, 1]} : vector<8x256xf32> to vector<8x128xf32>
    %669 = vector.extract_strided_slice %660 {offsets = [0, 128], sizes = [8, 128], strides = [1, 1]} : vector<8x256xf32> to vector<8x128xf32>
    %670 = arith.addf %668, %669 : vector<8x128xf32>
    %671 = vector.extract_strided_slice %667 {offsets = [0, 0], sizes = [8, 96], strides = [1, 1]} : vector<8x128xf32> to vector<8x96xf32>
    %cst_286 = arith.constant 5.000000e-01 : f32
    %672 = vector.broadcast %cst_286 : f32 to vector<8x96xf32>
    %673 = arith.mulf %672, %671 : vector<8x96xf32>
    %674 = math.tanh %673 : vector<8x96xf32>
    %cst_287 = arith.constant 1.000000e+00 : f32
    %675 = vector.broadcast %cst_287 : f32 to vector<8x96xf32>
    %676 = arith.addf %674, %675 : vector<8x96xf32>
    %cst_288 = arith.constant 5.000000e-01 : f32
    %677 = vector.broadcast %cst_288 : f32 to vector<8x96xf32>
    %678 = arith.mulf %677, %676 : vector<8x96xf32>
    %679 = vector.extract_strided_slice %670 {offsets = [0, 0], sizes = [8, 96], strides = [1, 1]} : vector<8x128xf32> to vector<8x96xf32>
    %cst_289 = arith.constant 5.000000e-01 : f32
    %680 = vector.broadcast %cst_289 : f32 to vector<8x96xf32>
    %681 = arith.mulf %680, %679 : vector<8x96xf32>
    %682 = math.tanh %681 : vector<8x96xf32>
    %cst_290 = arith.constant 1.000000e+00 : f32
    %683 = vector.broadcast %cst_290 : f32 to vector<8x96xf32>
    %684 = arith.addf %682, %683 : vector<8x96xf32>
    %cst_291 = arith.constant 5.000000e-01 : f32
    %685 = vector.broadcast %cst_291 : f32 to vector<8x96xf32>
    %686 = arith.mulf %685, %684 : vector<8x96xf32>
    %687 = vector.extract_strided_slice %667 {offsets = [0, 96], sizes = [8, 32], strides = [1, 1]} : vector<8x128xf32> to vector<8x32xf32>
    %688 = math.tanh %687 : vector<8x32xf32>
    %689 = vector.extract_strided_slice %670 {offsets = [0, 96], sizes = [8, 32], strides = [1, 1]} : vector<8x128xf32> to vector<8x32xf32>
    %690 = math.tanh %689 : vector<8x32xf32>
    %691 = vector.extract_strided_slice %678 {offsets = [0, 32], sizes = [8, 32], strides = [1, 1]} : vector<8x96xf32> to vector<8x32xf32>
    %692 = vector.extract_strided_slice %658 {offsets = [0, 0], sizes = [8, 32], strides = [1, 1]} : vector<8x64xf32> to vector<8x32xf32>
    %693 = arith.mulf %691, %692 : vector<8x32xf32>
    %694 = vector.extract_strided_slice %678 {offsets = [0, 0], sizes = [8, 32], strides = [1, 1]} : vector<8x96xf32> to vector<8x32xf32>
    %695 = arith.mulf %694, %688 : vector<8x32xf32>
    %696 = arith.addf %693, %695 : vector<8x32xf32>
    %697 = vector.extract_strided_slice %686 {offsets = [0, 32], sizes = [8, 32], strides = [1, 1]} : vector<8x96xf32> to vector<8x32xf32>
    %698 = vector.extract_strided_slice %658 {offsets = [0, 32], sizes = [8, 32], strides = [1, 1]} : vector<8x64xf32> to vector<8x32xf32>
    %699 = arith.mulf %697, %698 : vector<8x32xf32>
    %700 = vector.extract_strided_slice %686 {offsets = [0, 0], sizes = [8, 32], strides = [1, 1]} : vector<8x96xf32> to vector<8x32xf32>
    %701 = arith.mulf %700, %690 : vector<8x32xf32>
    %702 = arith.addf %699, %701 : vector<8x32xf32>
    %703 = vector.extract_strided_slice %678 {offsets = [0, 64], sizes = [8, 32], strides = [1, 1]} : vector<8x96xf32> to vector<8x32xf32>
    %704 = math.tanh %696 : vector<8x32xf32>
    %705 = arith.mulf %703, %704 : vector<8x32xf32>
    %706 = vector.extract_strided_slice %686 {offsets = [0, 64], sizes = [8, 32], strides = [1, 1]} : vector<8x96xf32> to vector<8x32xf32>
    %707 = math.tanh %702 : vector<8x32xf32>
    %708 = arith.mulf %706, %707 : vector<8x32xf32>
    %c8_i32_292 = arith.constant 8 : i32
    %709 = vector.broadcast %c8_i32_292 : i32 to vector<8x32xi32>
    %710 = arith.cmpi sgt, %15, %709 : vector<8x32xi32>
    %c3_i32_293 = arith.constant 3 : i32
    %711 = vector.broadcast %c3_i32_293 : i32 to vector<8x32xi32>
    %712 = arith.cmpi sgt, %15, %711 : vector<8x32xi32>
    %cst_294 = arith.constant 0.000000e+00 : f32
    %713 = vector.broadcast %cst_294 : f32 to vector<8x32xf32>
    %714 = arith.select %710, %705, %713 : vector<8x32xi1>, vector<8x32xf32>
    %715 = arith.truncf %714 : vector<8x32xf32> to vector<8x32xbf16>
    %c8_295 = arith.constant 8 : index
    %c0_296 = arith.constant 0 : index
    %c0_297 = arith.constant 0 : index
    %716 = vector.load %arg6[%c8_295, %c0_296, %c0_297] : memref<12x8x64xbf16, #tpu.memory_space<vmem>>, vector<1x8x32xbf16>
    %717 = vector.shape_cast %716 : vector<1x8x32xbf16> to vector<8x32xbf16>
    %718 = vector.shape_cast %715 : vector<8x32xbf16> to vector<1x8x32xbf16>
    tpu.vector_store %arg6[%c8_295, %c0_296, %c0_297], %718 {strides = array<i32>} : memref<12x8x64xbf16, #tpu.memory_space<vmem>>, vector<1x8x32xbf16>,
    %cst_298 = arith.constant 0.000000e+00 : f32
    %719 = vector.broadcast %cst_298 : f32 to vector<8x32xf32>
    %720 = arith.select %712, %708, %719 : vector<8x32xi1>, vector<8x32xf32>
    %721 = arith.truncf %720 : vector<8x32xf32> to vector<8x32xbf16>
    %c3_299 = arith.constant 3 : index
    %c0_300 = arith.constant 0 : index
    %c32_301 = arith.constant 32 : index
    %722 = vector.load %arg6[%c3_299, %c0_300, %c32_301] : memref<12x8x64xbf16, #tpu.memory_space<vmem>>, vector<1x8x32xbf16>
    %723 = vector.shape_cast %722 : vector<1x8x32xbf16> to vector<8x32xbf16>
    %724 = vector.shape_cast %721 : vector<8x32xbf16> to vector<1x8x32xbf16>
    tpu.vector_store %arg6[%c3_299, %c0_300, %c32_301], %724 {strides = array<i32>} : memref<12x8x64xbf16, #tpu.memory_space<vmem>>, vector<1x8x32xbf16>,
    %725 = vector.extract_strided_slice %657 {offsets = [0, 0], sizes = [8, 32], strides = [1, 1]} : vector<8x64xf32> to vector<8x32xf32>
    %726 = arith.select %710, %705, %725 : vector<8x32xi1>, vector<8x32xf32>
    %c0_302 = arith.constant 0 : index
    %c0_303 = arith.constant 0 : index
    %727 = vector.load %arg8[%c0_302, %c0_303] : memref<8x64xf32, #tpu.memory_space<vmem>>, vector<8x32xf32>
    tpu.vector_store %arg8[%c0_302, %c0_303], %726 {strides = array<i32>} : memref<8x64xf32, #tpu.memory_space<vmem>>, vector<8x32xf32>,
    %728 = vector.extract_strided_slice %657 {offsets = [0, 32], sizes = [8, 32], strides = [1, 1]} : vector<8x64xf32> to vector<8x32xf32>
    %729 = arith.select %712, %708, %728 : vector<8x32xi1>, vector<8x32xf32>
    %c0_304 = arith.constant 0 : index
    %c32_305 = arith.constant 32 : index
    %730 = vector.load %arg8[%c0_304, %c32_305] : memref<8x64xf32, #tpu.memory_space<vmem>>, vector<8x32xf32>
    tpu.vector_store %arg8[%c0_304, %c32_305], %729 {strides = array<i32>} : memref<8x64xf32, #tpu.memory_space<vmem>>, vector<8x32xf32>,
    %731 = vector.extract_strided_slice %658 {offsets = [0, 0], sizes = [8, 32], strides = [1, 1]} : vector<8x64xf32> to vector<8x32xf32>
    %732 = arith.select %710, %696, %731 : vector<8x32xi1>, vector<8x32xf32>
    %c0_306 = arith.constant 0 : index
    %c0_307 = arith.constant 0 : index
    %733 = vector.load %arg9[%c0_306, %c0_307] : memref<8x64xf32, #tpu.memory_space<vmem>>, vector<8x32xf32>
    tpu.vector_store %arg9[%c0_306, %c0_307], %732 {strides = array<i32>} : memref<8x64xf32, #tpu.memory_space<vmem>>, vector<8x32xf32>,
    %734 = vector.extract_strided_slice %658 {offsets = [0, 32], sizes = [8, 32], strides = [1, 1]} : vector<8x64xf32> to vector<8x32xf32>
    %735 = arith.select %712, %702, %734 : vector<8x32xi1>, vector<8x32xf32>
    %c0_308 = arith.constant 0 : index
    %c32_309 = arith.constant 32 : index
    %736 = vector.load %arg9[%c0_308, %c32_309] : memref<8x64xf32, #tpu.memory_space<vmem>>, vector<8x32xf32>
    tpu.vector_store %arg9[%c0_308, %c32_309], %735 {strides = array<i32>} : memref<8x64xf32, #tpu.memory_space<vmem>>, vector<8x32xf32>,
    %c0_310 = arith.constant 0 : index
    %c0_311 = arith.constant 0 : index
    %737 = vector.load %arg8[%c0_310, %c0_311] : memref<8x64xf32, #tpu.memory_space<vmem>>, vector<8x64xf32>
    %c0_312 = arith.constant 0 : index
    %c0_313 = arith.constant 0 : index
    %738 = vector.load %arg9[%c0_312, %c0_313] : memref<8x64xf32, #tpu.memory_space<vmem>>, vector<8x64xf32>
    %739 = arith.truncf %737 : vector<8x64xf32> to vector<8x64xbf16>
    %cst_314 = arith.constant dense<0.000000e+00> : vector<8x256xf32>
    %740 = tpu.matmul %739, %16, %cst_314 {dimension_numbers = #tpu.dot_dimension_numbers<[1], [0], [0], [1], [0, 0, 1, 1], [], []>} : vector<8x64xbf16>, vector<64x256xbf16>, vector<8x256xf32> -> vector<8x256xf32>
    %c9_315 = arith.constant 9 : index
    %c0_316 = arith.constant 0 : index
    %c0_317 = arith.constant 0 : index
    %741 = vector.load %arg7[%c9_315, %c0_316, %c0_317] : memref<12x8x256xf32, #tpu.memory_space<vmem>>, vector<1x8x256xf32>
    %742 = vector.shape_cast %741 : vector<1x8x256xf32> to vector<8x256xf32>
    %c2_318 = arith.constant 2 : index
    %c0_319 = arith.constant 0 : index
    %c0_320 = arith.constant 0 : index
    %743 = vector.load %arg7[%c2_318, %c0_319, %c0_320] : memref<12x8x256xf32, #tpu.memory_space<vmem>>, vector<1x8x256xf32>
    %744 = vector.shape_cast %743 : vector<1x8x256xf32> to vector<8x256xf32>
    %745 = vector.extract_strided_slice %742 {offsets = [0, 0], sizes = [8, 128], strides = [1, 1]} : vector<8x256xf32> to vector<8x128xf32>
    %746 = vector.extract_strided_slice %740 {offsets = [0, 0], sizes = [8, 128], strides = [1, 1]} : vector<8x256xf32> to vector<8x128xf32>
    %747 = arith.addf %745, %746 : vector<8x128xf32>
    %748 = vector.extract_strided_slice %744 {offsets = [0, 128], sizes = [8, 128], strides = [1, 1]} : vector<8x256xf32> to vector<8x128xf32>
    %749 = vector.extract_strided_slice %740 {offsets = [0, 128], sizes = [8, 128], strides = [1, 1]} : vector<8x256xf32> to vector<8x128xf32>
    %750 = arith.addf %748, %749 : vector<8x128xf32>
    %751 = vector.extract_strided_slice %747 {offsets = [0, 0], sizes = [8, 96], strides = [1, 1]} : vector<8x128xf32> to vector<8x96xf32>
    %cst_321 = arith.constant 5.000000e-01 : f32
    %752 = vector.broadcast %cst_321 : f32 to vector<8x96xf32>
    %753 = arith.mulf %752, %751 : vector<8x96xf32>
    %754 = math.tanh %753 : vector<8x96xf32>
    %cst_322 = arith.constant 1.000000e+00 : f32
    %755 = vector.broadcast %cst_322 : f32 to vector<8x96xf32>
    %756 = arith.addf %754, %755 : vector<8x96xf32>
    %cst_323 = arith.constant 5.000000e-01 : f32
    %757 = vector.broadcast %cst_323 : f32 to vector<8x96xf32>
    %758 = arith.mulf %757, %756 : vector<8x96xf32>
    %759 = vector.extract_strided_slice %750 {offsets = [0, 0], sizes = [8, 96], strides = [1, 1]} : vector<8x128xf32> to vector<8x96xf32>
    %cst_324 = arith.constant 5.000000e-01 : f32
    %760 = vector.broadcast %cst_324 : f32 to vector<8x96xf32>
    %761 = arith.mulf %760, %759 : vector<8x96xf32>
    %762 = math.tanh %761 : vector<8x96xf32>
    %cst_325 = arith.constant 1.000000e+00 : f32
    %763 = vector.broadcast %cst_325 : f32 to vector<8x96xf32>
    %764 = arith.addf %762, %763 : vector<8x96xf32>
    %cst_326 = arith.constant 5.000000e-01 : f32
    %765 = vector.broadcast %cst_326 : f32 to vector<8x96xf32>
    %766 = arith.mulf %765, %764 : vector<8x96xf32>
    %767 = vector.extract_strided_slice %747 {offsets = [0, 96], sizes = [8, 32], strides = [1, 1]} : vector<8x128xf32> to vector<8x32xf32>
    %768 = math.tanh %767 : vector<8x32xf32>
    %769 = vector.extract_strided_slice %750 {offsets = [0, 96], sizes = [8, 32], strides = [1, 1]} : vector<8x128xf32> to vector<8x32xf32>
    %770 = math.tanh %769 : vector<8x32xf32>
    %771 = vector.extract_strided_slice %758 {offsets = [0, 32], sizes = [8, 32], strides = [1, 1]} : vector<8x96xf32> to vector<8x32xf32>
    %772 = vector.extract_strided_slice %738 {offsets = [0, 0], sizes = [8, 32], strides = [1, 1]} : vector<8x64xf32> to vector<8x32xf32>
    %773 = arith.mulf %771, %772 : vector<8x32xf32>
    %774 = vector.extract_strided_slice %758 {offsets = [0, 0], sizes = [8, 32], strides = [1, 1]} : vector<8x96xf32> to vector<8x32xf32>
    %775 = arith.mulf %774, %768 : vector<8x32xf32>
    %776 = arith.addf %773, %775 : vector<8x32xf32>
    %777 = vector.extract_strided_slice %766 {offsets = [0, 32], sizes = [8, 32], strides = [1, 1]} : vector<8x96xf32> to vector<8x32xf32>
    %778 = vector.extract_strided_slice %738 {offsets = [0, 32], sizes = [8, 32], strides = [1, 1]} : vector<8x64xf32> to vector<8x32xf32>
    %779 = arith.mulf %777, %778 : vector<8x32xf32>
    %780 = vector.extract_strided_slice %766 {offsets = [0, 0], sizes = [8, 32], strides = [1, 1]} : vector<8x96xf32> to vector<8x32xf32>
    %781 = arith.mulf %780, %770 : vector<8x32xf32>
    %782 = arith.addf %779, %781 : vector<8x32xf32>
    %783 = vector.extract_strided_slice %758 {offsets = [0, 64], sizes = [8, 32], strides = [1, 1]} : vector<8x96xf32> to vector<8x32xf32>
    %784 = math.tanh %776 : vector<8x32xf32>
    %785 = arith.mulf %783, %784 : vector<8x32xf32>
    %786 = vector.extract_strided_slice %766 {offsets = [0, 64], sizes = [8, 32], strides = [1, 1]} : vector<8x96xf32> to vector<8x32xf32>
    %787 = math.tanh %782 : vector<8x32xf32>
    %788 = arith.mulf %786, %787 : vector<8x32xf32>
    %c9_i32_327 = arith.constant 9 : i32
    %789 = vector.broadcast %c9_i32_327 : i32 to vector<8x32xi32>
    %790 = arith.cmpi sgt, %15, %789 : vector<8x32xi32>
    %c2_i32_328 = arith.constant 2 : i32
    %791 = vector.broadcast %c2_i32_328 : i32 to vector<8x32xi32>
    %792 = arith.cmpi sgt, %15, %791 : vector<8x32xi32>
    %cst_329 = arith.constant 0.000000e+00 : f32
    %793 = vector.broadcast %cst_329 : f32 to vector<8x32xf32>
    %794 = arith.select %790, %785, %793 : vector<8x32xi1>, vector<8x32xf32>
    %795 = arith.truncf %794 : vector<8x32xf32> to vector<8x32xbf16>
    %c9_330 = arith.constant 9 : index
    %c0_331 = arith.constant 0 : index
    %c0_332 = arith.constant 0 : index
    %796 = vector.load %arg6[%c9_330, %c0_331, %c0_332] : memref<12x8x64xbf16, #tpu.memory_space<vmem>>, vector<1x8x32xbf16>
    %797 = vector.shape_cast %796 : vector<1x8x32xbf16> to vector<8x32xbf16>
    %798 = vector.shape_cast %795 : vector<8x32xbf16> to vector<1x8x32xbf16>
    tpu.vector_store %arg6[%c9_330, %c0_331, %c0_332], %798 {strides = array<i32>} : memref<12x8x64xbf16, #tpu.memory_space<vmem>>, vector<1x8x32xbf16>,
    %cst_333 = arith.constant 0.000000e+00 : f32
    %799 = vector.broadcast %cst_333 : f32 to vector<8x32xf32>
    %800 = arith.select %792, %788, %799 : vector<8x32xi1>, vector<8x32xf32>
    %801 = arith.truncf %800 : vector<8x32xf32> to vector<8x32xbf16>
    %c2_334 = arith.constant 2 : index
    %c0_335 = arith.constant 0 : index
    %c32_336 = arith.constant 32 : index
    %802 = vector.load %arg6[%c2_334, %c0_335, %c32_336] : memref<12x8x64xbf16, #tpu.memory_space<vmem>>, vector<1x8x32xbf16>
    %803 = vector.shape_cast %802 : vector<1x8x32xbf16> to vector<8x32xbf16>
    %804 = vector.shape_cast %801 : vector<8x32xbf16> to vector<1x8x32xbf16>
    tpu.vector_store %arg6[%c2_334, %c0_335, %c32_336], %804 {strides = array<i32>} : memref<12x8x64xbf16, #tpu.memory_space<vmem>>, vector<1x8x32xbf16>,
    %805 = vector.extract_strided_slice %737 {offsets = [0, 0], sizes = [8, 32], strides = [1, 1]} : vector<8x64xf32> to vector<8x32xf32>
    %806 = arith.select %790, %785, %805 : vector<8x32xi1>, vector<8x32xf32>
    %c0_337 = arith.constant 0 : index
    %c0_338 = arith.constant 0 : index
    %807 = vector.load %arg8[%c0_337, %c0_338] : memref<8x64xf32, #tpu.memory_space<vmem>>, vector<8x32xf32>
    tpu.vector_store %arg8[%c0_337, %c0_338], %806 {strides = array<i32>} : memref<8x64xf32, #tpu.memory_space<vmem>>, vector<8x32xf32>,
    %808 = vector.extract_strided_slice %737 {offsets = [0, 32], sizes = [8, 32], strides = [1, 1]} : vector<8x64xf32> to vector<8x32xf32>
    %809 = arith.select %792, %788, %808 : vector<8x32xi1>, vector<8x32xf32>
    %c0_339 = arith.constant 0 : index
    %c32_340 = arith.constant 32 : index
    %810 = vector.load %arg8[%c0_339, %c32_340] : memref<8x64xf32, #tpu.memory_space<vmem>>, vector<8x32xf32>
    tpu.vector_store %arg8[%c0_339, %c32_340], %809 {strides = array<i32>} : memref<8x64xf32, #tpu.memory_space<vmem>>, vector<8x32xf32>,
    %811 = vector.extract_strided_slice %738 {offsets = [0, 0], sizes = [8, 32], strides = [1, 1]} : vector<8x64xf32> to vector<8x32xf32>
    %812 = arith.select %790, %776, %811 : vector<8x32xi1>, vector<8x32xf32>
    %c0_341 = arith.constant 0 : index
    %c0_342 = arith.constant 0 : index
    %813 = vector.load %arg9[%c0_341, %c0_342] : memref<8x64xf32, #tpu.memory_space<vmem>>, vector<8x32xf32>
    tpu.vector_store %arg9[%c0_341, %c0_342], %812 {strides = array<i32>} : memref<8x64xf32, #tpu.memory_space<vmem>>, vector<8x32xf32>,
    %814 = vector.extract_strided_slice %738 {offsets = [0, 32], sizes = [8, 32], strides = [1, 1]} : vector<8x64xf32> to vector<8x32xf32>
    %815 = arith.select %792, %782, %814 : vector<8x32xi1>, vector<8x32xf32>
    %c0_343 = arith.constant 0 : index
    %c32_344 = arith.constant 32 : index
    %816 = vector.load %arg9[%c0_343, %c32_344] : memref<8x64xf32, #tpu.memory_space<vmem>>, vector<8x32xf32>
    tpu.vector_store %arg9[%c0_343, %c32_344], %815 {strides = array<i32>} : memref<8x64xf32, #tpu.memory_space<vmem>>, vector<8x32xf32>,
    %c0_345 = arith.constant 0 : index
    %c0_346 = arith.constant 0 : index
    %817 = vector.load %arg8[%c0_345, %c0_346] : memref<8x64xf32, #tpu.memory_space<vmem>>, vector<8x64xf32>
    %c0_347 = arith.constant 0 : index
    %c0_348 = arith.constant 0 : index
    %818 = vector.load %arg9[%c0_347, %c0_348] : memref<8x64xf32, #tpu.memory_space<vmem>>, vector<8x64xf32>
    %819 = arith.truncf %817 : vector<8x64xf32> to vector<8x64xbf16>
    %cst_349 = arith.constant dense<0.000000e+00> : vector<8x256xf32>
    %820 = tpu.matmul %819, %16, %cst_349 {dimension_numbers = #tpu.dot_dimension_numbers<[1], [0], [0], [1], [0, 0, 1, 1], [], []>} : vector<8x64xbf16>, vector<64x256xbf16>, vector<8x256xf32> -> vector<8x256xf32>
    %c10_350 = arith.constant 10 : index
    %c0_351 = arith.constant 0 : index
    %c0_352 = arith.constant 0 : index
    %821 = vector.load %arg7[%c10_350, %c0_351, %c0_352] : memref<12x8x256xf32, #tpu.memory_space<vmem>>, vector<1x8x256xf32>
    %822 = vector.shape_cast %821 : vector<1x8x256xf32> to vector<8x256xf32>
    %c1_353 = arith.constant 1 : index
    %c0_354 = arith.constant 0 : index
    %c0_355 = arith.constant 0 : index
    %823 = vector.load %arg7[%c1_353, %c0_354, %c0_355] : memref<12x8x256xf32, #tpu.memory_space<vmem>>, vector<1x8x256xf32>
    %824 = vector.shape_cast %823 : vector<1x8x256xf32> to vector<8x256xf32>
    %825 = vector.extract_strided_slice %822 {offsets = [0, 0], sizes = [8, 128], strides = [1, 1]} : vector<8x256xf32> to vector<8x128xf32>
    %826 = vector.extract_strided_slice %820 {offsets = [0, 0], sizes = [8, 128], strides = [1, 1]} : vector<8x256xf32> to vector<8x128xf32>
    %827 = arith.addf %825, %826 : vector<8x128xf32>
    %828 = vector.extract_strided_slice %824 {offsets = [0, 128], sizes = [8, 128], strides = [1, 1]} : vector<8x256xf32> to vector<8x128xf32>
    %829 = vector.extract_strided_slice %820 {offsets = [0, 128], sizes = [8, 128], strides = [1, 1]} : vector<8x256xf32> to vector<8x128xf32>
    %830 = arith.addf %828, %829 : vector<8x128xf32>
    %831 = vector.extract_strided_slice %827 {offsets = [0, 0], sizes = [8, 96], strides = [1, 1]} : vector<8x128xf32> to vector<8x96xf32>
    %cst_356 = arith.constant 5.000000e-01 : f32
    %832 = vector.broadcast %cst_356 : f32 to vector<8x96xf32>
    %833 = arith.mulf %832, %831 : vector<8x96xf32>
    %834 = math.tanh %833 : vector<8x96xf32>
    %cst_357 = arith.constant 1.000000e+00 : f32
    %835 = vector.broadcast %cst_357 : f32 to vector<8x96xf32>
    %836 = arith.addf %834, %835 : vector<8x96xf32>
    %cst_358 = arith.constant 5.000000e-01 : f32
    %837 = vector.broadcast %cst_358 : f32 to vector<8x96xf32>
    %838 = arith.mulf %837, %836 : vector<8x96xf32>
    %839 = vector.extract_strided_slice %830 {offsets = [0, 0], sizes = [8, 96], strides = [1, 1]} : vector<8x128xf32> to vector<8x96xf32>
    %cst_359 = arith.constant 5.000000e-01 : f32
    %840 = vector.broadcast %cst_359 : f32 to vector<8x96xf32>
    %841 = arith.mulf %840, %839 : vector<8x96xf32>
    %842 = math.tanh %841 : vector<8x96xf32>
    %cst_360 = arith.constant 1.000000e+00 : f32
    %843 = vector.broadcast %cst_360 : f32 to vector<8x96xf32>
    %844 = arith.addf %842, %843 : vector<8x96xf32>
    %cst_361 = arith.constant 5.000000e-01 : f32
    %845 = vector.broadcast %cst_361 : f32 to vector<8x96xf32>
    %846 = arith.mulf %845, %844 : vector<8x96xf32>
    %847 = vector.extract_strided_slice %827 {offsets = [0, 96], sizes = [8, 32], strides = [1, 1]} : vector<8x128xf32> to vector<8x32xf32>
    %848 = math.tanh %847 : vector<8x32xf32>
    %849 = vector.extract_strided_slice %830 {offsets = [0, 96], sizes = [8, 32], strides = [1, 1]} : vector<8x128xf32> to vector<8x32xf32>
    %850 = math.tanh %849 : vector<8x32xf32>
    %851 = vector.extract_strided_slice %838 {offsets = [0, 32], sizes = [8, 32], strides = [1, 1]} : vector<8x96xf32> to vector<8x32xf32>
    %852 = vector.extract_strided_slice %818 {offsets = [0, 0], sizes = [8, 32], strides = [1, 1]} : vector<8x64xf32> to vector<8x32xf32>
    %853 = arith.mulf %851, %852 : vector<8x32xf32>
    %854 = vector.extract_strided_slice %838 {offsets = [0, 0], sizes = [8, 32], strides = [1, 1]} : vector<8x96xf32> to vector<8x32xf32>
    %855 = arith.mulf %854, %848 : vector<8x32xf32>
    %856 = arith.addf %853, %855 : vector<8x32xf32>
    %857 = vector.extract_strided_slice %846 {offsets = [0, 32], sizes = [8, 32], strides = [1, 1]} : vector<8x96xf32> to vector<8x32xf32>
    %858 = vector.extract_strided_slice %818 {offsets = [0, 32], sizes = [8, 32], strides = [1, 1]} : vector<8x64xf32> to vector<8x32xf32>
    %859 = arith.mulf %857, %858 : vector<8x32xf32>
    %860 = vector.extract_strided_slice %846 {offsets = [0, 0], sizes = [8, 32], strides = [1, 1]} : vector<8x96xf32> to vector<8x32xf32>
    %861 = arith.mulf %860, %850 : vector<8x32xf32>
    %862 = arith.addf %859, %861 : vector<8x32xf32>
    %863 = vector.extract_strided_slice %838 {offsets = [0, 64], sizes = [8, 32], strides = [1, 1]} : vector<8x96xf32> to vector<8x32xf32>
    %864 = math.tanh %856 : vector<8x32xf32>
    %865 = arith.mulf %863, %864 : vector<8x32xf32>
    %866 = vector.extract_strided_slice %846 {offsets = [0, 64], sizes = [8, 32], strides = [1, 1]} : vector<8x96xf32> to vector<8x32xf32>
    %867 = math.tanh %862 : vector<8x32xf32>
    %868 = arith.mulf %866, %867 : vector<8x32xf32>
    %c10_i32_362 = arith.constant 10 : i32
    %869 = vector.broadcast %c10_i32_362 : i32 to vector<8x32xi32>
    %870 = arith.cmpi sgt, %15, %869 : vector<8x32xi32>
    %c1_i32_363 = arith.constant 1 : i32
    %871 = vector.broadcast %c1_i32_363 : i32 to vector<8x32xi32>
    %872 = arith.cmpi sgt, %15, %871 : vector<8x32xi32>
    %cst_364 = arith.constant 0.000000e+00 : f32
    %873 = vector.broadcast %cst_364 : f32 to vector<8x32xf32>
    %874 = arith.select %870, %865, %873 : vector<8x32xi1>, vector<8x32xf32>
    %875 = arith.truncf %874 : vector<8x32xf32> to vector<8x32xbf16>
    %c10_365 = arith.constant 10 : index
    %c0_366 = arith.constant 0 : index
    %c0_367 = arith.constant 0 : index
    %876 = vector.load %arg6[%c10_365, %c0_366, %c0_367] : memref<12x8x64xbf16, #tpu.memory_space<vmem>>, vector<1x8x32xbf16>
    %877 = vector.shape_cast %876 : vector<1x8x32xbf16> to vector<8x32xbf16>
    %878 = vector.shape_cast %875 : vector<8x32xbf16> to vector<1x8x32xbf16>
    tpu.vector_store %arg6[%c10_365, %c0_366, %c0_367], %878 {strides = array<i32>} : memref<12x8x64xbf16, #tpu.memory_space<vmem>>, vector<1x8x32xbf16>,
    %cst_368 = arith.constant 0.000000e+00 : f32
    %879 = vector.broadcast %cst_368 : f32 to vector<8x32xf32>
    %880 = arith.select %872, %868, %879 : vector<8x32xi1>, vector<8x32xf32>
    %881 = arith.truncf %880 : vector<8x32xf32> to vector<8x32xbf16>
    %c1_369 = arith.constant 1 : index
    %c0_370 = arith.constant 0 : index
    %c32_371 = arith.constant 32 : index
    %882 = vector.load %arg6[%c1_369, %c0_370, %c32_371] : memref<12x8x64xbf16, #tpu.memory_space<vmem>>, vector<1x8x32xbf16>
    %883 = vector.shape_cast %882 : vector<1x8x32xbf16> to vector<8x32xbf16>
    %884 = vector.shape_cast %881 : vector<8x32xbf16> to vector<1x8x32xbf16>
    tpu.vector_store %arg6[%c1_369, %c0_370, %c32_371], %884 {strides = array<i32>} : memref<12x8x64xbf16, #tpu.memory_space<vmem>>, vector<1x8x32xbf16>,
    %885 = vector.extract_strided_slice %817 {offsets = [0, 0], sizes = [8, 32], strides = [1, 1]} : vector<8x64xf32> to vector<8x32xf32>
    %886 = arith.select %870, %865, %885 : vector<8x32xi1>, vector<8x32xf32>
    %c0_372 = arith.constant 0 : index
    %c0_373 = arith.constant 0 : index
    %887 = vector.load %arg8[%c0_372, %c0_373] : memref<8x64xf32, #tpu.memory_space<vmem>>, vector<8x32xf32>
    tpu.vector_store %arg8[%c0_372, %c0_373], %886 {strides = array<i32>} : memref<8x64xf32, #tpu.memory_space<vmem>>, vector<8x32xf32>,
    %888 = vector.extract_strided_slice %817 {offsets = [0, 32], sizes = [8, 32], strides = [1, 1]} : vector<8x64xf32> to vector<8x32xf32>
    %889 = arith.select %872, %868, %888 : vector<8x32xi1>, vector<8x32xf32>
    %c0_374 = arith.constant 0 : index
    %c32_375 = arith.constant 32 : index
    %890 = vector.load %arg8[%c0_374, %c32_375] : memref<8x64xf32, #tpu.memory_space<vmem>>, vector<8x32xf32>
    tpu.vector_store %arg8[%c0_374, %c32_375], %889 {strides = array<i32>} : memref<8x64xf32, #tpu.memory_space<vmem>>, vector<8x32xf32>,
    %891 = vector.extract_strided_slice %818 {offsets = [0, 0], sizes = [8, 32], strides = [1, 1]} : vector<8x64xf32> to vector<8x32xf32>
    %892 = arith.select %870, %856, %891 : vector<8x32xi1>, vector<8x32xf32>
    %c0_376 = arith.constant 0 : index
    %c0_377 = arith.constant 0 : index
    %893 = vector.load %arg9[%c0_376, %c0_377] : memref<8x64xf32, #tpu.memory_space<vmem>>, vector<8x32xf32>
    tpu.vector_store %arg9[%c0_376, %c0_377], %892 {strides = array<i32>} : memref<8x64xf32, #tpu.memory_space<vmem>>, vector<8x32xf32>,
    %894 = vector.extract_strided_slice %818 {offsets = [0, 32], sizes = [8, 32], strides = [1, 1]} : vector<8x64xf32> to vector<8x32xf32>
    %895 = arith.select %872, %862, %894 : vector<8x32xi1>, vector<8x32xf32>
    %c0_378 = arith.constant 0 : index
    %c32_379 = arith.constant 32 : index
    %896 = vector.load %arg9[%c0_378, %c32_379] : memref<8x64xf32, #tpu.memory_space<vmem>>, vector<8x32xf32>
    tpu.vector_store %arg9[%c0_378, %c32_379], %895 {strides = array<i32>} : memref<8x64xf32, #tpu.memory_space<vmem>>, vector<8x32xf32>,
    %c0_380 = arith.constant 0 : index
    %c0_381 = arith.constant 0 : index
    %897 = vector.load %arg8[%c0_380, %c0_381] : memref<8x64xf32, #tpu.memory_space<vmem>>, vector<8x64xf32>
    %c0_382 = arith.constant 0 : index
    %c0_383 = arith.constant 0 : index
    %898 = vector.load %arg9[%c0_382, %c0_383] : memref<8x64xf32, #tpu.memory_space<vmem>>, vector<8x64xf32>
    %899 = arith.truncf %897 : vector<8x64xf32> to vector<8x64xbf16>
    %cst_384 = arith.constant dense<0.000000e+00> : vector<8x256xf32>
    %900 = tpu.matmul %899, %16, %cst_384 {dimension_numbers = #tpu.dot_dimension_numbers<[1], [0], [0], [1], [0, 0, 1, 1], [], []>} : vector<8x64xbf16>, vector<64x256xbf16>, vector<8x256xf32> -> vector<8x256xf32>
    %c11_385 = arith.constant 11 : index
    %c0_386 = arith.constant 0 : index
    %c0_387 = arith.constant 0 : index
    %901 = vector.load %arg7[%c11_385, %c0_386, %c0_387] : memref<12x8x256xf32, #tpu.memory_space<vmem>>, vector<1x8x256xf32>
    %902 = vector.shape_cast %901 : vector<1x8x256xf32> to vector<8x256xf32>
    %c0_388 = arith.constant 0 : index
    %c0_389 = arith.constant 0 : index
    %c0_390 = arith.constant 0 : index
    %903 = vector.load %arg7[%c0_388, %c0_389, %c0_390] : memref<12x8x256xf32, #tpu.memory_space<vmem>>, vector<1x8x256xf32>
    %904 = vector.shape_cast %903 : vector<1x8x256xf32> to vector<8x256xf32>
    %905 = vector.extract_strided_slice %902 {offsets = [0, 0], sizes = [8, 128], strides = [1, 1]} : vector<8x256xf32> to vector<8x128xf32>
    %906 = vector.extract_strided_slice %900 {offsets = [0, 0], sizes = [8, 128], strides = [1, 1]} : vector<8x256xf32> to vector<8x128xf32>
    %907 = arith.addf %905, %906 : vector<8x128xf32>
    %908 = vector.extract_strided_slice %904 {offsets = [0, 128], sizes = [8, 128], strides = [1, 1]} : vector<8x256xf32> to vector<8x128xf32>
    %909 = vector.extract_strided_slice %900 {offsets = [0, 128], sizes = [8, 128], strides = [1, 1]} : vector<8x256xf32> to vector<8x128xf32>
    %910 = arith.addf %908, %909 : vector<8x128xf32>
    %911 = vector.extract_strided_slice %907 {offsets = [0, 0], sizes = [8, 96], strides = [1, 1]} : vector<8x128xf32> to vector<8x96xf32>
    %cst_391 = arith.constant 5.000000e-01 : f32
    %912 = vector.broadcast %cst_391 : f32 to vector<8x96xf32>
    %913 = arith.mulf %912, %911 : vector<8x96xf32>
    %914 = math.tanh %913 : vector<8x96xf32>
    %cst_392 = arith.constant 1.000000e+00 : f32
    %915 = vector.broadcast %cst_392 : f32 to vector<8x96xf32>
    %916 = arith.addf %914, %915 : vector<8x96xf32>
    %cst_393 = arith.constant 5.000000e-01 : f32
    %917 = vector.broadcast %cst_393 : f32 to vector<8x96xf32>
    %918 = arith.mulf %917, %916 : vector<8x96xf32>
    %919 = vector.extract_strided_slice %910 {offsets = [0, 0], sizes = [8, 96], strides = [1, 1]} : vector<8x128xf32> to vector<8x96xf32>
    %cst_394 = arith.constant 5.000000e-01 : f32
    %920 = vector.broadcast %cst_394 : f32 to vector<8x96xf32>
    %921 = arith.mulf %920, %919 : vector<8x96xf32>
    %922 = math.tanh %921 : vector<8x96xf32>
    %cst_395 = arith.constant 1.000000e+00 : f32
    %923 = vector.broadcast %cst_395 : f32 to vector<8x96xf32>
    %924 = arith.addf %922, %923 : vector<8x96xf32>
    %cst_396 = arith.constant 5.000000e-01 : f32
    %925 = vector.broadcast %cst_396 : f32 to vector<8x96xf32>
    %926 = arith.mulf %925, %924 : vector<8x96xf32>
    %927 = vector.extract_strided_slice %907 {offsets = [0, 96], sizes = [8, 32], strides = [1, 1]} : vector<8x128xf32> to vector<8x32xf32>
    %928 = math.tanh %927 : vector<8x32xf32>
    %929 = vector.extract_strided_slice %910 {offsets = [0, 96], sizes = [8, 32], strides = [1, 1]} : vector<8x128xf32> to vector<8x32xf32>
    %930 = math.tanh %929 : vector<8x32xf32>
    %931 = vector.extract_strided_slice %918 {offsets = [0, 32], sizes = [8, 32], strides = [1, 1]} : vector<8x96xf32> to vector<8x32xf32>
    %932 = vector.extract_strided_slice %898 {offsets = [0, 0], sizes = [8, 32], strides = [1, 1]} : vector<8x64xf32> to vector<8x32xf32>
    %933 = arith.mulf %931, %932 : vector<8x32xf32>
    %934 = vector.extract_strided_slice %918 {offsets = [0, 0], sizes = [8, 32], strides = [1, 1]} : vector<8x96xf32> to vector<8x32xf32>
    %935 = arith.mulf %934, %928 : vector<8x32xf32>
    %936 = arith.addf %933, %935 : vector<8x32xf32>
    %937 = vector.extract_strided_slice %926 {offsets = [0, 32], sizes = [8, 32], strides = [1, 1]} : vector<8x96xf32> to vector<8x32xf32>
    %938 = vector.extract_strided_slice %898 {offsets = [0, 32], sizes = [8, 32], strides = [1, 1]} : vector<8x64xf32> to vector<8x32xf32>
    %939 = arith.mulf %937, %938 : vector<8x32xf32>
    %940 = vector.extract_strided_slice %926 {offsets = [0, 0], sizes = [8, 32], strides = [1, 1]} : vector<8x96xf32> to vector<8x32xf32>
    %941 = arith.mulf %940, %930 : vector<8x32xf32>
    %942 = arith.addf %939, %941 : vector<8x32xf32>
    %943 = vector.extract_strided_slice %918 {offsets = [0, 64], sizes = [8, 32], strides = [1, 1]} : vector<8x96xf32> to vector<8x32xf32>
    %944 = math.tanh %936 : vector<8x32xf32>
    %945 = arith.mulf %943, %944 : vector<8x32xf32>
    %946 = vector.extract_strided_slice %926 {offsets = [0, 64], sizes = [8, 32], strides = [1, 1]} : vector<8x96xf32> to vector<8x32xf32>
    %947 = math.tanh %942 : vector<8x32xf32>
    %948 = arith.mulf %946, %947 : vector<8x32xf32>
    %c11_i32_397 = arith.constant 11 : i32
    %949 = vector.broadcast %c11_i32_397 : i32 to vector<8x32xi32>
    %950 = arith.cmpi sgt, %15, %949 : vector<8x32xi32>
    %c0_i32_398 = arith.constant 0 : i32
    %951 = vector.broadcast %c0_i32_398 : i32 to vector<8x32xi32>
    %952 = arith.cmpi sgt, %15, %951 : vector<8x32xi32>
    %cst_399 = arith.constant 0.000000e+00 : f32
    %953 = vector.broadcast %cst_399 : f32 to vector<8x32xf32>
    %954 = arith.select %950, %945, %953 : vector<8x32xi1>, vector<8x32xf32>
    %955 = arith.truncf %954 : vector<8x32xf32> to vector<8x32xbf16>
    %c11_400 = arith.constant 11 : index
    %c0_401 = arith.constant 0 : index
    %c0_402 = arith.constant 0 : index
    %956 = vector.load %arg6[%c11_400, %c0_401, %c0_402] : memref<12x8x64xbf16, #tpu.memory_space<vmem>>, vector<1x8x32xbf16>
    %957 = vector.shape_cast %956 : vector<1x8x32xbf16> to vector<8x32xbf16>
    %958 = vector.shape_cast %955 : vector<8x32xbf16> to vector<1x8x32xbf16>
    tpu.vector_store %arg6[%c11_400, %c0_401, %c0_402], %958 {strides = array<i32>} : memref<12x8x64xbf16, #tpu.memory_space<vmem>>, vector<1x8x32xbf16>,
    %cst_403 = arith.constant 0.000000e+00 : f32
    %959 = vector.broadcast %cst_403 : f32 to vector<8x32xf32>
    %960 = arith.select %952, %948, %959 : vector<8x32xi1>, vector<8x32xf32>
    %961 = arith.truncf %960 : vector<8x32xf32> to vector<8x32xbf16>
    %c0_404 = arith.constant 0 : index
    %c0_405 = arith.constant 0 : index
    %c32_406 = arith.constant 32 : index
    %962 = vector.load %arg6[%c0_404, %c0_405, %c32_406] : memref<12x8x64xbf16, #tpu.memory_space<vmem>>, vector<1x8x32xbf16>
    %963 = vector.shape_cast %962 : vector<1x8x32xbf16> to vector<8x32xbf16>
    %964 = vector.shape_cast %961 : vector<8x32xbf16> to vector<1x8x32xbf16>
    tpu.vector_store %arg6[%c0_404, %c0_405, %c32_406], %964 {strides = array<i32>} : memref<12x8x64xbf16, #tpu.memory_space<vmem>>, vector<1x8x32xbf16>,
    %965 = vector.extract_strided_slice %897 {offsets = [0, 0], sizes = [8, 32], strides = [1, 1]} : vector<8x64xf32> to vector<8x32xf32>
    %966 = arith.select %950, %945, %965 : vector<8x32xi1>, vector<8x32xf32>
    %c0_407 = arith.constant 0 : index
    %c0_408 = arith.constant 0 : index
    %967 = vector.load %arg8[%c0_407, %c0_408] : memref<8x64xf32, #tpu.memory_space<vmem>>, vector<8x32xf32>
    tpu.vector_store %arg8[%c0_407, %c0_408], %966 {strides = array<i32>} : memref<8x64xf32, #tpu.memory_space<vmem>>, vector<8x32xf32>,
    %968 = vector.extract_strided_slice %897 {offsets = [0, 32], sizes = [8, 32], strides = [1, 1]} : vector<8x64xf32> to vector<8x32xf32>
    %969 = arith.select %952, %948, %968 : vector<8x32xi1>, vector<8x32xf32>
    %c0_409 = arith.constant 0 : index
    %c32_410 = arith.constant 32 : index
    %970 = vector.load %arg8[%c0_409, %c32_410] : memref<8x64xf32, #tpu.memory_space<vmem>>, vector<8x32xf32>
    tpu.vector_store %arg8[%c0_409, %c32_410], %969 {strides = array<i32>} : memref<8x64xf32, #tpu.memory_space<vmem>>, vector<8x32xf32>,
    %971 = vector.extract_strided_slice %898 {offsets = [0, 0], sizes = [8, 32], strides = [1, 1]} : vector<8x64xf32> to vector<8x32xf32>
    %972 = arith.select %950, %936, %971 : vector<8x32xi1>, vector<8x32xf32>
    %c0_411 = arith.constant 0 : index
    %c0_412 = arith.constant 0 : index
    %973 = vector.load %arg9[%c0_411, %c0_412] : memref<8x64xf32, #tpu.memory_space<vmem>>, vector<8x32xf32>
    tpu.vector_store %arg9[%c0_411, %c0_412], %972 {strides = array<i32>} : memref<8x64xf32, #tpu.memory_space<vmem>>, vector<8x32xf32>,
    %974 = vector.extract_strided_slice %898 {offsets = [0, 32], sizes = [8, 32], strides = [1, 1]} : vector<8x64xf32> to vector<8x32xf32>
    %975 = arith.select %952, %942, %974 : vector<8x32xi1>, vector<8x32xf32>
    %c0_413 = arith.constant 0 : index
    %c32_414 = arith.constant 32 : index
    %976 = vector.load %arg9[%c0_413, %c32_414] : memref<8x64xf32, #tpu.memory_space<vmem>>, vector<8x32xf32>
    tpu.vector_store %arg9[%c0_413, %c32_414], %975 {strides = array<i32>} : memref<8x64xf32, #tpu.memory_space<vmem>>, vector<8x32xf32>,
    return
  }
  func.func @transform_0(%arg0: i32) -> (i32, i32, i32) {
    %c0_i32 = arith.constant 0 : i32
    %c0_i32_0 = arith.constant 0 : i32
    %c0_i32_1 = arith.constant 0 : i32
    return %c0_i32, %arg0, %c0_i32_0 : i32, i32, i32
  }
  func.func @transform_1(%arg0: i32) -> (i32, i32) {
    %c0_i32 = arith.constant 0 : i32
    %c0_i32_0 = arith.constant 0 : i32
    return %arg0, %c0_i32 : i32, i32
  }
  func.func @transform_2(%arg0: i32) -> (i32, i32) {
    %c0_i32 = arith.constant 0 : i32
    %c0_i32_0 = arith.constant 0 : i32
    %c0_i32_1 = arith.constant 0 : i32
    return %c0_i32, %c0_i32_0 : i32, i32
  }
  func.func @transform_3(%arg0: i32) -> (i32, i32) {
    %c0_i32 = arith.constant 0 : i32
    %c0_i32_0 = arith.constant 0 : i32
    %c0_i32_1 = arith.constant 0 : i32
    return %c0_i32, %c0_i32_0 : i32, i32
  }
  func.func @transform_4(%arg0: i32) -> (i32, i32) {
    %c0_i32 = arith.constant 0 : i32
    %c0_i32_0 = arith.constant 0 : i32
    %c0_i32_1 = arith.constant 0 : i32
    return %c0_i32, %c0_i32_0 : i32, i32
  }
  func.func @transform_5(%arg0: i32) -> (i32, i32, i32) {
    %c0_i32 = arith.constant 0 : i32
    %c0_i32_0 = arith.constant 0 : i32
    %c0_i32_1 = arith.constant 0 : i32
    return %c0_i32, %arg0, %c0_i32_0 : i32, i32, i32
  }
}

</mosaic_0001>

<llo_original>
// kernel: tpu_custom_call.1
$region0: #{tpu_custom_call.1}
  #allocation0 [shape = 'u32[]', space=smem, size = 0x4, offset = 0x4, fixed_abs, tag = 'smem constant byte address 0x4 - core index']
  #allocation1 [shape = 'u32[144,128]{1,0:T(1,128)}', space=vmem, size = 0x12000, scoped, tag = 'internal scratch']
  #allocation2 [shape = 'f32[12,8,256]{2,1,0:T(8,128)}', space=vmem, size = 0x18000, scoped, tag = 'scratch operand']
  #allocation3 [shape = 'f32[8,64]{1,0:T(8,128)}', space=vmem, size = 0x1000, scoped, tag = 'scratch operand']
  #allocation4 [shape = 'f32[8,64]{1,0:T(8,128)}', space=vmem, size = 0x1000, scoped, tag = 'scratch operand']
  %s0 = inlined_call_operand.hbm [shape: bf16[12,16,32], index: 0, kind: input, shape index: {}]
  %s1 = inlined_call_operand.vmem [shape: s32[16,1], index: 1, kind: input, shape index: {}]
  %s2 = inlined_call_operand.hbm [shape: bf16[32,256], index: 2, kind: input, shape index: {}]
  %s3 = inlined_call_operand.hbm [shape: bf16[64,256], index: 3, kind: input, shape index: {}]
  %s4 = inlined_call_operand.vmem [shape: f32[1,256], index: 4, kind: input, shape index: {}]
  %s5 = inlined_call_operand.hbm [shape: bf16[12,16,64], index: 5, kind: output, shape index: {}]
  %s6 = sld [smem:[#allocation0]]
  $region65: #{tpu_custom_call.1} parent=0
    _
  %s8 = ssub.s32 1, %s6
  %s9 = scalar_select 0, %s8, %s6
  $region1: #{tpu_custom_call.1} parent=0
    #allocation5 [shape = 'u8[49152]{0}', space=vmem, size = 0xc000, scoped, tag = 'input window, operand 0']
    #allocation6 [shape = 's32[2]{0}', space=sflag, size = 0x8, scoped, tag = 'scoped memory for tpu_custom_call.1']
    #allocation7 [shape = 's32[2]{0}', space=sflag, size = 0x8, scoped, tag = 'scoped memory for tpu_custom_call.1']
    #allocation8 [shape = 'u8[16384]{0}', space=vmem, size = 0x4000, scoped, tag = 'input window, operand 2, single buffered']
    #allocation9 [shape = 's32[1]{0}', space=sflag, size = 0x4, scoped, tag = 'scoped memory for tpu_custom_call.1']
    #allocation10 [shape = 'u8[32768]{0}', space=vmem, size = 0x8000, scoped, tag = 'input window, operand 3, single buffered']
    #allocation11 [shape = 'u8[49152]{0}', space=vmem, size = 0xc000, scoped, tag = 'output window, operand 0']
    %10 = vsyncpa [#allocation6], 0
    %s11 = scalar_lea.sflag [#allocation6], 1
    %12 = vsyncpa %s11, 0
    %13 = vsyncpa [#allocation9], 0
    %14 = vsyncpa [#allocation7], 0
    %s15 = scalar_lea.sflag [#allocation7], 1
    %16 = vsyncpa %s15, 0
    loop: start=0, step=1, limit=4
    $region2: #{tpu_custom_call.1} parent=1 // loop_pre_header
      _
    $region3: #{tpu_custom_call.1} parent=1 // loop_header
      %s18 = sphi 0, %s22
      %p19 = scmp.ge.s32.totalorder %s18, 4
      %s28 = sphi 0, %s30
      %s31 = sphi 0, %s28
      %s32 = sphi 0, %s31
      %s48 = sphi 0, %s32
      %s54 = sphi 0, %s56
      %s57 = sphi 0, %s54
      %s58 = sphi 0, %s57
      %s74 = sphi 0, %s58
      %s78 = sphi 0, %s78
      %s80 = sphi 0, %s78
      %s81 = sphi 0, %s80
      %s95 = sphi 0, %s81
      %s99 = sphi 0, %s99
      %s101 = sphi 0, %s99
      %s102 = sphi 0, %s101
      %s116 = sphi 0, %s102
      %s120 = sphi 0, %s120
      %s122 = sphi 0, %s120
      %s123 = sphi 0, %s122
      %s137 = sphi 0, %s123
      %s143 = sphi 0, %s145
      %s146 = sphi 0, %s143
      %s147 = sphi 0, %s146
      %s163 = sphi 0, %s147
    $region4: #{tpu_custom_call.1} parent=1 // loop_header_branch
      %21 = sbr.rel (%p19) target = $region8
    $region5: #{tpu_custom_call.1} parent=1 // loop_body
      %s23 = ssub.s32 %s18, 1
      %s24 = ssub.s32 %s18, 2
      %s25 = sadd.s32 %s18, 1
      %s26 = ssub.s32 %s18, %s25
      %p27 = scmp.eq.s32.totalorder %s26, 0
      %s29 = sadd.s32 %s28, 1
      %s30 = scalar_select %p27, %s28, %s29
      %p33 = pneg %p27
      %p34 = scmp.eq.s32.totalorder %s18, 1
      %p35 = por %p33, %p34
      %p36 = scmp.ne.s32.totalorder %s28, %s31
      %p37 = scmp.eq.s32.totalorder %s18, 0
      %p38 = por %p36, %p37
      %p39 = scmp.ne.s32.totalorder %s28, %s31
      %p40 = scmp.eq.s32.totalorder %s23, 1
      %p41 = por %p39, %p40
      %p42 = scmp.ne.s32.totalorder %s31, %s32
      %p43 = scmp.eq.s32.totalorder %s23, 0
      %p44 = por %p42, %p43
      %p45 = scmp.ne.s32.totalorder %s31, %s32
      %p46 = scmp.eq.s32.totalorder %s24, 1
      %p47 = por %p45, %p46
      %p49 = scmp.ne.s32.totalorder %s32, %s48
      %p50 = scmp.eq.s32.totalorder %s24, 0
      %p51 = por %p49, %p50
      %s52 = ssub.s32 %s18, %s25
      %p53 = scmp.eq.s32.totalorder %s52, 0
      %s55 = sadd.s32 %s54, 1
      %s56 = scalar_select %p53, %s54, %s55
      %p59 = pneg %p53
      %p60 = scmp.eq.s32.totalorder %s18, 1
      %p61 = por %p59, %p60
      %p62 = scmp.ne.s32.totalorder %s54, %s57
      %p63 = scmp.eq.s32.totalorder %s18, 0
      %p64 = por %p62, %p63
      %p65 = scmp.ne.s32.totalorder %s54, %s57
      %p66 = scmp.eq.s32.totalorder %s23, 1
      %p67 = por %p65, %p66
      %p68 = scmp.ne.s32.totalorder %s57, %s58
      %p69 = scmp.eq.s32.totalorder %s23, 0
      %p70 = por %p68, %p69
      %p71 = scmp.ne.s32.totalorder %s57, %s58
      %p72 = scmp.eq.s32.totalorder %s24, 1
      %p73 = por %p71, %p72
      %p75 = scmp.ne.s32.totalorder %s58, %s74
      %p76 = scmp.eq.s32.totalorder %s24, 0
      %p77 = por %p75, %p76
      %s79 = sadd.s32 %s78, 1
      %p82 = scmp.eq.s32.totalorder %s18, 1
      %p83 = scmp.ne.s32.totalorder %s78, %s80
      %p84 = scmp.eq.s32.totalorder %s18, 0
      %p85 = por %p83, %p84
      %p86 = scmp.ne.s32.totalorder %s78, %s80
      %p87 = scmp.eq.s32.totalorder %s23, 1
      %p88 = por %p86, %p87
      %p89 = scmp.ne.s32.totalorder %s80, %s81
      %p90 = scmp.eq.s32.totalorder %s23, 0
      %p91 = por %p89, %p90
      %p92 = scmp.ne.s32.totalorder %s80, %s81
      %p93 = scmp.eq.s32.totalorder %s24, 1
      %p94 = por %p92, %p93
      %p96 = scmp.ne.s32.totalorder %s81, %s95
      %p97 = scmp.eq.s32.totalorder %s24, 0
      %p98 = por %p96, %p97
      %s100 = sadd.s32 %s99, 1
      %p103 = scmp.eq.s32.totalorder %s18, 1
      %p104 = scmp.ne.s32.totalorder %s99, %s101
      %p105 = scmp.eq.s32.totalorder %s18, 0
      %p106 = por %p104, %p105
      %p107 = scmp.ne.s32.totalorder %s99, %s101
      %p108 = scmp.eq.s32.totalorder %s23, 1
      %p109 = por %p107, %p108
      %p110 = scmp.ne.s32.totalorder %s101, %s102
      %p111 = scmp.eq.s32.totalorder %s23, 0
      %p112 = por %p110, %p111
      %p113 = scmp.ne.s32.totalorder %s101, %s102
      %p114 = scmp.eq.s32.totalorder %s24, 1
      %p115 = por %p113, %p114
      %p117 = scmp.ne.s32.totalorder %s102, %s116
      %p118 = scmp.eq.s32.totalorder %s24, 0
      %p119 = por %p117, %p118
      %s121 = sadd.s32 %s120, 1
      %p124 = scmp.eq.s32.totalorder %s18, 1
      %p125 = scmp.ne.s32.totalorder %s120, %s122
      %p126 = scmp.eq.s32.totalorder %s18, 0
      %p127 = por %p125, %p126
      %p128 = scmp.ne.s32.totalorder %s120, %s122
      %p129 = scmp.eq.s32.totalorder %s23, 1
      %p130 = por %p128, %p129
      %p131 = scmp.ne.s32.totalorder %s122, %s123
      %p132 = scmp.eq.s32.totalorder %s23, 0
      %p133 = por %p131, %p132
      %p134 = scmp.ne.s32.totalorder %s122, %s123
      %p135 = scmp.eq.s32.totalorder %s24, 1
      %p136 = por %p134, %p135
      %p138 = scmp.ne.s32.totalorder %s123, %s137
      %p139 = scmp.eq.s32.totalorder %s24, 0
      %p140 = por %p138, %p139
      %s141 = ssub.s32 %s18, %s25
      %p142 = scmp.eq.s32.totalorder %s141, 0
      %s144 = sadd.s32 %s143, 1
      %s145 = scalar_select %p142, %s143, %s144
      %p148 = pneg %p142
      %p149 = scmp.eq.s32.totalorder %s18, 1
      %p150 = por %p148, %p149
      %p151 = scmp.ne.s32.totalorder %s143, %s146
      %p152 = scmp.eq.s32.totalorder %s18, 0
      %p153 = por %p151, %p152
      %p154 = scmp.ne.s32.totalorder %s143, %s146
      %p155 = scmp.eq.s32.totalorder %s23, 1
      %p156 = por %p154, %p155
      %p157 = scmp.ne.s32.totalorder %s146, %s147
      %p158 = scmp.eq.s32.totalorder %s23, 0
      %p159 = por %p157, %p158
      %p160 = scmp.ne.s32.totalorder %s146, %s147
      %p161 = scmp.eq.s32.totalorder %s24, 1
      %p162 = por %p160, %p161
      %p164 = scmp.ne.s32.totalorder %s147, %s163
      %p165 = scmp.eq.s32.totalorder %s24, 0
      %p166 = por %p164, %p165
      %p167 = scmp.le.s32.totalorder 1, %s18
      %p168 = scmp.lt.s32.totalorder %s18, 3
      %p169 = pnand %p167, %p168
      %p170 = pneg %p169
      // Predicated region
      $region9: #{tpu_custom_call.1} parent=5 // pred_check
        _
      $region10: #{tpu_custom_call.1} parent=5 // pred_check_branch
        %172 = sbr.rel (%p169) target = $region12
      $region11: #{tpu_custom_call.1} parent=5 // pred_region
        %s173 = ssub.s32 %s18, 1
        // Predicated region
        $region13: #{tpu_custom_call.1} parent=11 // pred_check
          %p174 = pneg %p91
        $region14: #{tpu_custom_call.1} parent=11 // pred_check_branch
          %176 = sbr.rel (%p174) target = $region16
        $region15: #{tpu_custom_call.1} parent=11 // pred_region
          %s178 = ssub.s32 512, 512
          %179 = vsyncadd [#allocation9], %s178
          %s180 = sshll.u32 [#allocation8], 4
          %s181 = int_to_ptr.vmem [resolvable:$true] %s180
          %186 = dma.hbm_to_vmem [thread:$0]  %s2, 512, %s181, [#allocation9], 128, 128, 8
        $region16: #{tpu_custom_call.1} parent=11 // pred_fallthru
          _
        // Predicated region
        $region17: #{tpu_custom_call.1} parent=11 // pred_check
          %p187 = pneg %p112
        $region18: #{tpu_custom_call.1} parent=11 // pred_check_branch
          %189 = sbr.rel (%p187) target = $region20
        $region19: #{tpu_custom_call.1} parent=11 // pred_region
          %s191 = ssub.s32 1024, 1024
          %192 = vsyncadd [#allocation9], %s191
          %s193 = sshll.u32 [#allocation10], 4
          %s194 = int_to_ptr.vmem [resolvable:$true] %s193
          %199 = dma.hbm_to_vmem [thread:$0]  %s3, 1024, %s194, [#allocation9], 128, 128, 8
        $region20: #{tpu_custom_call.1} parent=11 // pred_fallthru
          _
        // Predicated region
        $region21: #{tpu_custom_call.1} parent=11 // pred_check
          %p200 = pneg %p133
        $region22: #{tpu_custom_call.1} parent=11 // pred_check_branch
          %202 = sbr.rel (%p200) target = $region24
        $region23: #{tpu_custom_call.1} parent=11 // pred_region
          _
        $region24: #{tpu_custom_call.1} parent=11 // pred_fallthru
          _
      $region12: #{tpu_custom_call.1} parent=5 // pred_fallthru
        _
      %p203 = scmp.lt.s32.totalorder %s18, 2
      // Predicated region
      $region25: #{tpu_custom_call.1} parent=5 // pred_check
        %p204 = pneg %p203
      $region26: #{tpu_custom_call.1} parent=5 // pred_check_branch
        %206 = sbr.rel (%p204) target = $region28
      $region27: #{tpu_custom_call.1} parent=5 // pred_region
        // Predicated region
        $region29: #{tpu_custom_call.1} parent=27 // pred_check
          %p207 = pneg %p38
        $region30: #{tpu_custom_call.1} parent=27 // pred_check_branch
          %209 = sbr.rel (%p207) target = $region32
        $region31: #{tpu_custom_call.1} parent=27 // pred_region
          %s210 = sand.u32 %s28, 1
          %s211 = scalar_lea.sflag [#allocation6], %s210
          %s212 = sand.u32 %s28, 1
          %s213 = smul.addr %s212, 48
          %s214 = scalar_lea.vmem [#allocation5], %s213
          %s216 = ssub.s32 768, 768
          %217 = vsyncadd %s211, %s216
          %s218 = smul.addr %s18, 64
          %s219 = scalar_lea.hbm %s0, %s218
          %s220 = sshll.u32 %s214, 4
          %s221 = int_to_ptr.vmem [resolvable:$true] %s220
          %226 = dma.hbm_to_vmem [thread:$0]  %s219, 768, %s221, %s211, 128, 64, 4
        $region32: #{tpu_custom_call.1} parent=27 // pred_fallthru
          _
        // Predicated region
        $region33: #{tpu_custom_call.1} parent=27 // pred_check
          %p227 = pneg %p64
        $region34: #{tpu_custom_call.1} parent=27 // pred_check_branch
          %229 = sbr.rel (%p227) target = $region36
        $region35: #{tpu_custom_call.1} parent=27 // pred_region
          %p230 = scmp.lt.s32.totalorder %s18, 1
          %s231 = scalar_select %p230, %s18, 1
          %s232 = smul.addr %s231, 8
          %s233 = scalar_lea.vmem %s1, %s232
        $region36: #{tpu_custom_call.1} parent=27 // pred_fallthru
          _
      $region28: #{tpu_custom_call.1} parent=5 // pred_fallthru
        _
      %p234 = scmp.le.s32.totalorder 1, %s18
      %p235 = scmp.lt.s32.totalorder %s18, 3
      %p236 = pnand %p234, %p235
      %p237 = pneg %p236
      // Predicated region
      $region37: #{tpu_custom_call.1} parent=5 // pred_check
        _
      $region38: #{tpu_custom_call.1} parent=5 // pred_check_branch
        %239 = sbr.rel (%p236) target = $region40
      $region39: #{tpu_custom_call.1} parent=5 // pred_region
        %s240 = ssub.s32 %s18, 1
        %s241 = sand.u32 %s31, 1
        %s242 = scalar_lea.sflag [#allocation6], %s241
        %s243 = sand.u32 %s31, 1
        %s244 = smul.addr %s243, 48
        %s245 = scalar_lea.vmem [#allocation5], %s244
        // Predicated region
        $region41: #{tpu_custom_call.1} parent=39 // pred_check
          %p246 = pneg %p44
        $region42: #{tpu_custom_call.1} parent=39 // pred_check_branch
          %248 = sbr.rel (%p246) target = $region44
        $region43: #{tpu_custom_call.1} parent=39 // pred_region
          %249 = dma.done %s242, 768
        $region44: #{tpu_custom_call.1} parent=39 // pred_fallthru
          _
        // Predicated region
        $region45: #{tpu_custom_call.1} parent=39 // pred_check
          %p250 = pneg %p91
        $region46: #{tpu_custom_call.1} parent=39 // pred_check_branch
          %252 = sbr.rel (%p250) target = $region48
        $region47: #{tpu_custom_call.1} parent=39 // pred_region
          %253 = dma.done [#allocation9], 512
        $region48: #{tpu_custom_call.1} parent=39 // pred_fallthru
          _
        // Predicated region
        $region49: #{tpu_custom_call.1} parent=39 // pred_check
          %p254 = pneg %p112
        $region50: #{tpu_custom_call.1} parent=39 // pred_check_branch
          %256 = sbr.rel (%p254) target = $region52
        $region51: #{tpu_custom_call.1} parent=39 // pred_region
          %257 = dma.done [#allocation9], 1024
        $region52: #{tpu_custom_call.1} parent=39 // pred_fallthru
          _
        %s258 = sand.u32 %s31, 1
        %s259 = scalar_lea.sflag [#allocation6], %s258
        %s260 = sand.u32 %s31, 1
        %s261 = smul.addr %s260, 48
        %s262 = scalar_lea.vmem [#allocation5], %s261
        %p263 = pneg %p44
        %p264 = pneg %p41
        %p265 = scmp.lt.s32.totalorder %s23, 1
        %s266 = scalar_select %p265, %s23, 1
        %s267 = smul.addr %s266, 8
        %s268 = scalar_lea.vmem %s1, %s267
        %p269 = pneg %p70
        %p270 = pneg %p67
        %p271 = pneg %p91
        %p272 = pneg %p88
        %p273 = pneg %p112
        %p274 = pneg %p109
        %p275 = pneg %p133
        %p276 = pneg %p130
        %p277 = pneg %p159
        %p278 = pneg %p156
        %s279 = sand.u32 %s146, 1
        %s280 = scalar_lea.sflag [#allocation7], %s279
        %s281 = sand.u32 %s146, 1
        %s282 = smul.addr %s281, 48
        %s283 = scalar_lea.vmem [#allocation11], %s282
        %p284 = scmp.lt.s32.totalorder %s23, 1
        %s285 = scalar_select %p284, %s23, 1
        %s286 = smul.addr %s285, 8
        %s287 = scalar_lea.vmem %s1, %s286
        %v289 = vld [vmem:[%s245] sm:$0xf]
        %v290 = vld [vmem:[%s245 + $0x4] sm:$0xf]
        %v291 = vld [vmem:[%s245 + $0x8] sm:$0xf]
        %v292 = vld [vmem:[%s245 + $0xc] sm:$0xf]
        %v293 = vld [vmem:[%s245 + $0x10] sm:$0xf]
        %v294 = vld [vmem:[%s245 + $0x14] sm:$0xf]
        %v295 = vld [vmem:[%s245 + $0x18] sm:$0xf]
        %v296 = vld [vmem:[%s245 + $0x1c] sm:$0xf]
        %v297 = vld [vmem:[%s245 + $0x20] sm:$0xf]
        %v298 = vld [vmem:[%s245 + $0x24] sm:$0xf]
        %v299 = vld [vmem:[%s245 + $0x28] sm:$0xf]
        %v300 = vld [vmem:[%s245 + $0x2c] sm:$0xf]
        %v301 = vld [vmem:[#allocation8] sm:$0xff]
        %v302 = vld [vmem:[#allocation8 + $0x8] sm:$0xff]
        %v303 = vld [vmem:[#allocation8 + $0x10] sm:$0xff]
        %v304 = vld [vmem:[#allocation8 + $0x18] sm:$0xff]
        %v305 = vld [vmem:[%s4] sm:$0x3]
        %v307 = vlaneseq
        %v308 = vshrl.u32 %v307, 7
        %v309 = vsub.s32 0, %v308
        %v310 = vrot.slane %v305, %v309
        %v311 = vlaneseq
        %v312 = vshrl.u32 %v311, 7
        %v313 = vsub.s32 1, %v312
        %v314 = vrot.slane %v305, %v313
        %v329 = vunpack.c.l.b16 %v289
        %v330 = vunpack.c.l.b16 %v290
        %v331 = vunpack.c.l.b16 %v291
        %v332 = vunpack.c.l.b16 %v292
        %v333 = vunpack.c.l.b16 %v293
        %v334 = vunpack.c.l.b16 %v294
        %v335 = vunpack.c.l.b16 %v295
        %v336 = vunpack.c.l.b16 %v296
        %v337 = vunpack.c.l.b16 %v297
        %v338 = vunpack.c.l.b16 %v298
        %v339 = vunpack.c.l.b16 %v299
        %v340 = vunpack.c.l.b16 %v300
        %v341 = vpack.c.b16 %v330, %v329
        %v342 = vpack.c.b16 %v332, %v331
        %v343 = vpack.c.b16 %v334, %v333
        %v344 = vpack.c.b16 %v336, %v335
        %v345 = vpack.c.b16 %v338, %v337
        %v346 = vpack.c.b16 %v340, %v339
        %v351 = vunpack.c.l.b16 %v301
        %v352 = vunpack.c.h.b16 %v301
        %v353 = vunpack.c.l.b16 %v302
        %v354 = vunpack.c.h.b16 %v302
        %v355 = vunpack.c.l.b16 %v303
        %v356 = vunpack.c.h.b16 %v303
        %v357 = vunpack.c.l.b16 %v304
        %v358 = vunpack.c.h.b16 %v304
        %v359 = vpack.c.b16 %v353, %v351
        %v360 = vpack.c.b16 %v354, %v352
        %v361 = vpack.c.b16 %v357, %v355
        %v362 = vpack.c.b16 %v358, %v356
        %vm367 = vcmask 261120
        %v369 = vsel %vm367, %v341, 0
        %v372 = vsel %vm367, %v342, 0
        %v375 = vsel %vm367, %v343, 0
        %v378 = vsel %vm367, %v344, 0
        %v381 = vsel %vm367, %v345, 0
        %v384 = vsel %vm367, %v346, 0
        %386 = vmatprep.subr.bf16.mxu0 0
        %387 = vmatpush1.bf16.msra.mxu0 0
        %388 = vmatprep.subr.bf16.mxu0 0
        %389 = vmatpush1.bf16.msra.mxu0 0
        %390 = vmatprep.subr.bf16.mxu0 0
        %391 = vmatpush1.bf16.msra.mxu0 0
        %392 = vmatprep.subr.bf16.mxu0 0
        %393 = vmatpush1.bf16.msra.mxu0 0
        %394 = vmatprep.subr.bf16.mxu0 0
        %395 = vmatpush1.bf16.msra.mxu0 0
        %396 = vmatprep.subr.bf16.mxu0 0
        %397 = vmatpush1.bf16.msra.mxu0 0
        %398 = vmatprep.subr.bf16.mxu0 %v362
        %399 = vmatpush1.bf16.msra.mxu0 %v361
        %400 = vmatprep.subr.bf16.mxu0 %v360
        %401 = vmatpush1.bf16.msra.mxu0 %v359
        %402 = vmatprep.subr.bf16.mxu0 0
        %403 = vmatpush2.bf16.msra.mxu0 0
        %404 = vmatprep.subr.bf16.mxu0 0
        %405 = vmatpush2.bf16.msra.mxu0 0
        %406 = vmatprep.subr.bf16.mxu0 0
        %407 = vmatpush2.bf16.msra.mxu0 0
        %408 = vmatprep.subr.bf16.mxu0 0
        %409 = vmatpush2.bf16.msra.mxu0 0
        %410 = vmatprep.subr.bf16.mxu0 0
        %411 = vmatpush2.bf16.msra.mxu0 0
        %412 = vmatprep.subr.bf16.mxu0 0
        %413 = vmatpush2.bf16.msra.mxu0 0
        %414 = vmatprep.subr.bf16.mxu0 0
        %415 = vmatpush2.bf16.msra.mxu0 0
        %416 = vmatprep.subr.bf16.mxu0 0
        %417 = vmatpush2.bf16.msra.mxu0 0
        %418 = vmatprep.mubr.bf16.mxu0 0
        %419 = vmatmul.mubr.bf16.gmra.mxu0 %v369
        %v420 = vpop.f32.mrf.mxu0
        %v421 = vadd.f32 %v310, %v420
        %v422 = vpop.f32.mrf.mxu0
        %v423 = vadd.f32 %v314, %v422
        %v424 = vpop.f32.mrf.mxu0
        %v425 = vadd.f32 %v310, %v424
        %v426 = vpop.f32.mrf.mxu0
        %v427 = vadd.f32 %v314, %v426
        %428 = vmatprep.mubr.bf16.mxu0 0
        %429 = vmatmul.mubr.bf16.gmra.mxu0 %v372
        %v430 = vpop.f32.mrf.mxu0
        %v431 = vadd.f32 %v310, %v430
        %v432 = vpop.f32.mrf.mxu0
        %v433 = vadd.f32 %v314, %v432
        %v434 = vpop.f32.mrf.mxu0
        %v435 = vadd.f32 %v310, %v434
        %v436 = vpop.f32.mrf.mxu0
        %v437 = vadd.f32 %v314, %v436
        %438 = vmatprep.mubr.bf16.mxu0 0
        %439 = vmatmul.mubr.bf16.gmra.mxu0 %v375
        %v440 = vpop.f32.mrf.mxu0
        %v441 = vadd.f32 %v310, %v440
        %v442 = vpop.f32.mrf.mxu0
        %v443 = vadd.f32 %v314, %v442
        %v444 = vpop.f32.mrf.mxu0
        %v445 = vadd.f32 %v310, %v444
        %v446 = vpop.f32.mrf.mxu0
        %v447 = vadd.f32 %v314, %v446
        %448 = vmatprep.mubr.bf16.mxu0 0
        %449 = vmatmul.mubr.bf16.gmra.mxu0 %v378
        %v450 = vpop.f32.mrf.mxu0
        %v451 = vadd.f32 %v310, %v450
        %v452 = vpop.f32.mrf.mxu0
        %v453 = vadd.f32 %v314, %v452
        %v454 = vpop.f32.mrf.mxu0
        %v455 = vadd.f32 %v310, %v454
        %v456 = vpop.f32.mrf.mxu0
        %v457 = vadd.f32 %v314, %v456
        %458 = vmatprep.mubr.bf16.mxu0 0
        %459 = vmatmul.mubr.bf16.gmra.mxu0 %v381
        %v460 = vpop.f32.mrf.mxu0
        %v461 = vadd.f32 %v310, %v460
        %v462 = vpop.f32.mrf.mxu0
        %v463 = vadd.f32 %v314, %v462
        %v464 = vpop.f32.mrf.mxu0
        %v465 = vadd.f32 %v310, %v464
        %v466 = vpop.f32.mrf.mxu0
        %v467 = vadd.f32 %v314, %v466
        %468 = vmatprep.mubr.bf16.mxu0 0
        %469 = vmatmul.mubr.bf16.gmra.mxu0 %v384
        %v470 = vpop.f32.mrf.mxu0
        %v471 = vadd.f32 %v310, %v470
        %v472 = vpop.f32.mrf.mxu0
        %v473 = vadd.f32 %v314, %v472
        %v474 = vpop.f32.mrf.mxu0
        %v475 = vadd.f32 %v310, %v474
        %v476 = vpop.f32.mrf.mxu0
        %v477 = vadd.f32 %v314, %v476
        %478 = vdwg.mxu0
        %479 = vst [vmem:[#allocation2] sm:$0xff] %v421
        %480 = vst [vmem:[#allocation2 + $0x8] sm:$0xff] %v423
        %481 = vst [vmem:[#allocation2 + $0x10] sm:$0xff] %v425
        %482 = vst [vmem:[#allocation2 + $0x18] sm:$0xff] %v427
        %483 = vst [vmem:[#allocation2 + $0x20] sm:$0xff] %v431
        %484 = vst [vmem:[#allocation2 + $0x28] sm:$0xff] %v433
        %485 = vst [vmem:[#allocation2 + $0x30] sm:$0xff] %v435
        %486 = vst [vmem:[#allocation2 + $0x38] sm:$0xff] %v437
        %487 = vst [vmem:[#allocation2 + $0x40] sm:$0xff] %v441
        %488 = vst [vmem:[#allocation2 + $0x48] sm:$0xff] %v443
        %489 = vst [vmem:[#allocation2 + $0x50] sm:$0xff] %v445
        %490 = vst [vmem:[#allocation2 + $0x58] sm:$0xff] %v447
        %491 = vst [vmem:[#allocation2 + $0x60] sm:$0xff] %v451
        %492 = vst [vmem:[#allocation2 + $0x68] sm:$0xff] %v453
        %493 = vst [vmem:[#allocation2 + $0x70] sm:$0xff] %v455
        %494 = vst [vmem:[#allocation2 + $0x78] sm:$0xff] %v457
        %495 = vst [vmem:[#allocation2 + $0x80] sm:$0xff] %v461
        %496 = vst [vmem:[#allocation2 + $0x88] sm:$0xff] %v463
        %497 = vst [vmem:[#allocation2 + $0x90] sm:$0xff] %v465
        %498 = vst [vmem:[#allocation2 + $0x98] sm:$0xff] %v467
        %499 = vst [vmem:[#allocation2 + $0xa0] sm:$0xff] %v471
        %500 = vst [vmem:[#allocation2 + $0xa8] sm:$0xff] %v473
        %501 = vst [vmem:[#allocation2 + $0xb0] sm:$0xff] %v475
        %502 = vst [vmem:[#allocation2 + $0xb8] sm:$0xff] %v477
        %vm503 = vcmask 523264
        %504 = vst.msk [vmem:[#allocation3] sm:$0xff] %vm503, 0.0
        %505 = vst.msk [vmem:[#allocation4] sm:$0xff] %vm503, 0.0
        %v506 = vld [vmem:[%s287] sm:$0xff]
        %507 = vset.pattern.permute.xlu0 0
        %508 = vperm.xlu0 %507, %v506
        %v509 = vpop.permute.xlu0 %508
        %v510 = vld [vmem:[#allocation10] sm:$0xff]
        %v511 = vld [vmem:[#allocation10 + $0x8] sm:$0xff]
        %v512 = vld [vmem:[#allocation10 + $0x10] sm:$0xff]
        %v513 = vld [vmem:[#allocation10 + $0x18] sm:$0xff]
        %v514 = vld [vmem:[#allocation10 + $0x20] sm:$0xff]
        %v515 = vld [vmem:[#allocation10 + $0x28] sm:$0xff]
        %v516 = vld [vmem:[#allocation10 + $0x30] sm:$0xff]
        %v517 = vld [vmem:[#allocation10 + $0x38] sm:$0xff]
        %v518 = vld [vmem:[#allocation3] sm:$0xff]
        %v519 = vld [vmem:[#allocation4] sm:$0xff]
        %v520 = vpack.c.bf16 %v518, %v518
        %v529 = vunpack.c.l.b16 %v510
        %v530 = vunpack.c.h.b16 %v510
        %v531 = vunpack.c.l.b16 %v511
        %v532 = vunpack.c.h.b16 %v511
        %v533 = vunpack.c.l.b16 %v512
        %v534 = vunpack.c.h.b16 %v512
        %v535 = vunpack.c.l.b16 %v513
        %v536 = vunpack.c.h.b16 %v513
        %v537 = vunpack.c.l.b16 %v514
        %v538 = vunpack.c.h.b16 %v514
        %v539 = vunpack.c.l.b16 %v515
        %v540 = vunpack.c.h.b16 %v515
        %v541 = vunpack.c.l.b16 %v516
        %v542 = vunpack.c.h.b16 %v516
        %v543 = vunpack.c.l.b16 %v517
        %v544 = vunpack.c.h.b16 %v517
        %v545 = vpack.c.b16 %v531, %v529
        %v546 = vpack.c.b16 %v532, %v530
        %v547 = vpack.c.b16 %v535, %v533
        %v548 = vpack.c.b16 %v536, %v534
        %v549 = vpack.c.b16 %v539, %v537
        %v550 = vpack.c.b16 %v540, %v538
        %v551 = vpack.c.b16 %v543, %v541
        %v552 = vpack.c.b16 %v544, %v542
        %v562 = vsel %vm503, %v520, 0
        %564 = vmatprep.subr.bf16.mxu0 0
        %565 = vmatpush1.bf16.msra.mxu0 0
        %566 = vmatprep.subr.bf16.mxu0 0
        %567 = vmatpush1.bf16.msra.mxu0 0
        %568 = vmatprep.subr.bf16.mxu0 0
        %569 = vmatpush1.bf16.msra.mxu0 0
        %570 = vmatprep.subr.bf16.mxu0 0
        %571 = vmatpush1.bf16.msra.mxu0 0
        %572 = vmatprep.subr.bf16.mxu0 %v552
        %573 = vmatpush1.bf16.msra.mxu0 %v551
        %574 = vmatprep.subr.bf16.mxu0 %v550
        %575 = vmatpush1.bf16.msra.mxu0 %v549
        %576 = vmatprep.subr.bf16.mxu0 %v548
        %577 = vmatpush1.bf16.msra.mxu0 %v547
        %578 = vmatprep.subr.bf16.mxu0 %v546
        %579 = vmatpush1.bf16.msra.mxu0 %v545
        %580 = vmatprep.subr.bf16.mxu0 0
        %581 = vmatpush2.bf16.msra.mxu0 0
        %582 = vmatprep.subr.bf16.mxu0 0
        %583 = vmatpush2.bf16.msra.mxu0 0
        %584 = vmatprep.subr.bf16.mxu0 0
        %585 = vmatpush2.bf16.msra.mxu0 0
        %586 = vmatprep.subr.bf16.mxu0 0
        %587 = vmatpush2.bf16.msra.mxu0 0
        %588 = vmatprep.subr.bf16.mxu0 0
        %589 = vmatpush2.bf16.msra.mxu0 0
        %590 = vmatprep.subr.bf16.mxu0 0
        %591 = vmatpush2.bf16.msra.mxu0 0
        %592 = vmatprep.subr.bf16.mxu0 0
        %593 = vmatpush2.bf16.msra.mxu0 0
        %594 = vmatprep.subr.bf16.mxu0 0
        %595 = vmatpush2.bf16.msra.mxu0 0
        %596 = vmatprep.mubr.bf16.mxu0 0
        %597 = vmatmul.mubr.bf16.gmra.mxu0 %v562
        %v598 = vpop.f32.mrf.mxu0
        %v599 = vadd.f32 0.0, %v598
        %v600 = vpop.f32.mrf.mxu0
        %v601 = vadd.f32 0.0, %v600
        %v602 = vpop.f32.mrf.mxu0
        %v603 = vpop.f32.mrf.mxu0
        %604 = vdwg.mxu0
        %v605 = vld [vmem:[#allocation2] sm:$0xff]
        %s606 = scalar_lea.vmem [#allocation2], 176
        %v607 = vld [vmem:[%s606 + $0x8] sm:$0xff]
        %v608 = vadd.f32 %v605, %v599
        %v609 = vadd.f32 %v607, %v601
        %v610 = vmul.f32 %v608, 0.5
        %v611 = vtanh.pop %v610
        %v612 = vadd.f32 %v611, 1.0
        %v613 = vmul.f32 %v612, 0.5
        %v614 = vmul.f32 %v609, 0.5
        %v615 = vtanh.pop %v614
        %v616 = vadd.f32 %v615, 1.0
        %v617 = vmul.f32 %v616, 0.5
        %v618 = vtanh.pop %v608
        %v619 = vtanh.pop %v609
        %621 = vrot.lane.b32.xlu0 %v519, 32
        %v622 = vpop.permute.xlu0 %621
        %v624 = vmul.f32 %v613, %v622
        %626 = vrot.lane.b32.xlu0 %v618, 32
        %v627 = vpop.permute.xlu0 %626
        %v629 = vmul.f32 %v613, %v627
        %631 = vrot.lane.b32.xlu0 %v629, 32
        %v632 = vpop.permute.xlu0 %631
        %v634 = vadd.f32 %v624, %v632
        %v635 = vmul.f32 %v617, %v519
        %637 = vrot.lane.b32.xlu0 %v619, 32
        %v638 = vpop.permute.xlu0 %637
        %v640 = vmul.f32 %v617, %v638
        %642 = vrot.lane.b32.xlu0 %v640, 32
        %v643 = vpop.permute.xlu0 %642
        %v645 = vadd.f32 %v635, %v643
        %v646 = vtanh.pop %v634
        %648 = vrot.lane.b32.xlu0 %v646, 32
        %v649 = vpop.permute.xlu0 %648
        %v651 = vmul.f32 %v613, %v649
        %v652 = vtanh.pop %v645
        %654 = vrot.lane.b32.xlu0 %v652, 32
        %v655 = vpop.permute.xlu0 %654
        %v657 = vmul.f32 %v617, %v655
        %vm658 = vcmp.gt.s32.totalorder %v509, 0
        %vm659 = vcmp.gt.s32.totalorder %v509, 11
        %v660 = vsel %vm658, %v651, 0.0
        %v661 = vpack.c.bf16 %v660, %v660
        %v663 = vunpack.c.l.b16 %v661
        %v664 = vpack.c.b16 %v663, %v663
        %665 = vrot.lane.b32.xlu0 %v664, 64
        %v666 = vpop.permute.xlu0 %665
        %vm668 = vcmask 257024
        %669 = vst.msk [vmem:[%s283] sm:$0xf] %vm668, %v666
        %v670 = vsel %vm659, %v657, 0.0
        %v671 = vpack.c.bf16 %v670, %v670
        %v673 = vunpack.c.l.b16 %v671
        %v674 = vpack.c.b16 %v673, %v673
        %675 = vrot.lane.b32.xlu0 %v674, 96
        %v676 = vpop.permute.xlu0 %675
        %s678 = scalar_lea.vmem %s283, 44 [#allocation11]
        %vm679 = vcmask 519424
        %680 = vst.msk [vmem:[%s678] sm:$0xf] %vm679, %v676
        %682 = vrot.lane.b32.xlu0 %v518, 64
        %v683 = vpop.permute.xlu0 %682
        %v685 = vsel %vm658, %v651, %v683
        %687 = vrot.lane.b32.xlu0 %v685, 64
        %v688 = vpop.permute.xlu0 %687
        %690 = vst.msk [vmem:[#allocation3] sm:$0xff] %vm367, %v688
        %691 = vrot.lane.b32.xlu0 %v518, 32
        %v692 = vpop.permute.xlu0 %691
        %v694 = vsel %vm659, %v657, %v692
        %696 = vrot.lane.b32.xlu0 %v694, 96
        %v697 = vpop.permute.xlu0 %696
        %vm699 = vcmask 523520
        %700 = vst.msk [vmem:[#allocation3] sm:$0xff] %vm699, %v697
        %v701 = vsel %vm658, %v634, %v622
        %703 = vrot.lane.b32.xlu0 %v701, 96
        %v704 = vpop.permute.xlu0 %703
        %706 = vst.msk [vmem:[#allocation4] sm:$0xff] %vm367, %v704
        %v707 = vsel %vm659, %v645, %v519
        %708 = vst.msk [vmem:[#allocation4] sm:$0xff] %vm699, %v707
        %v709 = vld [vmem:[#allocation3] sm:$0xff]
        %v710 = vld [vmem:[#allocation4] sm:$0xff]
        %v711 = vpack.c.bf16 %v709, %v709
        %v713 = vsel %vm503, %v711, 0
        %715 = vmatprep.subr.bf16.mxu0 0
        %716 = vmatpush1.bf16.msra.mxu0 0
        %717 = vmatprep.subr.bf16.mxu0 0
        %718 = vmatpush1.bf16.msra.mxu0 0
        %719 = vmatprep.subr.bf16.mxu0 0
        %720 = vmatpush1.bf16.msra.mxu0 0
        %721 = vmatprep.subr.bf16.mxu0 0
        %722 = vmatpush1.bf16.msra.mxu0 0
        %723 = vmatprep.subr.bf16.mxu0 %v552
        %724 = vmatpush1.bf16.msra.mxu0 %v551
        %725 = vmatprep.subr.bf16.mxu0 %v550
        %726 = vmatpush1.bf16.msra.mxu0 %v549
        %727 = vmatprep.subr.bf16.mxu0 %v548
        %728 = vmatpush1.bf16.msra.mxu0 %v547
        %729 = vmatprep.subr.bf16.mxu0 %v546
        %730 = vmatpush1.bf16.msra.mxu0 %v545
        %731 = vmatprep.subr.bf16.mxu0 0
        %732 = vmatpush2.bf16.msra.mxu0 0
        %733 = vmatprep.subr.bf16.mxu0 0
        %734 = vmatpush2.bf16.msra.mxu0 0
        %735 = vmatprep.subr.bf16.mxu0 0
        %736 = vmatpush2.bf16.msra.mxu0 0
        %737 = vmatprep.subr.bf16.mxu0 0
        %738 = vmatpush2.bf16.msra.mxu0 0
        %739 = vmatprep.subr.bf16.mxu0 0
        %740 = vmatpush2.bf16.msra.mxu0 0
        %741 = vmatprep.subr.bf16.mxu0 0
        %742 = vmatpush2.bf16.msra.mxu0 0
        %743 = vmatprep.subr.bf16.mxu0 0
        %744 = vmatpush2.bf16.msra.mxu0 0
        %745 = vmatprep.subr.bf16.mxu0 0
        %746 = vmatpush2.bf16.msra.mxu0 0
        %747 = vmatprep.mubr.bf16.mxu0 0
        %748 = vmatmul.mubr.bf16.gmra.mxu0 %v713
        %v749 = vpop.f32.mrf.mxu0
        %v750 = vadd.f32 0.0, %v749
        %v751 = vpop.f32.mrf.mxu0
        %v752 = vadd.f32 0.0, %v751
        %v753 = vpop.f32.mrf.mxu0
        %v754 = vpop.f32.mrf.mxu0
        %755 = vdwg.mxu0
        %s756 = scalar_lea.vmem [#allocation2], 16
        %v757 = vld [vmem:[%s756] sm:$0xff]
        %s758 = scalar_lea.vmem [#allocation2], 160
        %v759 = vld [vmem:[%s758 + $0x8] sm:$0xff]
        %v760 = vadd.f32 %v757, %v750
        %v761 = vadd.f32 %v759, %v752
        %v762 = vmul.f32 %v760, 0.5
        %v763 = vtanh.pop %v762
        %v764 = vadd.f32 %v763, 1.0
        %v765 = vmul.f32 %v764, 0.5
        %v766 = vmul.f32 %v761, 0.5
        %v767 = vtanh.pop %v766
        %v768 = vadd.f32 %v767, 1.0
        %v769 = vmul.f32 %v768, 0.5
        %v770 = vtanh.pop %v760
        %v771 = vtanh.pop %v761
        %773 = vrot.lane.b32.xlu0 %v710, 32
        %v774 = vpop.permute.xlu0 %773
        %v776 = vmul.f32 %v765, %v774
        %778 = vrot.lane.b32.xlu0 %v770, 32
        %v779 = vpop.permute.xlu0 %778
        %v781 = vmul.f32 %v765, %v779
        %783 = vrot.lane.b32.xlu0 %v781, 32
        %v784 = vpop.permute.xlu0 %783
        %v786 = vadd.f32 %v776, %v784
        %v787 = vmul.f32 %v769, %v710
        %789 = vrot.lane.b32.xlu0 %v771, 32
        %v790 = vpop.permute.xlu0 %789
        %v792 = vmul.f32 %v769, %v790
        %794 = vrot.lane.b32.xlu0 %v792, 32
        %v795 = vpop.permute.xlu0 %794
        %v797 = vadd.f32 %v787, %v795
        %v798 = vtanh.pop %v786
        %800 = vrot.lane.b32.xlu0 %v798, 32
        %v801 = vpop.permute.xlu0 %800
        %v803 = vmul.f32 %v765, %v801
        %v804 = vtanh.pop %v797
        %806 = vrot.lane.b32.xlu0 %v804, 32
        %v807 = vpop.permute.xlu0 %806
        %v809 = vmul.f32 %v769, %v807
        %vm810 = vcmp.gt.s32.totalorder %v509, 1
        %vm811 = vcmp.gt.s32.totalorder %v509, 10
        %v812 = vsel %vm810, %v803, 0.0
        %v813 = vpack.c.bf16 %v812, %v812
        %v815 = vunpack.c.l.b16 %v813
        %v816 = vpack.c.b16 %v815, %v815
        %817 = vrot.lane.b32.xlu0 %v816, 64
        %v818 = vpop.permute.xlu0 %817
        %s820 = scalar_lea.vmem %s283, 4 [#allocation11]
        %821 = vst.msk [vmem:[%s820] sm:$0xf] %vm668, %v818
        %v822 = vsel %vm811, %v809, 0.0
        %v823 = vpack.c.bf16 %v822, %v822
        %v825 = vunpack.c.l.b16 %v823
        %v826 = vpack.c.b16 %v825, %v825
        %827 = vrot.lane.b32.xlu0 %v826, 96
        %v828 = vpop.permute.xlu0 %827
        %s830 = scalar_lea.vmem %s283, 40 [#allocation11]
        %831 = vst.msk [vmem:[%s830] sm:$0xf] %vm679, %v828
        %833 = vrot.lane.b32.xlu0 %v709, 64
        %v834 = vpop.permute.xlu0 %833
        %v836 = vsel %vm810, %v803, %v834
        %838 = vrot.lane.b32.xlu0 %v836, 64
        %v839 = vpop.permute.xlu0 %838
        %841 = vst.msk [vmem:[#allocation3] sm:$0xff] %vm367, %v839
        %842 = vrot.lane.b32.xlu0 %v709, 32
        %v843 = vpop.permute.xlu0 %842
        %v845 = vsel %vm811, %v809, %v843
        %847 = vrot.lane.b32.xlu0 %v845, 96
        %v848 = vpop.permute.xlu0 %847
        %850 = vst.msk [vmem:[#allocation3] sm:$0xff] %vm699, %v848
        %v851 = vsel %vm810, %v786, %v774
        %853 = vrot.lane.b32.xlu0 %v851, 96
        %v854 = vpop.permute.xlu0 %853
        %856 = vst.msk [vmem:[#allocation4] sm:$0xff] %vm367, %v854
        %v857 = vsel %vm811, %v797, %v710
        %858 = vst.msk [vmem:[#allocation4] sm:$0xff] %vm699, %v857
        %v859 = vld [vmem:[#allocation3] sm:$0xff]
        %v860 = vld [vmem:[#allocation4] sm:$0xff]
        %v861 = vpack.c.bf16 %v859, %v859
        %v863 = vsel %vm503, %v861, 0
        %865 = vmatprep.subr.bf16.mxu0 0
        %866 = vmatpush1.bf16.msra.mxu0 0
        %867 = vmatprep.subr.bf16.mxu0 0
        %868 = vmatpush1.bf16.msra.mxu0 0
        %869 = vmatprep.subr.bf16.mxu0 0
        %870 = vmatpush1.bf16.msra.mxu0 0
        %871 = vmatprep.subr.bf16.mxu0 0
        %872 = vmatpush1.bf16.msra.mxu0 0
        %873 = vmatprep.subr.bf16.mxu0 %v552
        %874 = vmatpush1.bf16.msra.mxu0 %v551
        %875 = vmatprep.subr.bf16.mxu0 %v550
        %876 = vmatpush1.bf16.msra.mxu0 %v549
        %877 = vmatprep.subr.bf16.mxu0 %v548
        %878 = vmatpush1.bf16.msra.mxu0 %v547
        %879 = vmatprep.subr.bf16.mxu0 %v546
        %880 = vmatpush1.bf16.msra.mxu0 %v545
        %881 = vmatprep.subr.bf16.mxu0 0
        %882 = vmatpush2.bf16.msra.mxu0 0
        %883 = vmatprep.subr.bf16.mxu0 0
        %884 = vmatpush2.bf16.msra.mxu0 0
        %885 = vmatprep.subr.bf16.mxu0 0
        %886 = vmatpush2.bf16.msra.mxu0 0
        %887 = vmatprep.subr.bf16.mxu0 0
        %888 = vmatpush2.bf16.msra.mxu0 0
        %889 = vmatprep.subr.bf16.mxu0 0
        %890 = vmatpush2.bf16.msra.mxu0 0
        %891 = vmatprep.subr.bf16.mxu0 0
        %892 = vmatpush2.bf16.msra.mxu0 0
        %893 = vmatprep.subr.bf16.mxu0 0
        %894 = vmatpush2.bf16.msra.mxu0 0
        %895 = vmatprep.subr.bf16.mxu0 0
        %896 = vmatpush2.bf16.msra.mxu0 0
        %897 = vmatprep.mubr.bf16.mxu0 0
        %898 = vmatmul.mubr.bf16.gmra.mxu0 %v863
        %v899 = vpop.f32.mrf.mxu0
        %v900 = vadd.f32 0.0, %v899
        %v901 = vpop.f32.mrf.mxu0
        %v902 = vadd.f32 0.0, %v901
        %v903 = vpop.f32.mrf.mxu0
        %v904 = vpop.f32.mrf.mxu0
        %905 = vdwg.mxu0
        %s906 = scalar_lea.vmem [#allocation2], 32
        %v907 = vld [vmem:[%s906] sm:$0xff]
        %s908 = scalar_lea.vmem [#allocation2], 144
        %v909 = vld [vmem:[%s908 + $0x8] sm:$0xff]
        %v910 = vadd.f32 %v907, %v900
        %v911 = vadd.f32 %v909, %v902
        %v912 = vmul.f32 %v910, 0.5
        %v913 = vtanh.pop %v912
        %v914 = vadd.f32 %v913, 1.0
        %v915 = vmul.f32 %v914, 0.5
        %v916 = vmul.f32 %v911, 0.5
        %v917 = vtanh.pop %v916
        %v918 = vadd.f32 %v917, 1.0
        %v919 = vmul.f32 %v918, 0.5
        %v920 = vtanh.pop %v910
        %v921 = vtanh.pop %v911
        %923 = vrot.lane.b32.xlu0 %v860, 32
        %v924 = vpop.permute.xlu0 %923
        %v926 = vmul.f32 %v915, %v924
        %928 = vrot.lane.b32.xlu0 %v920, 32
        %v929 = vpop.permute.xlu0 %928
        %v931 = vmul.f32 %v915, %v929
        %933 = vrot.lane.b32.xlu0 %v931, 32
        %v934 = vpop.permute.xlu0 %933
        %v936 = vadd.f32 %v926, %v934
        %v937 = vmul.f32 %v919, %v860
        %939 = vrot.lane.b32.xlu0 %v921, 32
        %v940 = vpop.permute.xlu0 %939
        %v942 = vmul.f32 %v919, %v940
        %944 = vrot.lane.b32.xlu0 %v942, 32
        %v945 = vpop.permute.xlu0 %944
        %v947 = vadd.f32 %v937, %v945
        %v948 = vtanh.pop %v936
        %950 = vrot.lane.b32.xlu0 %v948, 32
        %v951 = vpop.permute.xlu0 %950
        %v953 = vmul.f32 %v915, %v951
        %v954 = vtanh.pop %v947
        %956 = vrot.lane.b32.xlu0 %v954, 32
        %v957 = vpop.permute.xlu0 %956
        %v959 = vmul.f32 %v919, %v957
        %vm960 = vcmp.gt.s32.totalorder %v509, 2
        %vm961 = vcmp.gt.s32.totalorder %v509, 9
        %v962 = vsel %vm960, %v953, 0.0
        %v963 = vpack.c.bf16 %v962, %v962
        %v965 = vunpack.c.l.b16 %v963
        %v966 = vpack.c.b16 %v965, %v965
        %967 = vrot.lane.b32.xlu0 %v966, 64
        %v968 = vpop.permute.xlu0 %967
        %s970 = scalar_lea.vmem %s283, 8 [#allocation11]
        %971 = vst.msk [vmem:[%s970] sm:$0xf] %vm668, %v968
        %v972 = vsel %vm961, %v959, 0.0
        %v973 = vpack.c.bf16 %v972, %v972
        %v975 = vunpack.c.l.b16 %v973
        %v976 = vpack.c.b16 %v975, %v975
        %977 = vrot.lane.b32.xlu0 %v976, 96
        %v978 = vpop.permute.xlu0 %977
        %s980 = scalar_lea.vmem %s283, 36 [#allocation11]
        %981 = vst.msk [vmem:[%s980] sm:$0xf] %vm679, %v978
        %983 = vrot.lane.b32.xlu0 %v859, 64
        %v984 = vpop.permute.xlu0 %983
        %v986 = vsel %vm960, %v953, %v984
        %988 = vrot.lane.b32.xlu0 %v986, 64
        %v989 = vpop.permute.xlu0 %988
        %991 = vst.msk [vmem:[#allocation3] sm:$0xff] %vm367, %v989
        %992 = vrot.lane.b32.xlu0 %v859, 32
        %v993 = vpop.permute.xlu0 %992
        %v995 = vsel %vm961, %v959, %v993
        %997 = vrot.lane.b32.xlu0 %v995, 96
        %v998 = vpop.permute.xlu0 %997
        %1000 = vst.msk [vmem:[#allocation3] sm:$0xff] %vm699, %v998
        %v1001 = vsel %vm960, %v936, %v924
        %1003 = vrot.lane.b32.xlu0 %v1001, 96
        %v1004 = vpop.permute.xlu0 %1003
        %1006 = vst.msk [vmem:[#allocation4] sm:$0xff] %vm367, %v1004
        %v1007 = vsel %vm961, %v947, %v860
        %1008 = vst.msk [vmem:[#allocation4] sm:$0xff] %vm699, %v1007
        %v1009 = vld [vmem:[#allocation3] sm:$0xff]
        %v1010 = vld [vmem:[#allocation4] sm:$0xff]
        %v1011 = vpack.c.bf16 %v1009, %v1009
        %v1013 = vsel %vm503, %v1011, 0
        %1015 = vmatprep.subr.bf16.mxu0 0
        %1016 = vmatpush1.bf16.msra.mxu0 0
        %1017 = vmatprep.subr.bf16.mxu0 0
        %1018 = vmatpush1.bf16.msra.mxu0 0
        %1019 = vmatprep.subr.bf16.mxu0 0
        %1020 = vmatpush1.bf16.msra.mxu0 0
        %1021 = vmatprep.subr.bf16.mxu0 0
        %1022 = vmatpush1.bf16.msra.mxu0 0
        %1023 = vmatprep.subr.bf16.mxu0 %v552
        %1024 = vmatpush1.bf16.msra.mxu0 %v551
        %1025 = vmatprep.subr.bf16.mxu0 %v550
        %1026 = vmatpush1.bf16.msra.mxu0 %v549
        %1027 = vmatprep.subr.bf16.mxu0 %v548
        %1028 = vmatpush1.bf16.msra.mxu0 %v547
        %1029 = vmatprep.subr.bf16.mxu0 %v546
        %1030 = vmatpush1.bf16.msra.mxu0 %v545
        %1031 = vmatprep.subr.bf16.mxu0 0
        %1032 = vmatpush2.bf16.msra.mxu0 0
        %1033 = vmatprep.subr.bf16.mxu0 0
        %1034 = vmatpush2.bf16.msra.mxu0 0
        %1035 = vmatprep.subr.bf16.mxu0 0
        %1036 = vmatpush2.bf16.msra.mxu0 0
        %1037 = vmatprep.subr.bf16.mxu0 0
        %1038 = vmatpush2.bf16.msra.mxu0 0
        %1039 = vmatprep.subr.bf16.mxu0 0
        %1040 = vmatpush2.bf16.msra.mxu0 0
        %1041 = vmatprep.subr.bf16.mxu0 0
        %1042 = vmatpush2.bf16.msra.mxu0 0
        %1043 = vmatprep.subr.bf16.mxu0 0
        %1044 = vmatpush2.bf16.msra.mxu0 0
        %1045 = vmatprep.subr.bf16.mxu0 0
        %1046 = vmatpush2.bf16.msra.mxu0 0
        %1047 = vmatprep.mubr.bf16.mxu0 0
        %1048 = vmatmul.mubr.bf16.gmra.mxu0 %v1013
        %v1049 = vpop.f32.mrf.mxu0
        %v1050 = vadd.f32 0.0, %v1049
        %v1051 = vpop.f32.mrf.mxu0
        %v1052 = vadd.f32 0.0, %v1051
        %v1053 = vpop.f32.mrf.mxu0
        %v1054 = vpop.f32.mrf.mxu0
        %1055 = vdwg.mxu0
        %s1056 = scalar_lea.vmem [#allocation2], 48
        %v1057 = vld [vmem:[%s1056] sm:$0xff]
        %s1058 = scalar_lea.vmem [#allocation2], 128
        %v1059 = vld [vmem:[%s1058 + $0x8] sm:$0xff]
        %v1060 = vadd.f32 %v1057, %v1050
        %v1061 = vadd.f32 %v1059, %v1052
        %v1062 = vmul.f32 %v1060, 0.5
        %v1063 = vtanh.pop %v1062
        %v1064 = vadd.f32 %v1063, 1.0
        %v1065 = vmul.f32 %v1064, 0.5
        %v1066 = vmul.f32 %v1061, 0.5
        %v1067 = vtanh.pop %v1066
        %v1068 = vadd.f32 %v1067, 1.0
        %v1069 = vmul.f32 %v1068, 0.5
        %v1070 = vtanh.pop %v1060
        %v1071 = vtanh.pop %v1061
        %1073 = vrot.lane.b32.xlu0 %v1010, 32
        %v1074 = vpop.permute.xlu0 %1073
        %v1076 = vmul.f32 %v1065, %v1074
        %1078 = vrot.lane.b32.xlu0 %v1070, 32
        %v1079 = vpop.permute.xlu0 %1078
        %v1081 = vmul.f32 %v1065, %v1079
        %1083 = vrot.lane.b32.xlu0 %v1081, 32
        %v1084 = vpop.permute.xlu0 %1083
        %v1086 = vadd.f32 %v1076, %v1084
        %v1087 = vmul.f32 %v1069, %v1010
        %1089 = vrot.lane.b32.xlu0 %v1071, 32
        %v1090 = vpop.permute.xlu0 %1089
        %v1092 = vmul.f32 %v1069, %v1090
        %1094 = vrot.lane.b32.xlu0 %v1092, 32
        %v1095 = vpop.permute.xlu0 %1094
        %v1097 = vadd.f32 %v1087, %v1095
        %v1098 = vtanh.pop %v1086
        %1100 = vrot.lane.b32.xlu0 %v1098, 32
        %v1101 = vpop.permute.xlu0 %1100
        %v1103 = vmul.f32 %v1065, %v1101
        %v1104 = vtanh.pop %v1097
        %1106 = vrot.lane.b32.xlu0 %v1104, 32
        %v1107 = vpop.permute.xlu0 %1106
        %v1109 = vmul.f32 %v1069, %v1107
        %vm1110 = vcmp.gt.s32.totalorder %v509, 3
        %vm1111 = vcmp.gt.s32.totalorder %v509, 8
        %v1112 = vsel %vm1110, %v1103, 0.0
        %v1113 = vpack.c.bf16 %v1112, %v1112
        %v1115 = vunpack.c.l.b16 %v1113
        %v1116 = vpack.c.b16 %v1115, %v1115
        %1117 = vrot.lane.b32.xlu0 %v1116, 64
        %v1118 = vpop.permute.xlu0 %1117
        %s1120 = scalar_lea.vmem %s283, 12 [#allocation11]
        %1121 = vst.msk [vmem:[%s1120] sm:$0xf] %vm668, %v1118
        %v1122 = vsel %vm1111, %v1109, 0.0
        %v1123 = vpack.c.bf16 %v1122, %v1122
        %v1125 = vunpack.c.l.b16 %v1123
        %v1126 = vpack.c.b16 %v1125, %v1125
        %1127 = vrot.lane.b32.xlu0 %v1126, 96
        %v1128 = vpop.permute.xlu0 %1127
        %s1130 = scalar_lea.vmem %s283, 32 [#allocation11]
        %1131 = vst.msk [vmem:[%s1130] sm:$0xf] %vm679, %v1128
        %1133 = vrot.lane.b32.xlu0 %v1009, 64
        %v1134 = vpop.permute.xlu0 %1133
        %v1136 = vsel %vm1110, %v1103, %v1134
        %1138 = vrot.lane.b32.xlu0 %v1136, 64
        %v1139 = vpop.permute.xlu0 %1138
        %1141 = vst.msk [vmem:[#allocation3] sm:$0xff] %vm367, %v1139
        %1142 = vrot.lane.b32.xlu0 %v1009, 32
        %v1143 = vpop.permute.xlu0 %1142
        %v1145 = vsel %vm1111, %v1109, %v1143
        %1147 = vrot.lane.b32.xlu0 %v1145, 96
        %v1148 = vpop.permute.xlu0 %1147
        %1150 = vst.msk [vmem:[#allocation3] sm:$0xff] %vm699, %v1148
        %v1151 = vsel %vm1110, %v1086, %v1074
        %1153 = vrot.lane.b32.xlu0 %v1151, 96
        %v1154 = vpop.permute.xlu0 %1153
        %1156 = vst.msk [vmem:[#allocation4] sm:$0xff] %vm367, %v1154
        %v1157 = vsel %vm1111, %v1097, %v1010
        %1158 = vst.msk [vmem:[#allocation4] sm:$0xff] %vm699, %v1157
        %v1159 = vld [vmem:[#allocation3] sm:$0xff]
        %v1160 = vld [vmem:[#allocation4] sm:$0xff]
        %v1161 = vpack.c.bf16 %v1159, %v1159
        %v1163 = vsel %vm503, %v1161, 0
        %1165 = vmatprep.subr.bf16.mxu0 0
        %1166 = vmatpush1.bf16.msra.mxu0 0
        %1167 = vmatprep.subr.bf16.mxu0 0
        %1168 = vmatpush1.bf16.msra.mxu0 0
        %1169 = vmatprep.subr.bf16.mxu0 0
        %1170 = vmatpush1.bf16.msra.mxu0 0
        %1171 = vmatprep.subr.bf16.mxu0 0
        %1172 = vmatpush1.bf16.msra.mxu0 0
        %1173 = vmatprep.subr.bf16.mxu0 %v552
        %1174 = vmatpush1.bf16.msra.mxu0 %v551
        %1175 = vmatprep.subr.bf16.mxu0 %v550
        %1176 = vmatpush1.bf16.msra.mxu0 %v549
        %1177 = vmatprep.subr.bf16.mxu0 %v548
        %1178 = vmatpush1.bf16.msra.mxu0 %v547
        %1179 = vmatprep.subr.bf16.mxu0 %v546
        %1180 = vmatpush1.bf16.msra.mxu0 %v545
        %1181 = vmatprep.subr.bf16.mxu0 0
        %1182 = vmatpush2.bf16.msra.mxu0 0
        %1183 = vmatprep.subr.bf16.mxu0 0
        %1184 = vmatpush2.bf16.msra.mxu0 0
        %1185 = vmatprep.subr.bf16.mxu0 0
        %1186 = vmatpush2.bf16.msra.mxu0 0
        %1187 = vmatprep.subr.bf16.mxu0 0
        %1188 = vmatpush2.bf16.msra.mxu0 0
        %1189 = vmatprep.subr.bf16.mxu0 0
        %1190 = vmatpush2.bf16.msra.mxu0 0
        %1191 = vmatprep.subr.bf16.mxu0 0
        %1192 = vmatpush2.bf16.msra.mxu0 0
        %1193 = vmatprep.subr.bf16.mxu0 0
        %1194 = vmatpush2.bf16.msra.mxu0 0
        %1195 = vmatprep.subr.bf16.mxu0 0
        %1196 = vmatpush2.bf16.msra.mxu0 0
        %1197 = vmatprep.mubr.bf16.mxu0 0
        %1198 = vmatmul.mubr.bf16.gmra.mxu0 %v1163
        %v1199 = vpop.f32.mrf.mxu0
        %v1200 = vadd.f32 0.0, %v1199
        %v1201 = vpop.f32.mrf.mxu0
        %v1202 = vadd.f32 0.0, %v1201
        %v1203 = vpop.f32.mrf.mxu0
        %v1204 = vpop.f32.mrf.mxu0
        %1205 = vdwg.mxu0
        %s1206 = scalar_lea.vmem [#allocation2], 64
        %v1207 = vld [vmem:[%s1206] sm:$0xff]
        %s1208 = scalar_lea.vmem [#allocation2], 112
        %v1209 = vld [vmem:[%s1208 + $0x8] sm:$0xff]
        %v1210 = vadd.f32 %v1207, %v1200
        %v1211 = vadd.f32 %v1209, %v1202
        %v1212 = vmul.f32 %v1210, 0.5
        %v1213 = vtanh.pop %v1212
        %v1214 = vadd.f32 %v1213, 1.0
        %v1215 = vmul.f32 %v1214, 0.5
        %v1216 = vmul.f32 %v1211, 0.5
        %v1217 = vtanh.pop %v1216
        %v1218 = vadd.f32 %v1217, 1.0
        %v1219 = vmul.f32 %v1218, 0.5
        %v1220 = vtanh.pop %v1210
        %v1221 = vtanh.pop %v1211
        %1223 = vrot.lane.b32.xlu0 %v1160, 32
        %v1224 = vpop.permute.xlu0 %1223
        %v1226 = vmul.f32 %v1215, %v1224
        %1228 = vrot.lane.b32.xlu0 %v1220, 32
        %v1229 = vpop.permute.xlu0 %1228
        %v1231 = vmul.f32 %v1215, %v1229
        %1233 = vrot.lane.b32.xlu0 %v1231, 32
        %v1234 = vpop.permute.xlu0 %1233
        %v1236 = vadd.f32 %v1226, %v1234
        %v1237 = vmul.f32 %v1219, %v1160
        %1239 = vrot.lane.b32.xlu0 %v1221, 32
        %v1240 = vpop.permute.xlu0 %1239
        %v1242 = vmul.f32 %v1219, %v1240
        %1244 = vrot.lane.b32.xlu0 %v1242, 32
        %v1245 = vpop.permute.xlu0 %1244
        %v1247 = vadd.f32 %v1237, %v1245
        %v1248 = vtanh.pop %v1236
        %1250 = vrot.lane.b32.xlu0 %v1248, 32
        %v1251 = vpop.permute.xlu0 %1250
        %v1253 = vmul.f32 %v1215, %v1251
        %v1254 = vtanh.pop %v1247
        %1256 = vrot.lane.b32.xlu0 %v1254, 32
        %v1257 = vpop.permute.xlu0 %1256
        %v1259 = vmul.f32 %v1219, %v1257
        %vm1260 = vcmp.gt.s32.totalorder %v509, 4
        %vm1261 = vcmp.gt.s32.totalorder %v509, 7
        %v1262 = vsel %vm1260, %v1253, 0.0
        %v1263 = vpack.c.bf16 %v1262, %v1262
        %v1265 = vunpack.c.l.b16 %v1263
        %v1266 = vpack.c.b16 %v1265, %v1265
        %1267 = vrot.lane.b32.xlu0 %v1266, 64
        %v1268 = vpop.permute.xlu0 %1267
        %s1270 = scalar_lea.vmem %s283, 16 [#allocation11]
        %1271 = vst.msk [vmem:[%s1270] sm:$0xf] %vm668, %v1268
        %v1272 = vsel %vm1261, %v1259, 0.0
        %v1273 = vpack.c.bf16 %v1272, %v1272
        %v1275 = vunpack.c.l.b16 %v1273
        %v1276 = vpack.c.b16 %v1275, %v1275
        %1277 = vrot.lane.b32.xlu0 %v1276, 96
        %v1278 = vpop.permute.xlu0 %1277
        %s1280 = scalar_lea.vmem %s283, 28 [#allocation11]
        %1281 = vst.msk [vmem:[%s1280] sm:$0xf] %vm679, %v1278
        %1283 = vrot.lane.b32.xlu0 %v1159, 64
        %v1284 = vpop.permute.xlu0 %1283
        %v1286 = vsel %vm1260, %v1253, %v1284
        %1288 = vrot.lane.b32.xlu0 %v1286, 64
        %v1289 = vpop.permute.xlu0 %1288
        %1291 = vst.msk [vmem:[#allocation3] sm:$0xff] %vm367, %v1289
        %1292 = vrot.lane.b32.xlu0 %v1159, 32
        %v1293 = vpop.permute.xlu0 %1292
        %v1295 = vsel %vm1261, %v1259, %v1293
        %1297 = vrot.lane.b32.xlu0 %v1295, 96
        %v1298 = vpop.permute.xlu0 %1297
        %1300 = vst.msk [vmem:[#allocation3] sm:$0xff] %vm699, %v1298
        %v1301 = vsel %vm1260, %v1236, %v1224
        %1303 = vrot.lane.b32.xlu0 %v1301, 96
        %v1304 = vpop.permute.xlu0 %1303
        %1306 = vst.msk [vmem:[#allocation4] sm:$0xff] %vm367, %v1304
        %v1307 = vsel %vm1261, %v1247, %v1160
        %1308 = vst.msk [vmem:[#allocation4] sm:$0xff] %vm699, %v1307
        %v1309 = vld [vmem:[#allocation3] sm:$0xff]
        %v1310 = vld [vmem:[#allocation4] sm:$0xff]
        %v1311 = vpack.c.bf16 %v1309, %v1309
        %v1313 = vsel %vm503, %v1311, 0
        %1315 = vmatprep.subr.bf16.mxu0 0
        %1316 = vmatpush1.bf16.msra.mxu0 0
        %1317 = vmatprep.subr.bf16.mxu0 0
        %1318 = vmatpush1.bf16.msra.mxu0 0
        %1319 = vmatprep.subr.bf16.mxu0 0
        %1320 = vmatpush1.bf16.msra.mxu0 0
        %1321 = vmatprep.subr.bf16.mxu0 0
        %1322 = vmatpush1.bf16.msra.mxu0 0
        %1323 = vmatprep.subr.bf16.mxu0 %v552
        %1324 = vmatpush1.bf16.msra.mxu0 %v551
        %1325 = vmatprep.subr.bf16.mxu0 %v550
        %1326 = vmatpush1.bf16.msra.mxu0 %v549
        %1327 = vmatprep.subr.bf16.mxu0 %v548
        %1328 = vmatpush1.bf16.msra.mxu0 %v547
        %1329 = vmatprep.subr.bf16.mxu0 %v546
        %1330 = vmatpush1.bf16.msra.mxu0 %v545
        %1331 = vmatprep.subr.bf16.mxu0 0
        %1332 = vmatpush2.bf16.msra.mxu0 0
        %1333 = vmatprep.subr.bf16.mxu0 0
        %1334 = vmatpush2.bf16.msra.mxu0 0
        %1335 = vmatprep.subr.bf16.mxu0 0
        %1336 = vmatpush2.bf16.msra.mxu0 0
        %1337 = vmatprep.subr.bf16.mxu0 0
        %1338 = vmatpush2.bf16.msra.mxu0 0
        %1339 = vmatprep.subr.bf16.mxu0 0
        %1340 = vmatpush2.bf16.msra.mxu0 0
        %1341 = vmatprep.subr.bf16.mxu0 0
        %1342 = vmatpush2.bf16.msra.mxu0 0
        %1343 = vmatprep.subr.bf16.mxu0 0
        %1344 = vmatpush2.bf16.msra.mxu0 0
        %1345 = vmatprep.subr.bf16.mxu0 0
        %1346 = vmatpush2.bf16.msra.mxu0 0
        %1347 = vmatprep.mubr.bf16.mxu0 0
        %1348 = vmatmul.mubr.bf16.gmra.mxu0 %v1313
        %v1349 = vpop.f32.mrf.mxu0
        %v1350 = vadd.f32 0.0, %v1349
        %v1351 = vpop.f32.mrf.mxu0
        %v1352 = vadd.f32 0.0, %v1351
        %v1353 = vpop.f32.mrf.mxu0
        %v1354 = vpop.f32.mrf.mxu0
        %1355 = vdwg.mxu0
        %s1356 = scalar_lea.vmem [#allocation2], 80
        %v1357 = vld [vmem:[%s1356] sm:$0xff]
        %s1358 = scalar_lea.vmem [#allocation2], 96
        %v1359 = vld [vmem:[%s1358 + $0x8] sm:$0xff]
        %v1360 = vadd.f32 %v1357, %v1350
        %v1361 = vadd.f32 %v1359, %v1352
        %v1362 = vmul.f32 %v1360, 0.5
        %v1363 = vtanh.pop %v1362
        %v1364 = vadd.f32 %v1363, 1.0
        %v1365 = vmul.f32 %v1364, 0.5
        %v1366 = vmul.f32 %v1361, 0.5
        %v1367 = vtanh.pop %v1366
        %v1368 = vadd.f32 %v1367, 1.0
        %v1369 = vmul.f32 %v1368, 0.5
        %v1370 = vtanh.pop %v1360
        %v1371 = vtanh.pop %v1361
        %1373 = vrot.lane.b32.xlu0 %v1310, 32
        %v1374 = vpop.permute.xlu0 %1373
        %v1376 = vmul.f32 %v1365, %v1374
        %1378 = vrot.lane.b32.xlu0 %v1370, 32
        %v1379 = vpop.permute.xlu0 %1378
        %v1381 = vmul.f32 %v1365, %v1379
        %1383 = vrot.lane.b32.xlu0 %v1381, 32
        %v1384 = vpop.permute.xlu0 %1383
        %v1386 = vadd.f32 %v1376, %v1384
        %v1387 = vmul.f32 %v1369, %v1310
        %1389 = vrot.lane.b32.xlu0 %v1371, 32
        %v1390 = vpop.permute.xlu0 %1389
        %v1392 = vmul.f32 %v1369, %v1390
        %1394 = vrot.lane.b32.xlu0 %v1392, 32
        %v1395 = vpop.permute.xlu0 %1394
        %v1397 = vadd.f32 %v1387, %v1395
        %v1398 = vtanh.pop %v1386
        %1400 = vrot.lane.b32.xlu0 %v1398, 32
        %v1401 = vpop.permute.xlu0 %1400
        %v1403 = vmul.f32 %v1365, %v1401
        %v1404 = vtanh.pop %v1397
        %1406 = vrot.lane.b32.xlu0 %v1404, 32
        %v1407 = vpop.permute.xlu0 %1406
        %v1409 = vmul.f32 %v1369, %v1407
        %vm1410 = vcmp.gt.s32.totalorder %v509, 5
        %vm1411 = vcmp.gt.s32.totalorder %v509, 6
        %v1412 = vsel %vm1410, %v1403, 0.0
        %v1413 = vpack.c.bf16 %v1412, %v1412
        %v1415 = vunpack.c.l.b16 %v1413
        %v1416 = vpack.c.b16 %v1415, %v1415
        %1417 = vrot.lane.b32.xlu0 %v1416, 64
        %v1418 = vpop.permute.xlu0 %1417
        %s1420 = scalar_lea.vmem %s283, 20 [#allocation11]
        %1421 = vst.msk [vmem:[%s1420] sm:$0xf] %vm668, %v1418
        %v1422 = vsel %vm1411, %v1409, 0.0
        %v1423 = vpack.c.bf16 %v1422, %v1422
        %v1425 = vunpack.c.l.b16 %v1423
        %v1426 = vpack.c.b16 %v1425, %v1425
        %1427 = vrot.lane.b32.xlu0 %v1426, 96
        %v1428 = vpop.permute.xlu0 %1427
        %s1430 = scalar_lea.vmem %s283, 24 [#allocation11]
        %1431 = vst.msk [vmem:[%s1430] sm:$0xf] %vm679, %v1428
        %1433 = vrot.lane.b32.xlu0 %v1309, 64
        %v1434 = vpop.permute.xlu0 %1433
        %v1436 = vsel %vm1410, %v1403, %v1434
        %1438 = vrot.lane.b32.xlu0 %v1436, 64
        %v1439 = vpop.permute.xlu0 %1438
        %1441 = vst.msk [vmem:[#allocation3] sm:$0xff] %vm367, %v1439
        %1442 = vrot.lane.b32.xlu0 %v1309, 32
        %v1443 = vpop.permute.xlu0 %1442
        %v1445 = vsel %vm1411, %v1409, %v1443
        %1447 = vrot.lane.b32.xlu0 %v1445, 96
        %v1448 = vpop.permute.xlu0 %1447
        %1450 = vst.msk [vmem:[#allocation3] sm:$0xff] %vm699, %v1448
        %v1451 = vsel %vm1410, %v1386, %v1374
        %1453 = vrot.lane.b32.xlu0 %v1451, 96
        %v1454 = vpop.permute.xlu0 %1453
        %1456 = vst.msk [vmem:[#allocation4] sm:$0xff] %vm367, %v1454
        %v1457 = vsel %vm1411, %v1397, %v1310
        %1458 = vst.msk [vmem:[#allocation4] sm:$0xff] %vm699, %v1457
        %v1459 = vld [vmem:[#allocation3] sm:$0xff]
        %v1460 = vld [vmem:[#allocation4] sm:$0xff]
        %v1461 = vpack.c.bf16 %v1459, %v1459
        %v1463 = vsel %vm503, %v1461, 0
        %1465 = vmatprep.subr.bf16.mxu0 0
        %1466 = vmatpush1.bf16.msra.mxu0 0
        %1467 = vmatprep.subr.bf16.mxu0 0
        %1468 = vmatpush1.bf16.msra.mxu0 0
        %1469 = vmatprep.subr.bf16.mxu0 0
        %1470 = vmatpush1.bf16.msra.mxu0 0
        %1471 = vmatprep.subr.bf16.mxu0 0
        %1472 = vmatpush1.bf16.msra.mxu0 0
        %1473 = vmatprep.subr.bf16.mxu0 %v552
        %1474 = vmatpush1.bf16.msra.mxu0 %v551
        %1475 = vmatprep.subr.bf16.mxu0 %v550
        %1476 = vmatpush1.bf16.msra.mxu0 %v549
        %1477 = vmatprep.subr.bf16.mxu0 %v548
        %1478 = vmatpush1.bf16.msra.mxu0 %v547
        %1479 = vmatprep.subr.bf16.mxu0 %v546
        %1480 = vmatpush1.bf16.msra.mxu0 %v545
        %1481 = vmatprep.subr.bf16.mxu0 0
        %1482 = vmatpush2.bf16.msra.mxu0 0
        %1483 = vmatprep.subr.bf16.mxu0 0
        %1484 = vmatpush2.bf16.msra.mxu0 0
        %1485 = vmatprep.subr.bf16.mxu0 0
        %1486 = vmatpush2.bf16.msra.mxu0 0
        %1487 = vmatprep.subr.bf16.mxu0 0
        %1488 = vmatpush2.bf16.msra.mxu0 0
        %1489 = vmatprep.subr.bf16.mxu0 0
        %1490 = vmatpush2.bf16.msra.mxu0 0
        %1491 = vmatprep.subr.bf16.mxu0 0
        %1492 = vmatpush2.bf16.msra.mxu0 0
        %1493 = vmatprep.subr.bf16.mxu0 0
        %1494 = vmatpush2.bf16.msra.mxu0 0
        %1495 = vmatprep.subr.bf16.mxu0 0
        %1496 = vmatpush2.bf16.msra.mxu0 0
        %1497 = vmatprep.mubr.bf16.mxu0 0
        %1498 = vmatmul.mubr.bf16.gmra.mxu0 %v1463
        %v1499 = vpop.f32.mrf.mxu0
        %v1500 = vadd.f32 0.0, %v1499
        %v1501 = vpop.f32.mrf.mxu0
        %v1502 = vadd.f32 0.0, %v1501
        %v1503 = vpop.f32.mrf.mxu0
        %v1504 = vpop.f32.mrf.mxu0
        %1505 = vdwg.mxu0
        %v1506 = vld [vmem:[%s1358] sm:$0xff]
        %v1507 = vld [vmem:[%s1356 + $0x8] sm:$0xff]
        %v1508 = vadd.f32 %v1506, %v1500
        %v1509 = vadd.f32 %v1507, %v1502
        %v1510 = vmul.f32 %v1508, 0.5
        %v1511 = vtanh.pop %v1510
        %v1512 = vadd.f32 %v1511, 1.0
        %v1513 = vmul.f32 %v1512, 0.5
        %v1514 = vmul.f32 %v1509, 0.5
        %v1515 = vtanh.pop %v1514
        %v1516 = vadd.f32 %v1515, 1.0
        %v1517 = vmul.f32 %v1516, 0.5
        %v1518 = vtanh.pop %v1508
        %v1519 = vtanh.pop %v1509
        %1521 = vrot.lane.b32.xlu0 %v1460, 32
        %v1522 = vpop.permute.xlu0 %1521
        %v1524 = vmul.f32 %v1513, %v1522
        %1526 = vrot.lane.b32.xlu0 %v1518, 32
        %v1527 = vpop.permute.xlu0 %1526
        %v1529 = vmul.f32 %v1513, %v1527
        %1531 = vrot.lane.b32.xlu0 %v1529, 32
        %v1532 = vpop.permute.xlu0 %1531
        %v1534 = vadd.f32 %v1524, %v1532
        %v1535 = vmul.f32 %v1517, %v1460
        %1537 = vrot.lane.b32.xlu0 %v1519, 32
        %v1538 = vpop.permute.xlu0 %1537
        %v1540 = vmul.f32 %v1517, %v1538
        %1542 = vrot.lane.b32.xlu0 %v1540, 32
        %v1543 = vpop.permute.xlu0 %1542
        %v1545 = vadd.f32 %v1535, %v1543
        %v1546 = vtanh.pop %v1534
        %1548 = vrot.lane.b32.xlu0 %v1546, 32
        %v1549 = vpop.permute.xlu0 %1548
        %v1551 = vmul.f32 %v1513, %v1549
        %v1552 = vtanh.pop %v1545
        %1554 = vrot.lane.b32.xlu0 %v1552, 32
        %v1555 = vpop.permute.xlu0 %1554
        %v1557 = vmul.f32 %v1517, %v1555
        %v1558 = vsel %vm1411, %v1551, 0.0
        %v1559 = vpack.c.bf16 %v1558, %v1558
        %v1561 = vunpack.c.l.b16 %v1559
        %v1562 = vpack.c.b16 %v1561, %v1561
        %1563 = vrot.lane.b32.xlu0 %v1562, 64
        %v1564 = vpop.permute.xlu0 %1563
        %1566 = vst.msk [vmem:[%s1430] sm:$0xf] %vm668, %v1564
        %v1567 = vsel %vm1410, %v1557, 0.0
        %v1568 = vpack.c.bf16 %v1567, %v1567
        %v1570 = vunpack.c.l.b16 %v1568
        %v1571 = vpack.c.b16 %v1570, %v1570
        %1572 = vrot.lane.b32.xlu0 %v1571, 96
        %v1573 = vpop.permute.xlu0 %1572
        %1575 = vst.msk [vmem:[%s1420] sm:$0xf] %vm679, %v1573
        %1577 = vrot.lane.b32.xlu0 %v1459, 64
        %v1578 = vpop.permute.xlu0 %1577
        %v1580 = vsel %vm1411, %v1551, %v1578
        %1582 = vrot.lane.b32.xlu0 %v1580, 64
        %v1583 = vpop.permute.xlu0 %1582
        %1585 = vst.msk [vmem:[#allocation3] sm:$0xff] %vm367, %v1583
        %1586 = vrot.lane.b32.xlu0 %v1459, 32
        %v1587 = vpop.permute.xlu0 %1586
        %v1589 = vsel %vm1410, %v1557, %v1587
        %1591 = vrot.lane.b32.xlu0 %v1589, 96
        %v1592 = vpop.permute.xlu0 %1591
        %1594 = vst.msk [vmem:[#allocation3] sm:$0xff] %vm699, %v1592
        %v1595 = vsel %vm1411, %v1534, %v1522
        %1597 = vrot.lane.b32.xlu0 %v1595, 96
        %v1598 = vpop.permute.xlu0 %1597
        %1600 = vst.msk [vmem:[#allocation4] sm:$0xff] %vm367, %v1598
        %v1601 = vsel %vm1410, %v1545, %v1460
        %1602 = vst.msk [vmem:[#allocation4] sm:$0xff] %vm699, %v1601
        %v1603 = vld [vmem:[#allocation3] sm:$0xff]
        %v1604 = vld [vmem:[#allocation4] sm:$0xff]
        %v1605 = vpack.c.bf16 %v1603, %v1603
        %v1607 = vsel %vm503, %v1605, 0
        %1609 = vmatprep.subr.bf16.mxu0 0
        %1610 = vmatpush1.bf16.msra.mxu0 0
        %1611 = vmatprep.subr.bf16.mxu0 0
        %1612 = vmatpush1.bf16.msra.mxu0 0
        %1613 = vmatprep.subr.bf16.mxu0 0
        %1614 = vmatpush1.bf16.msra.mxu0 0
        %1615 = vmatprep.subr.bf16.mxu0 0
        %1616 = vmatpush1.bf16.msra.mxu0 0
        %1617 = vmatprep.subr.bf16.mxu0 %v552
        %1618 = vmatpush1.bf16.msra.mxu0 %v551
        %1619 = vmatprep.subr.bf16.mxu0 %v550
        %1620 = vmatpush1.bf16.msra.mxu0 %v549
        %1621 = vmatprep.subr.bf16.mxu0 %v548
        %1622 = vmatpush1.bf16.msra.mxu0 %v547
        %1623 = vmatprep.subr.bf16.mxu0 %v546
        %1624 = vmatpush1.bf16.msra.mxu0 %v545
        %1625 = vmatprep.subr.bf16.mxu0 0
        %1626 = vmatpush2.bf16.msra.mxu0 0
        %1627 = vmatprep.subr.bf16.mxu0 0
        %1628 = vmatpush2.bf16.msra.mxu0 0
        %1629 = vmatprep.subr.bf16.mxu0 0
        %1630 = vmatpush2.bf16.msra.mxu0 0
        %1631 = vmatprep.subr.bf16.mxu0 0
        %1632 = vmatpush2.bf16.msra.mxu0 0
        %1633 = vmatprep.subr.bf16.mxu0 0
        %1634 = vmatpush2.bf16.msra.mxu0 0
        %1635 = vmatprep.subr.bf16.mxu0 0
        %1636 = vmatpush2.bf16.msra.mxu0 0
        %1637 = vmatprep.subr.bf16.mxu0 0
        %1638 = vmatpush2.bf16.msra.mxu0 0
        %1639 = vmatprep.subr.bf16.mxu0 0
        %1640 = vmatpush2.bf16.msra.mxu0 0
        %1641 = vmatprep.mubr.bf16.mxu0 0
        %1642 = vmatmul.mubr.bf16.gmra.mxu0 %v1607
        %v1643 = vpop.f32.mrf.mxu0
        %v1644 = vadd.f32 0.0, %v1643
        %v1645 = vpop.f32.mrf.mxu0
        %v1646 = vadd.f32 0.0, %v1645
        %v1647 = vpop.f32.mrf.mxu0
        %v1648 = vpop.f32.mrf.mxu0
        %1649 = vdwg.mxu0
        %v1650 = vld [vmem:[%s1208] sm:$0xff]
        %v1651 = vld [vmem:[%s1206 + $0x8] sm:$0xff]
        %v1652 = vadd.f32 %v1650, %v1644
        %v1653 = vadd.f32 %v1651, %v1646
        %v1654 = vmul.f32 %v1652, 0.5
        %v1655 = vtanh.pop %v1654
        %v1656 = vadd.f32 %v1655, 1.0
        %v1657 = vmul.f32 %v1656, 0.5
        %v1658 = vmul.f32 %v1653, 0.5
        %v1659 = vtanh.pop %v1658
        %v1660 = vadd.f32 %v1659, 1.0
        %v1661 = vmul.f32 %v1660, 0.5
        %v1662 = vtanh.pop %v1652
        %v1663 = vtanh.pop %v1653
        %1665 = vrot.lane.b32.xlu0 %v1604, 32
        %v1666 = vpop.permute.xlu0 %1665
        %v1668 = vmul.f32 %v1657, %v1666
        %1670 = vrot.lane.b32.xlu0 %v1662, 32
        %v1671 = vpop.permute.xlu0 %1670
        %v1673 = vmul.f32 %v1657, %v1671
        %1675 = vrot.lane.b32.xlu0 %v1673, 32
        %v1676 = vpop.permute.xlu0 %1675
        %v1678 = vadd.f32 %v1668, %v1676
        %v1679 = vmul.f32 %v1661, %v1604
        %1681 = vrot.lane.b32.xlu0 %v1663, 32
        %v1682 = vpop.permute.xlu0 %1681
        %v1684 = vmul.f32 %v1661, %v1682
        %1686 = vrot.lane.b32.xlu0 %v1684, 32
        %v1687 = vpop.permute.xlu0 %1686
        %v1689 = vadd.f32 %v1679, %v1687
        %v1690 = vtanh.pop %v1678
        %1692 = vrot.lane.b32.xlu0 %v1690, 32
        %v1693 = vpop.permute.xlu0 %1692
        %v1695 = vmul.f32 %v1657, %v1693
        %v1696 = vtanh.pop %v1689
        %1698 = vrot.lane.b32.xlu0 %v1696, 32
        %v1699 = vpop.permute.xlu0 %1698
        %v1701 = vmul.f32 %v1661, %v1699
        %v1702 = vsel %vm1261, %v1695, 0.0
        %v1703 = vpack.c.bf16 %v1702, %v1702
        %v1705 = vunpack.c.l.b16 %v1703
        %v1706 = vpack.c.b16 %v1705, %v1705
        %1707 = vrot.lane.b32.xlu0 %v1706, 64
        %v1708 = vpop.permute.xlu0 %1707
        %1710 = vst.msk [vmem:[%s1280] sm:$0xf] %vm668, %v1708
        %v1711 = vsel %vm1260, %v1701, 0.0
        %v1712 = vpack.c.bf16 %v1711, %v1711
        %v1714 = vunpack.c.l.b16 %v1712
        %v1715 = vpack.c.b16 %v1714, %v1714
        %1716 = vrot.lane.b32.xlu0 %v1715, 96
        %v1717 = vpop.permute.xlu0 %1716
        %1719 = vst.msk [vmem:[%s1270] sm:$0xf] %vm679, %v1717
        %1721 = vrot.lane.b32.xlu0 %v1603, 64
        %v1722 = vpop.permute.xlu0 %1721
        %v1724 = vsel %vm1261, %v1695, %v1722
        %1726 = vrot.lane.b32.xlu0 %v1724, 64
        %v1727 = vpop.permute.xlu0 %1726
        %1729 = vst.msk [vmem:[#allocation3] sm:$0xff] %vm367, %v1727
        %1730 = vrot.lane.b32.xlu0 %v1603, 32
        %v1731 = vpop.permute.xlu0 %1730
        %v1733 = vsel %vm1260, %v1701, %v1731
        %1735 = vrot.lane.b32.xlu0 %v1733, 96
        %v1736 = vpop.permute.xlu0 %1735
        %1738 = vst.msk [vmem:[#allocation3] sm:$0xff] %vm699, %v1736
        %v1739 = vsel %vm1261, %v1678, %v1666
        %1741 = vrot.lane.b32.xlu0 %v1739, 96
        %v1742 = vpop.permute.xlu0 %1741
        %1744 = vst.msk [vmem:[#allocation4] sm:$0xff] %vm367, %v1742
        %v1745 = vsel %vm1260, %v1689, %v1604
        %1746 = vst.msk [vmem:[#allocation4] sm:$0xff] %vm699, %v1745
        %v1747 = vld [vmem:[#allocation3] sm:$0xff]
        %v1748 = vld [vmem:[#allocation4] sm:$0xff]
        %v1749 = vpack.c.bf16 %v1747, %v1747
        %v1751 = vsel %vm503, %v1749, 0
        %1753 = vmatprep.subr.bf16.mxu0 0
        %1754 = vmatpush1.bf16.msra.mxu0 0
        %1755 = vmatprep.subr.bf16.mxu0 0
        %1756 = vmatpush1.bf16.msra.mxu0 0
        %1757 = vmatprep.subr.bf16.mxu0 0
        %1758 = vmatpush1.bf16.msra.mxu0 0
        %1759 = vmatprep.subr.bf16.mxu0 0
        %1760 = vmatpush1.bf16.msra.mxu0 0
        %1761 = vmatprep.subr.bf16.mxu0 %v552
        %1762 = vmatpush1.bf16.msra.mxu0 %v551
        %1763 = vmatprep.subr.bf16.mxu0 %v550
        %1764 = vmatpush1.bf16.msra.mxu0 %v549
        %1765 = vmatprep.subr.bf16.mxu0 %v548
        %1766 = vmatpush1.bf16.msra.mxu0 %v547
        %1767 = vmatprep.subr.bf16.mxu0 %v546
        %1768 = vmatpush1.bf16.msra.mxu0 %v545
        %1769 = vmatprep.subr.bf16.mxu0 0
        %1770 = vmatpush2.bf16.msra.mxu0 0
        %1771 = vmatprep.subr.bf16.mxu0 0
        %1772 = vmatpush2.bf16.msra.mxu0 0
        %1773 = vmatprep.subr.bf16.mxu0 0
        %1774 = vmatpush2.bf16.msra.mxu0 0
        %1775 = vmatprep.subr.bf16.mxu0 0
        %1776 = vmatpush2.bf16.msra.mxu0 0
        %1777 = vmatprep.subr.bf16.mxu0 0
        %1778 = vmatpush2.bf16.msra.mxu0 0
        %1779 = vmatprep.subr.bf16.mxu0 0
        %1780 = vmatpush2.bf16.msra.mxu0 0
        %1781 = vmatprep.subr.bf16.mxu0 0
        %1782 = vmatpush2.bf16.msra.mxu0 0
        %1783 = vmatprep.subr.bf16.mxu0 0
        %1784 = vmatpush2.bf16.msra.mxu0 0
        %1785 = vmatprep.mubr.bf16.mxu0 0
        %1786 = vmatmul.mubr.bf16.gmra.mxu0 %v1751
        %v1787 = vpop.f32.mrf.mxu0
        %v1788 = vadd.f32 0.0, %v1787
        %v1789 = vpop.f32.mrf.mxu0
        %v1790 = vadd.f32 0.0, %v1789
        %v1791 = vpop.f32.mrf.mxu0
        %v1792 = vpop.f32.mrf.mxu0
        %1793 = vdwg.mxu0
        %v1794 = vld [vmem:[%s1058] sm:$0xff]
        %v1795 = vld [vmem:[%s1056 + $0x8] sm:$0xff]
        %v1796 = vadd.f32 %v1794, %v1788
        %v1797 = vadd.f32 %v1795, %v1790
        %v1798 = vmul.f32 %v1796, 0.5
        %v1799 = vtanh.pop %v1798
        %v1800 = vadd.f32 %v1799, 1.0
        %v1801 = vmul.f32 %v1800, 0.5
        %v1802 = vmul.f32 %v1797, 0.5
        %v1803 = vtanh.pop %v1802
        %v1804 = vadd.f32 %v1803, 1.0
        %v1805 = vmul.f32 %v1804, 0.5
        %v1806 = vtanh.pop %v1796
        %v1807 = vtanh.pop %v1797
        %1809 = vrot.lane.b32.xlu0 %v1748, 32
        %v1810 = vpop.permute.xlu0 %1809
        %v1812 = vmul.f32 %v1801, %v1810
        %1814 = vrot.lane.b32.xlu0 %v1806, 32
        %v1815 = vpop.permute.xlu0 %1814
        %v1817 = vmul.f32 %v1801, %v1815
        %1819 = vrot.lane.b32.xlu0 %v1817, 32
        %v1820 = vpop.permute.xlu0 %1819
        %v1822 = vadd.f32 %v1812, %v1820
        %v1823 = vmul.f32 %v1805, %v1748
        %1825 = vrot.lane.b32.xlu0 %v1807, 32
        %v1826 = vpop.permute.xlu0 %1825
        %v1828 = vmul.f32 %v1805, %v1826
        %1830 = vrot.lane.b32.xlu0 %v1828, 32
        %v1831 = vpop.permute.xlu0 %1830
        %v1833 = vadd.f32 %v1823, %v1831
        %v1834 = vtanh.pop %v1822
        %1836 = vrot.lane.b32.xlu0 %v1834, 32
        %v1837 = vpop.permute.xlu0 %1836
        %v1839 = vmul.f32 %v1801, %v1837
        %v1840 = vtanh.pop %v1833
        %1842 = vrot.lane.b32.xlu0 %v1840, 32
        %v1843 = vpop.permute.xlu0 %1842
        %v1845 = vmul.f32 %v1805, %v1843
        %v1846 = vsel %vm1111, %v1839, 0.0
        %v1847 = vpack.c.bf16 %v1846, %v1846
        %v1849 = vunpack.c.l.b16 %v1847
        %v1850 = vpack.c.b16 %v1849, %v1849
        %1851 = vrot.lane.b32.xlu0 %v1850, 64
        %v1852 = vpop.permute.xlu0 %1851
        %1854 = vst.msk [vmem:[%s1130] sm:$0xf] %vm668, %v1852
        %v1855 = vsel %vm1110, %v1845, 0.0
        %v1856 = vpack.c.bf16 %v1855, %v1855
        %v1858 = vunpack.c.l.b16 %v1856
        %v1859 = vpack.c.b16 %v1858, %v1858
        %1860 = vrot.lane.b32.xlu0 %v1859, 96
        %v1861 = vpop.permute.xlu0 %1860
        %1863 = vst.msk [vmem:[%s1120] sm:$0xf] %vm679, %v1861
        %1865 = vrot.lane.b32.xlu0 %v1747, 64
        %v1866 = vpop.permute.xlu0 %1865
        %v1868 = vsel %vm1111, %v1839, %v1866
        %1870 = vrot.lane.b32.xlu0 %v1868, 64
        %v1871 = vpop.permute.xlu0 %1870
        %1873 = vst.msk [vmem:[#allocation3] sm:$0xff] %vm367, %v1871
        %1874 = vrot.lane.b32.xlu0 %v1747, 32
        %v1875 = vpop.permute.xlu0 %1874
        %v1877 = vsel %vm1110, %v1845, %v1875
        %1879 = vrot.lane.b32.xlu0 %v1877, 96
        %v1880 = vpop.permute.xlu0 %1879
        %1882 = vst.msk [vmem:[#allocation3] sm:$0xff] %vm699, %v1880
        %v1883 = vsel %vm1111, %v1822, %v1810
        %1885 = vrot.lane.b32.xlu0 %v1883, 96
        %v1886 = vpop.permute.xlu0 %1885
        %1888 = vst.msk [vmem:[#allocation4] sm:$0xff] %vm367, %v1886
        %v1889 = vsel %vm1110, %v1833, %v1748
        %1890 = vst.msk [vmem:[#allocation4] sm:$0xff] %vm699, %v1889
        %v1891 = vld [vmem:[#allocation3] sm:$0xff]
        %v1892 = vld [vmem:[#allocation4] sm:$0xff]
        %v1893 = vpack.c.bf16 %v1891, %v1891
        %v1895 = vsel %vm503, %v1893, 0
        %1897 = vmatprep.subr.bf16.mxu0 0
        %1898 = vmatpush1.bf16.msra.mxu0 0
        %1899 = vmatprep.subr.bf16.mxu0 0
        %1900 = vmatpush1.bf16.msra.mxu0 0
        %1901 = vmatprep.subr.bf16.mxu0 0
        %1902 = vmatpush1.bf16.msra.mxu0 0
        %1903 = vmatprep.subr.bf16.mxu0 0
        %1904 = vmatpush1.bf16.msra.mxu0 0
        %1905 = vmatprep.subr.bf16.mxu0 %v552
        %1906 = vmatpush1.bf16.msra.mxu0 %v551
        %1907 = vmatprep.subr.bf16.mxu0 %v550
        %1908 = vmatpush1.bf16.msra.mxu0 %v549
        %1909 = vmatprep.subr.bf16.mxu0 %v548
        %1910 = vmatpush1.bf16.msra.mxu0 %v547
        %1911 = vmatprep.subr.bf16.mxu0 %v546
        %1912 = vmatpush1.bf16.msra.mxu0 %v545
        %1913 = vmatprep.subr.bf16.mxu0 0
        %1914 = vmatpush2.bf16.msra.mxu0 0
        %1915 = vmatprep.subr.bf16.mxu0 0
        %1916 = vmatpush2.bf16.msra.mxu0 0
        %1917 = vmatprep.subr.bf16.mxu0 0
        %1918 = vmatpush2.bf16.msra.mxu0 0
        %1919 = vmatprep.subr.bf16.mxu0 0
        %1920 = vmatpush2.bf16.msra.mxu0 0
        %1921 = vmatprep.subr.bf16.mxu0 0
        %1922 = vmatpush2.bf16.msra.mxu0 0
        %1923 = vmatprep.subr.bf16.mxu0 0
        %1924 = vmatpush2.bf16.msra.mxu0 0
        %1925 = vmatprep.subr.bf16.mxu0 0
        %1926 = vmatpush2.bf16.msra.mxu0 0
        %1927 = vmatprep.subr.bf16.mxu0 0
        %1928 = vmatpush2.bf16.msra.mxu0 0
        %1929 = vmatprep.mubr.bf16.mxu0 0
        %1930 = vmatmul.mubr.bf16.gmra.mxu0 %v1895
        %v1931 = vpop.f32.mrf.mxu0
        %v1932 = vadd.f32 0.0, %v1931
        %v1933 = vpop.f32.mrf.mxu0
        %v1934 = vadd.f32 0.0, %v1933
        %v1935 = vpop.f32.mrf.mxu0
        %v1936 = vpop.f32.mrf.mxu0
        %1937 = vdwg.mxu0
        %v1938 = vld [vmem:[%s908] sm:$0xff]
        %v1939 = vld [vmem:[%s906 + $0x8] sm:$0xff]
        %v1940 = vadd.f32 %v1938, %v1932
        %v1941 = vadd.f32 %v1939, %v1934
        %v1942 = vmul.f32 %v1940, 0.5
        %v1943 = vtanh.pop %v1942
        %v1944 = vadd.f32 %v1943, 1.0
        %v1945 = vmul.f32 %v1944, 0.5
        %v1946 = vmul.f32 %v1941, 0.5
        %v1947 = vtanh.pop %v1946
        %v1948 = vadd.f32 %v1947, 1.0
        %v1949 = vmul.f32 %v1948, 0.5
        %v1950 = vtanh.pop %v1940
        %v1951 = vtanh.pop %v1941
        %1953 = vrot.lane.b32.xlu0 %v1892, 32
        %v1954 = vpop.permute.xlu0 %1953
        %v1956 = vmul.f32 %v1945, %v1954
        %1958 = vrot.lane.b32.xlu0 %v1950, 32
        %v1959 = vpop.permute.xlu0 %1958
        %v1961 = vmul.f32 %v1945, %v1959
        %1963 = vrot.lane.b32.xlu0 %v1961, 32
        %v1964 = vpop.permute.xlu0 %1963
        %v1966 = vadd.f32 %v1956, %v1964
        %v1967 = vmul.f32 %v1949, %v1892
        %1969 = vrot.lane.b32.xlu0 %v1951, 32
        %v1970 = vpop.permute.xlu0 %1969
        %v1972 = vmul.f32 %v1949, %v1970
        %1974 = vrot.lane.b32.xlu0 %v1972, 32
        %v1975 = vpop.permute.xlu0 %1974
        %v1977 = vadd.f32 %v1967, %v1975
        %v1978 = vtanh.pop %v1966
        %1980 = vrot.lane.b32.xlu0 %v1978, 32
        %v1981 = vpop.permute.xlu0 %1980
        %v1983 = vmul.f32 %v1945, %v1981
        %v1984 = vtanh.pop %v1977
        %1986 = vrot.lane.b32.xlu0 %v1984, 32
        %v1987 = vpop.permute.xlu0 %1986
        %v1989 = vmul.f32 %v1949, %v1987
        %v1990 = vsel %vm961, %v1983, 0.0
        %v1991 = vpack.c.bf16 %v1990, %v1990
        %v1993 = vunpack.c.l.b16 %v1991
        %v1994 = vpack.c.b16 %v1993, %v1993
        %1995 = vrot.lane.b32.xlu0 %v1994, 64
        %v1996 = vpop.permute.xlu0 %1995
        %1998 = vst.msk [vmem:[%s980] sm:$0xf] %vm668, %v1996
        %v1999 = vsel %vm960, %v1989, 0.0
        %v2000 = vpack.c.bf16 %v1999, %v1999
        %v2002 = vunpack.c.l.b16 %v2000
        %v2003 = vpack.c.b16 %v2002, %v2002
        %2004 = vrot.lane.b32.xlu0 %v2003, 96
        %v2005 = vpop.permute.xlu0 %2004
        %2007 = vst.msk [vmem:[%s970] sm:$0xf] %vm679, %v2005
        %2009 = vrot.lane.b32.xlu0 %v1891, 64
        %v2010 = vpop.permute.xlu0 %2009
        %v2012 = vsel %vm961, %v1983, %v2010
        %2014 = vrot.lane.b32.xlu0 %v2012, 64
        %v2015 = vpop.permute.xlu0 %2014
        %2017 = vst.msk [vmem:[#allocation3] sm:$0xff] %vm367, %v2015
        %2018 = vrot.lane.b32.xlu0 %v1891, 32
        %v2019 = vpop.permute.xlu0 %2018
        %v2021 = vsel %vm960, %v1989, %v2019
        %2023 = vrot.lane.b32.xlu0 %v2021, 96
        %v2024 = vpop.permute.xlu0 %2023
        %2026 = vst.msk [vmem:[#allocation3] sm:$0xff] %vm699, %v2024
        %v2027 = vsel %vm961, %v1966, %v1954
        %2029 = vrot.lane.b32.xlu0 %v2027, 96
        %v2030 = vpop.permute.xlu0 %2029
        %2032 = vst.msk [vmem:[#allocation4] sm:$0xff] %vm367, %v2030
        %v2033 = vsel %vm960, %v1977, %v1892
        %2034 = vst.msk [vmem:[#allocation4] sm:$0xff] %vm699, %v2033
        %v2035 = vld [vmem:[#allocation3] sm:$0xff]
        %v2036 = vld [vmem:[#allocation4] sm:$0xff]
        %v2037 = vpack.c.bf16 %v2035, %v2035
        %v2039 = vsel %vm503, %v2037, 0
        %2041 = vmatprep.subr.bf16.mxu0 0
        %2042 = vmatpush1.bf16.msra.mxu0 0
        %2043 = vmatprep.subr.bf16.mxu0 0
        %2044 = vmatpush1.bf16.msra.mxu0 0
        %2045 = vmatprep.subr.bf16.mxu0 0
        %2046 = vmatpush1.bf16.msra.mxu0 0
        %2047 = vmatprep.subr.bf16.mxu0 0
        %2048 = vmatpush1.bf16.msra.mxu0 0
        %2049 = vmatprep.subr.bf16.mxu0 %v552
        %2050 = vmatpush1.bf16.msra.mxu0 %v551
        %2051 = vmatprep.subr.bf16.mxu0 %v550
        %2052 = vmatpush1.bf16.msra.mxu0 %v549
        %2053 = vmatprep.subr.bf16.mxu0 %v548
        %2054 = vmatpush1.bf16.msra.mxu0 %v547
        %2055 = vmatprep.subr.bf16.mxu0 %v546
        %2056 = vmatpush1.bf16.msra.mxu0 %v545
        %2057 = vmatprep.subr.bf16.mxu0 0
        %2058 = vmatpush2.bf16.msra.mxu0 0
        %2059 = vmatprep.subr.bf16.mxu0 0
        %2060 = vmatpush2.bf16.msra.mxu0 0
        %2061 = vmatprep.subr.bf16.mxu0 0
        %2062 = vmatpush2.bf16.msra.mxu0 0
        %2063 = vmatprep.subr.bf16.mxu0 0
        %2064 = vmatpush2.bf16.msra.mxu0 0
        %2065 = vmatprep.subr.bf16.mxu0 0
        %2066 = vmatpush2.bf16.msra.mxu0 0
        %2067 = vmatprep.subr.bf16.mxu0 0
        %2068 = vmatpush2.bf16.msra.mxu0 0
        %2069 = vmatprep.subr.bf16.mxu0 0
        %2070 = vmatpush2.bf16.msra.mxu0 0
        %2071 = vmatprep.subr.bf16.mxu0 0
        %2072 = vmatpush2.bf16.msra.mxu0 0
        %2073 = vmatprep.mubr.bf16.mxu0 0
        %2074 = vmatmul.mubr.bf16.gmra.mxu0 %v2039
        %v2075 = vpop.f32.mrf.mxu0
        %v2076 = vadd.f32 0.0, %v2075
        %v2077 = vpop.f32.mrf.mxu0
        %v2078 = vadd.f32 0.0, %v2077
        %v2079 = vpop.f32.mrf.mxu0
        %v2080 = vpop.f32.mrf.mxu0
        %2081 = vdwg.mxu0
        %v2082 = vld [vmem:[%s758] sm:$0xff]
        %v2083 = vld [vmem:[%s756 + $0x8] sm:$0xff]
        %v2084 = vadd.f32 %v2082, %v2076
        %v2085 = vadd.f32 %v2083, %v2078
        %v2086 = vmul.f32 %v2084, 0.5
        %v2087 = vtanh.pop %v2086
        %v2088 = vadd.f32 %v2087, 1.0
        %v2089 = vmul.f32 %v2088, 0.5
        %v2090 = vmul.f32 %v2085, 0.5
        %v2091 = vtanh.pop %v2090
        %v2092 = vadd.f32 %v2091, 1.0
        %v2093 = vmul.f32 %v2092, 0.5
        %v2094 = vtanh.pop %v2084
        %v2095 = vtanh.pop %v2085
        %2097 = vrot.lane.b32.xlu0 %v2036, 32
        %v2098 = vpop.permute.xlu0 %2097
        %v2100 = vmul.f32 %v2089, %v2098
        %2102 = vrot.lane.b32.xlu0 %v2094, 32
        %v2103 = vpop.permute.xlu0 %2102
        %v2105 = vmul.f32 %v2089, %v2103
        %2107 = vrot.lane.b32.xlu0 %v2105, 32
        %v2108 = vpop.permute.xlu0 %2107
        %v2110 = vadd.f32 %v2100, %v2108
        %v2111 = vmul.f32 %v2093, %v2036
        %2113 = vrot.lane.b32.xlu0 %v2095, 32
        %v2114 = vpop.permute.xlu0 %2113
        %v2116 = vmul.f32 %v2093, %v2114
        %2118 = vrot.lane.b32.xlu0 %v2116, 32
        %v2119 = vpop.permute.xlu0 %2118
        %v2121 = vadd.f32 %v2111, %v2119
        %v2122 = vtanh.pop %v2110
        %2124 = vrot.lane.b32.xlu0 %v2122, 32
        %v2125 = vpop.permute.xlu0 %2124
        %v2127 = vmul.f32 %v2089, %v2125
        %v2128 = vtanh.pop %v2121
        %2130 = vrot.lane.b32.xlu0 %v2128, 32
        %v2131 = vpop.permute.xlu0 %2130
        %v2133 = vmul.f32 %v2093, %v2131
        %v2134 = vsel %vm811, %v2127, 0.0
        %v2135 = vpack.c.bf16 %v2134, %v2134
        %v2137 = vunpack.c.l.b16 %v2135
        %v2138 = vpack.c.b16 %v2137, %v2137
        %2139 = vrot.lane.b32.xlu0 %v2138, 64
        %v2140 = vpop.permute.xlu0 %2139
        %2142 = vst.msk [vmem:[%s830] sm:$0xf] %vm668, %v2140
        %v2143 = vsel %vm810, %v2133, 0.0
        %v2144 = vpack.c.bf16 %v2143, %v2143
        %v2146 = vunpack.c.l.b16 %v2144
        %v2147 = vpack.c.b16 %v2146, %v2146
        %2148 = vrot.lane.b32.xlu0 %v2147, 96
        %v2149 = vpop.permute.xlu0 %2148
        %2151 = vst.msk [vmem:[%s820] sm:$0xf] %vm679, %v2149
        %2153 = vrot.lane.b32.xlu0 %v2035, 64
        %v2154 = vpop.permute.xlu0 %2153
        %v2156 = vsel %vm811, %v2127, %v2154
        %2158 = vrot.lane.b32.xlu0 %v2156, 64
        %v2159 = vpop.permute.xlu0 %2158
        %2161 = vst.msk [vmem:[#allocation3] sm:$0xff] %vm367, %v2159
        %2162 = vrot.lane.b32.xlu0 %v2035, 32
        %v2163 = vpop.permute.xlu0 %2162
        %v2165 = vsel %vm810, %v2133, %v2163
        %2167 = vrot.lane.b32.xlu0 %v2165, 96
        %v2168 = vpop.permute.xlu0 %2167
        %2170 = vst.msk [vmem:[#allocation3] sm:$0xff] %vm699, %v2168
        %v2171 = vsel %vm811, %v2110, %v2098
        %2173 = vrot.lane.b32.xlu0 %v2171, 96
        %v2174 = vpop.permute.xlu0 %2173
        %2176 = vst.msk [vmem:[#allocation4] sm:$0xff] %vm367, %v2174
        %v2177 = vsel %vm810, %v2121, %v2036
        %2178 = vst.msk [vmem:[#allocation4] sm:$0xff] %vm699, %v2177
        %v2179 = vld [vmem:[#allocation3] sm:$0xff]
        %v2180 = vld [vmem:[#allocation4] sm:$0xff]
        %v2181 = vpack.c.bf16 %v2179, %v2179
        %v2183 = vsel %vm503, %v2181, 0
        %2185 = vmatprep.subr.bf16.mxu0 0
        %2186 = vmatpush1.bf16.msra.mxu0 0
        %2187 = vmatprep.subr.bf16.mxu0 0
        %2188 = vmatpush1.bf16.msra.mxu0 0
        %2189 = vmatprep.subr.bf16.mxu0 0
        %2190 = vmatpush1.bf16.msra.mxu0 0
        %2191 = vmatprep.subr.bf16.mxu0 0
        %2192 = vmatpush1.bf16.msra.mxu0 0
        %2193 = vmatprep.subr.bf16.mxu0 %v552
        %2194 = vmatpush1.bf16.msra.mxu0 %v551
        %2195 = vmatprep.subr.bf16.mxu0 %v550
        %2196 = vmatpush1.bf16.msra.mxu0 %v549
        %2197 = vmatprep.subr.bf16.mxu0 %v548
        %2198 = vmatpush1.bf16.msra.mxu0 %v547
        %2199 = vmatprep.subr.bf16.mxu0 %v546
        %2200 = vmatpush1.bf16.msra.mxu0 %v545
        %2201 = vmatprep.subr.bf16.mxu0 0
        %2202 = vmatpush2.bf16.msra.mxu0 0
        %2203 = vmatprep.subr.bf16.mxu0 0
        %2204 = vmatpush2.bf16.msra.mxu0 0
        %2205 = vmatprep.subr.bf16.mxu0 0
        %2206 = vmatpush2.bf16.msra.mxu0 0
        %2207 = vmatprep.subr.bf16.mxu0 0
        %2208 = vmatpush2.bf16.msra.mxu0 0
        %2209 = vmatprep.subr.bf16.mxu0 0
        %2210 = vmatpush2.bf16.msra.mxu0 0
        %2211 = vmatprep.subr.bf16.mxu0 0
        %2212 = vmatpush2.bf16.msra.mxu0 0
        %2213 = vmatprep.subr.bf16.mxu0 0
        %2214 = vmatpush2.bf16.msra.mxu0 0
        %2215 = vmatprep.subr.bf16.mxu0 0
        %2216 = vmatpush2.bf16.msra.mxu0 0
        %2217 = vmatprep.mubr.bf16.mxu0 0
        %2218 = vmatmul.mubr.bf16.gmra.mxu0 %v2183
        %v2219 = vpop.f32.mrf.mxu0
        %v2220 = vadd.f32 0.0, %v2219
        %v2221 = vpop.f32.mrf.mxu0
        %v2222 = vadd.f32 0.0, %v2221
        %v2223 = vpop.f32.mrf.mxu0
        %v2224 = vpop.f32.mrf.mxu0
        %2225 = vdwg.mxu0
        %v2226 = vld [vmem:[%s606] sm:$0xff]
        %v2227 = vld [vmem:[#allocation2 + $0x8] sm:$0xff]
        %v2228 = vadd.f32 %v2226, %v2220
        %v2229 = vadd.f32 %v2227, %v2222
        %v2230 = vmul.f32 %v2228, 0.5
        %v2231 = vtanh.pop %v2230
        %v2232 = vadd.f32 %v2231, 1.0
        %v2233 = vmul.f32 %v2232, 0.5
        %v2234 = vmul.f32 %v2229, 0.5
        %v2235 = vtanh.pop %v2234
        %v2236 = vadd.f32 %v2235, 1.0
        %v2237 = vmul.f32 %v2236, 0.5
        %v2238 = vtanh.pop %v2228
        %v2239 = vtanh.pop %v2229
        %2241 = vrot.lane.b32.xlu0 %v2180, 32
        %v2242 = vpop.permute.xlu0 %2241
        %v2244 = vmul.f32 %v2233, %v2242
        %2246 = vrot.lane.b32.xlu0 %v2238, 32
        %v2247 = vpop.permute.xlu0 %2246
        %v2249 = vmul.f32 %v2233, %v2247
        %2251 = vrot.lane.b32.xlu0 %v2249, 32
        %v2252 = vpop.permute.xlu0 %2251
        %v2254 = vadd.f32 %v2244, %v2252
        %v2255 = vmul.f32 %v2237, %v2180
        %2257 = vrot.lane.b32.xlu0 %v2239, 32
        %v2258 = vpop.permute.xlu0 %2257
        %v2260 = vmul.f32 %v2237, %v2258
        %2262 = vrot.lane.b32.xlu0 %v2260, 32
        %v2263 = vpop.permute.xlu0 %2262
        %v2265 = vadd.f32 %v2255, %v2263
        %v2266 = vtanh.pop %v2254
        %2268 = vrot.lane.b32.xlu0 %v2266, 32
        %v2269 = vpop.permute.xlu0 %2268
        %v2271 = vmul.f32 %v2233, %v2269
        %v2272 = vtanh.pop %v2265
        %2274 = vrot.lane.b32.xlu0 %v2272, 32
        %v2275 = vpop.permute.xlu0 %2274
        %v2277 = vmul.f32 %v2237, %v2275
        %v2278 = vsel %vm659, %v2271, 0.0
        %v2279 = vpack.c.bf16 %v2278, %v2278
        %v2281 = vunpack.c.l.b16 %v2279
        %v2282 = vpack.c.b16 %v2281, %v2281
        %2283 = vrot.lane.b32.xlu0 %v2282, 64
        %v2284 = vpop.permute.xlu0 %2283
        %2286 = vst.msk [vmem:[%s678] sm:$0xf] %vm668, %v2284
        %v2287 = vsel %vm658, %v2277, 0.0
        %v2288 = vpack.c.bf16 %v2287, %v2287
        %v2290 = vunpack.c.l.b16 %v2288
        %v2291 = vpack.c.b16 %v2290, %v2290
        %2292 = vrot.lane.b32.xlu0 %v2291, 96
        %v2293 = vpop.permute.xlu0 %2292
        %2295 = vst.msk [vmem:[%s283] sm:$0xf] %vm679, %v2293
        %2297 = vrot.lane.b32.xlu0 %v2179, 64
        %v2298 = vpop.permute.xlu0 %2297
        %v2300 = vsel %vm659, %v2271, %v2298
        %2302 = vrot.lane.b32.xlu0 %v2300, 64
        %v2303 = vpop.permute.xlu0 %2302
        %2305 = vst.msk [vmem:[#allocation3] sm:$0xff] %vm367, %v2303
        %2306 = vrot.lane.b32.xlu0 %v2179, 32
        %v2307 = vpop.permute.xlu0 %2306
        %v2309 = vsel %vm658, %v2277, %v2307
        %2311 = vrot.lane.b32.xlu0 %v2309, 96
        %v2312 = vpop.permute.xlu0 %2311
        %2314 = vst.msk [vmem:[#allocation3] sm:$0xff] %vm699, %v2312
        %v2315 = vsel %vm659, %v2254, %v2242
        %2317 = vrot.lane.b32.xlu0 %v2315, 96
        %v2318 = vpop.permute.xlu0 %2317
        %2320 = vst.msk [vmem:[#allocation4] sm:$0xff] %vm367, %v2318
        %v2321 = vsel %vm658, %v2265, %v2180
        %2322 = vst.msk [vmem:[#allocation4] sm:$0xff] %vm699, %v2321
        %s2323 = sand.u32 %s146, 1
        %s2324 = scalar_lea.sflag [#allocation7], %s2323
        %s2325 = sand.u32 %s146, 1
        %s2326 = smul.addr %s2325, 48
        %s2327 = scalar_lea.vmem [#allocation11], %s2326
        // Predicated region
        $region53: #{tpu_custom_call.1} parent=39 // pred_check
          %p2328 = pneg %p156
        $region54: #{tpu_custom_call.1} parent=39 // pred_check_branch
          %2330 = sbr.rel (%p2328) target = $region56
        $region55: #{tpu_custom_call.1} parent=39 // pred_region
          %s2332 = ssub.s32 768, 768
          %2333 = vsyncadd %s2324, %s2332
          %s2334 = smul.addr %s23, 64
          %s2335 = scalar_lea.hbm %s5, %s2334
          %s2336 = sshll.u32 %s2327, 4
          %s2337 = int_to_ptr.vmem [resolvable:$true] %s2336
          %2342 = dma.vmem_to_hbm [thread:$0]  %s2337, 768, %s2335, %s2324, 64, 128, 4
        $region56: #{tpu_custom_call.1} parent=39 // pred_fallthru
          _
      $region40: #{tpu_custom_call.1} parent=5 // pred_fallthru
        _
      %p2343 = scmp.le.s32.totalorder 2, %s18
      // Predicated region
      $region57: #{tpu_custom_call.1} parent=5 // pred_check
        %p2344 = pneg %p2343
      $region58: #{tpu_custom_call.1} parent=5 // pred_check_branch
        %2346 = sbr.rel (%p2344) target = $region60
      $region59: #{tpu_custom_call.1} parent=5 // pred_region
        %s2347 = ssub.s32 %s18, 2
        // Predicated region
        $region61: #{tpu_custom_call.1} parent=59 // pred_check
          %p2348 = pneg %p162
        $region62: #{tpu_custom_call.1} parent=59 // pred_check_branch
          %2350 = sbr.rel (%p2348) target = $region64
        $region63: #{tpu_custom_call.1} parent=59 // pred_region
          %s2351 = sand.u32 %s147, 1
          %s2352 = scalar_lea.sflag [#allocation7], %s2351
          %s2353 = sand.u32 %s147, 1
          %s2354 = smul.addr %s2353, 48
          %s2355 = scalar_lea.vmem [#allocation11], %s2354
          %2356 = dma.done %s2352, 768
        $region64: #{tpu_custom_call.1} parent=59 // pred_fallthru
          _
      $region60: #{tpu_custom_call.1} parent=5 // pred_fallthru
        _
    $region6: #{tpu_custom_call.1} parent=1 // loop_footer
      %s22 = sadd.s32 1, %s18
    $region7: #{tpu_custom_call.1} parent=1 // loop_footer_branch
      %17 = sbr.rel target = $region3
    $region8: #{tpu_custom_call.1} parent=1 // loop_exit
      _
    %2357 = vsyncpa [#allocation6], 1
    %s2358 = scalar_lea.sflag [#allocation6], 1
    %2359 = vsyncpa %s2358, 1
    %2360 = vsyncpa [#allocation9], 1
    %2361 = vsyncpa [#allocation7], 1
    %s2362 = scalar_lea.sflag [#allocation7], 1
    %2363 = vsyncpa %s2362, 1

</llo_original>
